<compile_context>
chip_gen: v5e
topology: v5e:2x2
jax: 0.10.0
libtpu: 0.0.40
codegen_flags: <defaults>
</compile_context>

<pallas_src>
import functools

import jax
import jax.numpy as jnp
import numpy as np
from jax.experimental import pallas as pl
from jax.experimental.pallas import tpu as pltpu


_DEF_VMEM_BUDGET = 24 * 1024 * 1024  # bytes; safe for v5e / v6e / v7x scoped VMEM


# ----------------------------------------------------------------------------
# Pallas kernel: one fused bidirectional LSTM time-chunk per grid step.
# ----------------------------------------------------------------------------
def _bilstm_chunk_kernel(*refs, num_feats, ts, hidden, compute_dtype,
                         single_chunk, fuse_residual):
    # ---- unpack (in_refs..., out_refs..., scratch_refs...) ------------------
    nf = num_feats
    pos = 0
    xf_refs = refs[pos:pos + nf]; pos += nf            # fwd chunk of each feature
    if single_chunk:
        xb_refs = xf_refs                              # C==1: share the DMA'd tile
    else:
        xb_refs = refs[pos:pos + nf]; pos += nf        # bwd chunk of each feature
    wihf_refs = refs[pos:pos + nf]; pos += nf
    whhf_ref, bf_ref = refs[pos], refs[pos + 1]; pos += 2
    wihb_refs = refs[pos:pos + nf]; pos += nf
    whhb_ref, bb_ref = refs[pos], refs[pos + 1]; pos += 2
    yf_ref, yb_ref = refs[pos], refs[pos + 1]; pos += 2
    hf_sc, cf_sc, hb_sc, cb_sc = refs[pos:pos + 4]

    chunk = pl.program_id(0)

    @pl.when(chunk == 0)
    def _init():
        hf_sc[...] = jnp.zeros_like(hf_sc)
        cf_sc[...] = jnp.zeros_like(cf_sc)
        hb_sc[...] = jnp.zeros_like(hb_sc)
        cb_sc[...] = jnp.zeros_like(cb_sc)

    H = hidden
    B = hf_sc.shape[0]
    cdt = compute_dtype

    # ---- Time-parallel input projection for the whole chunk -----------------
    # One MXU matmul per feature array per direction (M = B*TS); summing the
    # per-feature partial products in f32 is exactly the matmul of the concat,
    # so the previous layer's (yf, yb) never has to be concatenated in HBM.
    # Bias folded in once, off the serial critical path.
    def in_proj(x_refs, w_refs, b_ref):
        acc = None
        for xr, wr in zip(x_refs, w_refs):
            xm = xr[...].astype(cdt).reshape(B * ts, -1)
            p = jnp.dot(xm, wr[...], preferred_element_type=jnp.float32)
            acc = p if acc is None else acc + p
        return (acc + b_ref[...]).reshape(B, ts, 4 * H)

    gin_f = in_proj(xf_refs, wihf_refs, bf_ref)
    gin_b = in_proj(xb_refs, wihb_refs, bb_ref)

    if fuse_residual:
        # Feature arrays are exactly [yf_prev, yb_prev]; the residual operand
        # for each output half is the matching input half (already in VMEM).
        res_f = xf_refs[0][...].astype(jnp.float32)    # (B, ts, H)
        res_b = xb_refs[1][...].astype(jnp.float32)    # (B, ts, H)

    whhf = whhf_ref[...]
    whhb = whhb_ref[...]

    hf = hf_sc[...]
    cf = cf_sc[...]
    hb = hb_sc[...]
    cb = cb_sc[...]

    def gates_to_state(g, c_prev):
        i = jax.nn.sigmoid(g[:, 0 * H:1 * H])
        f = jax.nn.sigmoid(g[:, 1 * H:2 * H])
        gg = jnp.tanh(g[:, 2 * H:3 * H])
        o = jax.nn.sigmoid(g[:, 3 * H:4 * H])
        c_new = f * c_prev + i * gg
        h_new = o * jnp.tanh(c_new)
        return h_new, c_new

    # ---- Fully-unrolled recurrence over the chunk ----------------------------
    # Static indices -> no dynamic slices; fwd/bwd are independent so the LLO
    # scheduler can co-issue their MXU / VPU / EUP work in the same bundles.
    for s in range(ts):
        sb = ts - 1 - s  # backward direction walks its chunk back-to-front
        gf = gin_f[:, s, :] + jnp.dot(hf.astype(cdt), whhf,
                                      preferred_element_type=jnp.float32)
        gb = gin_b[:, sb, :] + jnp.dot(hb.astype(cdt), whhb,
                                       preferred_element_type=jnp.float32)
        hf, cf = gates_to_state(gf, cf)
        hb, cb = gates_to_state(gb, cb)
        out_f = hf + res_f[:, s, :] if fuse_residual else hf
        out_b = hb + res_b[:, sb, :] if fuse_residual else hb
        yf_ref[:, s, :] = out_f.astype(yf_ref.dtype)
        yb_ref[:, sb, :] = out_b.astype(yb_ref.dtype)

    hf_sc[...] = hf
    cf_sc[...] = cf
    hb_sc[...] = hb
    cb_sc[...] = cb


# ----------------------------------------------------------------------------
# Chunk sizing: Mosaic (8,128) tiling rule + per-generation VMEM budget.
# ----------------------------------------------------------------------------
def _pick_time_chunk(T, B, D, H, compute_itemsize, max_ts=32,
                     vmem_budget=_DEF_VMEM_BUDGET):
    """Largest TS with (TS == T or TS % 8 == 0), TS | T, fitting the VMEM
    budget.  Re-derive with a smaller vmem_budget on v7x (64 MiB physical)."""
    f32 = 4

    def vmem_est(ts):
        return (2 * 2 * B * ts * D * f32            # double-buffered x chunks (fwd+bwd)
                + 2 * 2 * B * ts * H * f32          # double-buffered y chunks (fwd+bwd)
                + 2 * B * ts * 4 * H * f32          # per-chunk precomputed input gates
                + 2 * (D + H) * 4 * H * compute_itemsize   # weights, both dirs
                + 2 * 4 * H * f32                   # biases
                + 4 * B * H * f32)                  # h/c carry scratch

    cands = []
    if T <= max_ts:
        cands.append(T)
    cands.extend(ts for ts in range(max_ts - max_ts % 8, 7, -8) if T % ts == 0)
    cands.append(T)  # fallback: whole sequence as a single chunk
    for ts in cands:
        if vmem_est(ts) <= vmem_budget:
            return ts
    return cands[-1]


# ----------------------------------------------------------------------------
# One fused bidirectional LSTM layer.
#   xs: list of batch-major feature arrays [(B,T,D_0), (B,T,D_1), ...] whose
#       concat along the last axis is the layer input (never materialised).
#   returns (y_fwd, y_bwd), each (B, T, H), batch-major.
# ----------------------------------------------------------------------------
def bilstm_layer_pallas(xs, params, *, hidden_size, fuse_residual=False,
                        compute_dtype=jnp.bfloat16, max_chunk=32,
                        vmem_budget=_DEF_VMEM_BUDGET):
    (wih_f, whh_f, b_f), (wih_b, whh_b, b_b) = params
    B, T = xs[0].shape[0], xs[0].shape[1]
    dks = [int(x.shape[2]) for x in xs]
    D = sum(dks)
    H = hidden_size
    assert tuple(wih_f.shape) == (4 * H, D), (wih_f.shape, D)
    if fuse_residual:
        assert len(xs) == 2 and dks == [H, H], (dks, H)

    TS = _pick_time_chunk(T, B, D, H, jnp.dtype(compute_dtype).itemsize,
                          max_ts=max_chunk, vmem_budget=vmem_budget)
    C = T // TS
    assert C * TS == T, (T, TS)
    single_chunk = (C == 1)

    # Weight prep: W_ih^T split into one row-slice per input feature array
    # (so the previous layer's output halves feed in without an HBM concat),
    # bf16 MXU operands, single combined bias (b_ih + b_hh) kept in f32.
    def split_wih(w):  # (4H, D) -> [(D_k, 4H)] in compute dtype
        wt = jnp.asarray(w.T, compute_dtype)
        parts, off = [], 0
        for dk in dks:
            parts.append(wt[off:off + dk, :])
            off += dk
        return parts

    wihf_parts = split_wih(wih_f)
    wihb_parts = split_wih(wih_b)
    whhf_t = jnp.asarray(whh_f.T, compute_dtype)          # (H, 4H)
    whhb_t = jnp.asarray(whh_b.T, compute_dtype)
    bf = jnp.asarray(b_f, jnp.float32).reshape(1, 4 * H)
    bb = jnp.asarray(b_b, jnp.float32).reshape(1, 4 * H)

    kernel = functools.partial(
        _bilstm_chunk_kernel, num_feats=len(xs), ts=TS, hidden=H,
        compute_dtype=compute_dtype, single_chunk=single_chunk,
        fuse_residual=fuse_residual)

    def w_spec(shape):
        return pl.BlockSpec(shape, lambda c: (0, 0))

    # forward direction: time chunk c (ascending); backward direction: chunk
    # C-1-c (descending, no HBM reversal).  When C==1 the single chunk is
    # shared by both directions (one DMA instead of two).
    fwd_specs = [pl.BlockSpec((B, TS, dk), lambda c: (0, c, 0)) for dk in dks]
    bwd_specs = [] if single_chunk else [
        pl.BlockSpec((B, TS, dk), lambda c: (0, C - 1 - c, 0)) for dk in dks]

    in_specs = (fwd_specs + bwd_specs
                + [w_spec((dk, 4 * H)) for dk in dks]
                + [w_spec((H, 4 * H)), w_spec((1, 4 * H))]
                + [w_spec((dk, 4 * H)) for dk in dks]
                + [w_spec((H, 4 * H)), w_spec((1, 4 * H))])

    inputs = (list(xs) + ([] if single_chunk else list(xs))
              + wihf_parts + [whhf_t, bf]
              + wihb_parts + [whhb_t, bb])

    out_dtype = xs[0].dtype
    yf, yb = pl.pallas_call(
        kernel,
        out_shape=(jax.ShapeDtypeStruct((B, T, H), out_dtype),
                   jax.ShapeDtypeStruct((B, T, H), out_dtype)),
        grid_spec=pltpu.PrefetchScalarGridSpec(
            num_scalar_prefetch=0,
            grid=(C,),
            in_specs=in_specs,
            out_specs=(
                pl.BlockSpec((B, TS, H), lambda c: (0, c, 0)),
                pl.BlockSpec((B, TS, H), lambda c: (0, C - 1 - c, 0)),
            ),
            scratch_shapes=[
                pltpu.VMEM((B, H), jnp.float32),   # h forward
                pltpu.VMEM((B, H), jnp.float32),   # c forward
                pltpu.VMEM((B, H), jnp.float32),   # h backward
                pltpu.VMEM((B, H), jnp.float32),   # c backward
            ],
        ),
        compiler_params=pltpu.CompilerParams(
            # h/c are carried across grid steps in VMEM scratch -> the time
            # axis MUST stay sequential.  Never mark it "parallel".
            dimension_semantics=("arbitrary",),
            vmem_limit_bytes=vmem_budget,
        ),
    )(*inputs)
    return yf, yb


# ----------------------------------------------------------------------------
# StackedBRNN module (forward only, batch-major end to end)
# ----------------------------------------------------------------------------
class StackedBRNNPallas:
    def __init__(self, input_size, hidden_size, num_layers,
                 concat_layers=False, do_residual=False,
                 compute_dtype=jnp.bfloat16, max_chunk=32, key=None):
        self.num_layers = num_layers
        self.hidden_size = hidden_size
        self.concat_layers = concat_layers
        self.do_residual = do_residual
        self.compute_dtype = compute_dtype
        self.max_chunk = max_chunk
        self.layers = []
        key = key if key is not None else jax.random.PRNGKey(0)
        k = 1.0 / np.sqrt(hidden_size)
        for i in range(num_layers):
            d_in = input_size if i == 0 else 2 * hidden_size
            dir_params = []
            for _ in range(2):  # forward / backward direction
                key, k1, k2, k3, k4 = jax.random.split(key, 5)
                w_ih = jax.random.uniform(k1, (4 * hidden_size, d_in),
                                          jnp.float32, -k, k)
                w_hh = jax.random.uniform(k2, (4 * hidden_size, hidden_size),
                                          jnp.float32, -k, k)
                b_ih = jax.random.uniform(k3, (4 * hidden_size,),
                                          jnp.float32, -k, k)
                b_hh = jax.random.uniform(k4, (4 * hidden_size,),
                                          jnp.float32, -k, k)
                dir_params.append((w_ih, w_hh, b_ih + b_hh))
            self.layers.append(tuple(dir_params))

    def __call__(self, x):
        # x: (batch, seq, input_size).  Kept batch-major throughout; layer
        # activations are carried as [y_fwd, y_bwd] half-pairs so no
        # inter-layer concat ever hits HBM.  Residual adds (i>0) are fused
        # into the layer kernel's output stores.
        feats = [x]
        layer_outs = []
        for i in range(self.num_layers):
            fuse_res = self.do_residual and i > 0
            yf, yb = bilstm_layer_pallas(
                feats, self.layers[i],
                hidden_size=self.hidden_size,
                compute_dtype=self.compute_dtype,
                max_chunk=self.max_chunk,
                fuse_residual=fuse_res)
            feats = [yf, yb]
            layer_outs.append((yf, yb))
        if self.concat_layers:
            return jnp.concatenate([h for pair in layer_outs for h in pair],
                                   axis=2)
        return jnp.concatenate(layer_outs[-1], axis=2)


# ----------------------------------------------------------------------------
# Pure-JAX reference (lax.scan LSTM).  It applies the SAME bf16 operand
# rounding policy (f32 accumulation, f32 state) as the kernel, so the check
# isolates kernel correctness; set compute_dtype=jnp.float32 everywhere for
# strict f32 semantics.
# ----------------------------------------------------------------------------
def _lstm_direction_ref(x_tbd, w_ih, w_hh, bias, compute_dtype):
    T, B, D = x_tbd.shape
    H = w_hh.shape[1]
    wih_t = w_ih.T.astype(compute_dtype)
    whh_t = w_hh.T.astype(compute_dtype)

    def step(carry, xt):
        h, c = carry
        gates = (jnp.dot(xt.astype(compute_dtype), wih_t,
                         preferred_element_type=jnp.float32)
                 + jnp.dot(h.astype(compute_dtype), whh_t,
                           preferred_element_type=jnp.float32)
                 + bias)
        i, f, g, o = jnp.split(gates, 4, axis=-1)
        c = jax.nn.sigmoid(f) * c + jax.nn.sigmoid(i) * jnp.tanh(g)
        h = jax.nn.sigmoid(o) * jnp.tanh(c)
        return (h, c), h

    init = (jnp.zeros((B, H), jnp.float32), jnp.zeros((B, H), jnp.float32))
    _, ys = jax.lax.scan(step, init, x_tbd)
    return ys


def _stacked_brnn_ref(model, x):
    h = jnp.transpose(x, (1, 0, 2))          # (T, B, D) time-major for scan
    hiddens = [h]
    for li, layer in enumerate(model.layers):
        (wf, whf, bf), (wb, whb, bb) = layer
        inp = hiddens[-1]
        yf = _lstm_direction_ref(inp, wf, whf, bf, model.compute_dtype)
        yb = _lstm_direction_ref(inp[::-1], wb, whb, bb, model.compute_dtype)[::-1]
        out = jnp.concatenate([yf, yb], axis=-1)
        if model.do_residual and li > 0:
            out = out + hiddens[-1]
        hiddens.append(out)
    outs = hiddens[1:]
    res = jnp.concatenate(outs, axis=-1) if model.concat_layers else outs[-1]
    return jnp.transpose(res, (1, 0, 2))     # back to (B, T, feat)


if __name__ == "__main__":
    def check(B, T, D, H, L, concat_layers, do_residual, max_chunk, seed):
        key = jax.random.PRNGKey(seed)
        kx, kp = jax.random.split(key)
        x = jax.random.normal(kx, (B, T, D), jnp.float32)
        model = StackedBRNNPallas(input_size=D, hidden_size=H, num_layers=L,
                                  concat_layers=concat_layers,
                                  do_residual=do_residual,
                                  max_chunk=max_chunk, key=kp)
        out = jax.block_until_ready(model(x))
        exp_feat = 2 * H * (L if concat_layers else 1)
        assert out.shape == (B, T, exp_feat), out.shape
        ref = jax.block_until_ready(_stacked_brnn_ref(model, x))
        np.testing.assert_allclose(np.asarray(out, np.float32),
                                   np.asarray(ref, np.float32),
                                   rtol=2e-2, atol=2e-2)

    # Default eval path (like the original FlowQA test): 2-layer BiLSTM.
    check(B=2, T=8, D=32, H=32, L=2,
          concat_layers=False, do_residual=False, max_chunk=32, seed=0)

    # concat_layers + do_residual, multi-chunk time grid (C=2): exercises the
    # reversed backward BlockSpec indexing across chunks, the split-W_ih
    # half-pair input path and the fused residual stores.
    check(B=2, T=16, D=16, H=32, L=3,
          concat_layers=True, do_residual=True, max_chunk=8, seed=1)

    print("KERNEL_OK")
</pallas_src>

<mosaic_0001>
module attributes {stable_mosaic.version = 11 : i64} {
  func.func @_bilstm_chunk_kernel(%arg0: i32, %arg1: memref<2x8x32xf32, #tpu.memory_space<vmem>>, %arg2: memref<32x128xbf16, #tpu.memory_space<vmem>>, %arg3: memref<32x128xbf16, #tpu.memory_space<vmem>>, %arg4: memref<1x128xf32, #tpu.memory_space<vmem>>, %arg5: memref<32x128xbf16, #tpu.memory_space<vmem>>, %arg6: memref<32x128xbf16, #tpu.memory_space<vmem>>, %arg7: memref<1x128xf32, #tpu.memory_space<vmem>>, %arg8: memref<2x8x32xf32, #tpu.memory_space<vmem>>, %arg9: memref<2x8x32xf32, #tpu.memory_space<vmem>>, %arg10: memref<2x32xf32, #tpu.memory_space<vmem>>, %arg11: memref<2x32xf32, #tpu.memory_space<vmem>>, %arg12: memref<2x32xf32, #tpu.memory_space<vmem>>, %arg13: memref<2x32xf32, #tpu.memory_space<vmem>>) attributes {dimension_semantics = [#tpu.dimension_semantics<arbitrary>], iteration_bounds = array<i64: 1>, scalar_prefetch = 0 : i64, scratch_operands = 4 : i64, tpu.core_type = #tpu.core_type<tc>, window_params = [{transform_indices = @transform_0, window_bounds = array<i64: 2, 8, 32>}, {pipeline_mode = #tpu.pipeline_mode<synchronous>, transform_indices = @transform_1, window_bounds = array<i64: 32, 128>}, {pipeline_mode = #tpu.pipeline_mode<synchronous>, transform_indices = @transform_2, window_bounds = array<i64: 32, 128>}, {pipeline_mode = #tpu.pipeline_mode<synchronous>, transform_indices = @transform_3, window_bounds = array<i64: 1, 128>}, {pipeline_mode = #tpu.pipeline_mode<synchronous>, transform_indices = @transform_4, window_bounds = array<i64: 32, 128>}, {pipeline_mode = #tpu.pipeline_mode<synchronous>, transform_indices = @transform_5, window_bounds = array<i64: 32, 128>}, {pipeline_mode = #tpu.pipeline_mode<synchronous>, transform_indices = @transform_6, window_bounds = array<i64: 1, 128>}, {transform_indices = @transform_7, window_bounds = array<i64: 2, 8, 32>}, {transform_indices = @transform_8, window_bounds = array<i64: 2, 8, 32>}]} {
    %c0_i32 = arith.constant 0 : i32
    %0 = arith.cmpi eq, %arg0, %c0_i32 : i32
    %1 = arith.extui %0 : i1 to i32
    %c0_i32_0 = arith.constant 0 : i32
    %2 = arith.cmpi ne, %1, %c0_i32_0 : i32
    scf.if %2 {
      %cst_140 = arith.constant 0.000000e+00 : f32
      %559 = vector.broadcast %cst_140 : f32 to vector<2x32xf32>
      %c0_141 = arith.constant 0 : index
      %c0_142 = arith.constant 0 : index
      %560 = vector.load %arg10[%c0_141, %c0_142] : memref<2x32xf32, #tpu.memory_space<vmem>>, vector<2x32xf32>
      tpu.vector_store %arg10[%c0_141, %c0_142], %559 {strides = array<i32>} : memref<2x32xf32, #tpu.memory_space<vmem>>, vector<2x32xf32>,
      %cst_143 = arith.constant 0.000000e+00 : f32
      %561 = vector.broadcast %cst_143 : f32 to vector<2x32xf32>
      %c0_144 = arith.constant 0 : index
      %c0_145 = arith.constant 0 : index
      %562 = vector.load %arg11[%c0_144, %c0_145] : memref<2x32xf32, #tpu.memory_space<vmem>>, vector<2x32xf32>
      tpu.vector_store %arg11[%c0_144, %c0_145], %561 {strides = array<i32>} : memref<2x32xf32, #tpu.memory_space<vmem>>, vector<2x32xf32>,
      %cst_146 = arith.constant 0.000000e+00 : f32
      %563 = vector.broadcast %cst_146 : f32 to vector<2x32xf32>
      %c0_147 = arith.constant 0 : index
      %c0_148 = arith.constant 0 : index
      %564 = vector.load %arg12[%c0_147, %c0_148] : memref<2x32xf32, #tpu.memory_space<vmem>>, vector<2x32xf32>
      tpu.vector_store %arg12[%c0_147, %c0_148], %563 {strides = array<i32>} : memref<2x32xf32, #tpu.memory_space<vmem>>, vector<2x32xf32>,
      %cst_149 = arith.constant 0.000000e+00 : f32
      %565 = vector.broadcast %cst_149 : f32 to vector<2x32xf32>
      %c0_150 = arith.constant 0 : index
      %c0_151 = arith.constant 0 : index
      %566 = vector.load %arg13[%c0_150, %c0_151] : memref<2x32xf32, #tpu.memory_space<vmem>>, vector<2x32xf32>
      tpu.vector_store %arg13[%c0_150, %c0_151], %565 {strides = array<i32>} : memref<2x32xf32, #tpu.memory_space<vmem>>, vector<2x32xf32>,
    } else {
    }
    %c0 = arith.constant 0 : index
    %c0_1 = arith.constant 0 : index
    %c0_2 = arith.constant 0 : index
    %3 = vector.load %arg1[%c0, %c0_1, %c0_2] : memref<2x8x32xf32, #tpu.memory_space<vmem>>, vector<2x8x32xf32>
    %4 = arith.truncf %3 : vector<2x8x32xf32> to vector<2x8x32xbf16>
    %5 = vector.shape_cast %4 : vector<2x8x32xbf16> to vector<16x32xbf16>
    %c0_3 = arith.constant 0 : index
    %c0_4 = arith.constant 0 : index
    %6 = vector.load %arg2[%c0_3, %c0_4] : memref<32x128xbf16, #tpu.memory_space<vmem>>, vector<32x128xbf16>
    %cst = arith.constant dense<0.000000e+00> : vector<16x128xf32>
    %7 = tpu.matmul %5, %6, %cst {dimension_numbers = #tpu.dot_dimension_numbers<[1], [0], [0], [1], [0, 0, 1, 1], [], []>} : vector<16x32xbf16>, vector<32x128xbf16>, vector<16x128xf32> -> vector<16x128xf32>
    %c0_5 = arith.constant 0 : index
    %c0_6 = arith.constant 0 : index
    %8 = vector.load %arg4[%c0_5, %c0_6] : memref<1x128xf32, #tpu.memory_space<vmem>>, vector<1x128xf32>
    %9 = vector.broadcast %8 : vector<1x128xf32> to vector<16x128xf32>
    %10 = arith.addf %7, %9 : vector<16x128xf32>
    %11 = vector.shape_cast %10 : vector<16x128xf32> to vector<2x8x128xf32>
    %c0_7 = arith.constant 0 : index
    %c0_8 = arith.constant 0 : index
    %c0_9 = arith.constant 0 : index
    %12 = vector.load %arg1[%c0_7, %c0_8, %c0_9] : memref<2x8x32xf32, #tpu.memory_space<vmem>>, vector<2x8x32xf32>
    %13 = arith.truncf %12 : vector<2x8x32xf32> to vector<2x8x32xbf16>
    %14 = vector.shape_cast %13 : vector<2x8x32xbf16> to vector<16x32xbf16>
    %c0_10 = arith.constant 0 : index
    %c0_11 = arith.constant 0 : index
    %15 = vector.load %arg5[%c0_10, %c0_11] : memref<32x128xbf16, #tpu.memory_space<vmem>>, vector<32x128xbf16>
    %cst_12 = arith.constant dense<0.000000e+00> : vector<16x128xf32>
    %16 = tpu.matmul %14, %15, %cst_12 {dimension_numbers = #tpu.dot_dimension_numbers<[1], [0], [0], [1], [0, 0, 1, 1], [], []>} : vector<16x32xbf16>, vector<32x128xbf16>, vector<16x128xf32> -> vector<16x128xf32>
    %c0_13 = arith.constant 0 : index
    %c0_14 = arith.constant 0 : index
    %17 = vector.load %arg7[%c0_13, %c0_14] : memref<1x128xf32, #tpu.memory_space<vmem>>, vector<1x128xf32>
    %18 = vector.broadcast %17 : vector<1x128xf32> to vector<16x128xf32>
    %19 = arith.addf %16, %18 : vector<16x128xf32>
    %20 = vector.shape_cast %19 : vector<16x128xf32> to vector<2x8x128xf32>
    %c0_15 = arith.constant 0 : index
    %c0_16 = arith.constant 0 : index
    %21 = vector.load %arg3[%c0_15, %c0_16] : memref<32x128xbf16, #tpu.memory_space<vmem>>, vector<32x128xbf16>
    %c0_17 = arith.constant 0 : index
    %c0_18 = arith.constant 0 : index
    %22 = vector.load %arg6[%c0_17, %c0_18] : memref<32x128xbf16, #tpu.memory_space<vmem>>, vector<32x128xbf16>
    %c0_19 = arith.constant 0 : index
    %c0_20 = arith.constant 0 : index
    %23 = vector.load %arg10[%c0_19, %c0_20] : memref<2x32xf32, #tpu.memory_space<vmem>>, vector<2x32xf32>
    %c0_21 = arith.constant 0 : index
    %c0_22 = arith.constant 0 : index
    %24 = vector.load %arg11[%c0_21, %c0_22] : memref<2x32xf32, #tpu.memory_space<vmem>>, vector<2x32xf32>
    %c0_23 = arith.constant 0 : index
    %c0_24 = arith.constant 0 : index
    %25 = vector.load %arg12[%c0_23, %c0_24] : memref<2x32xf32, #tpu.memory_space<vmem>>, vector<2x32xf32>
    %c0_25 = arith.constant 0 : index
    %c0_26 = arith.constant 0 : index
    %26 = vector.load %arg13[%c0_25, %c0_26] : memref<2x32xf32, #tpu.memory_space<vmem>>, vector<2x32xf32>
    %27 = vector.extract_strided_slice %11 {offsets = [0, 0, 0], sizes = [2, 1, 128], strides = [1, 1, 1]} : vector<2x8x128xf32> to vector<2x1x128xf32>
    %28 = vector.shape_cast %27 : vector<2x1x128xf32> to vector<2x128xf32>
    %29 = arith.truncf %23 : vector<2x32xf32> to vector<2x32xbf16>
    %cst_27 = arith.constant dense<0.000000e+00> : vector<2x128xf32>
    %30 = tpu.matmul %29, %21, %cst_27 {dimension_numbers = #tpu.dot_dimension_numbers<[1], [0], [0], [1], [0, 0, 1, 1], [], []>} : vector<2x32xbf16>, vector<32x128xbf16>, vector<2x128xf32> -> vector<2x128xf32>
    %31 = arith.addf %28, %30 : vector<2x128xf32>
    %32 = vector.extract_strided_slice %20 {offsets = [0, 7, 0], sizes = [2, 1, 128], strides = [1, 1, 1]} : vector<2x8x128xf32> to vector<2x1x128xf32>
    %33 = vector.shape_cast %32 : vector<2x1x128xf32> to vector<2x128xf32>
    %34 = arith.truncf %25 : vector<2x32xf32> to vector<2x32xbf16>
    %cst_28 = arith.constant dense<0.000000e+00> : vector<2x128xf32>
    %35 = tpu.matmul %34, %22, %cst_28 {dimension_numbers = #tpu.dot_dimension_numbers<[1], [0], [0], [1], [0, 0, 1, 1], [], []>} : vector<2x32xbf16>, vector<32x128xbf16>, vector<2x128xf32> -> vector<2x128xf32>
    %36 = arith.addf %33, %35 : vector<2x128xf32>
    %37 = vector.extract_strided_slice %31 {offsets = [0, 0], sizes = [2, 32], strides = [1, 1]} : vector<2x128xf32> to vector<2x32xf32>
    %38 = arith.negf %37 : vector<2x32xf32>
    %39 = math.exp %38 : vector<2x32xf32>
    %cst_29 = arith.constant 1.000000e+00 : f32
    %40 = vector.broadcast %cst_29 : f32 to vector<2x32xf32>
    %41 = arith.addf %40, %39 : vector<2x32xf32>
    %42 = arith.divf %40, %41 : vector<2x32xf32>
    %43 = vector.extract_strided_slice %31 {offsets = [0, 32], sizes = [2, 32], strides = [1, 1]} : vector<2x128xf32> to vector<2x32xf32>
    %44 = arith.negf %43 : vector<2x32xf32>
    %45 = math.exp %44 : vector<2x32xf32>
    %cst_30 = arith.constant 1.000000e+00 : f32
    %46 = vector.broadcast %cst_30 : f32 to vector<2x32xf32>
    %47 = arith.addf %46, %45 : vector<2x32xf32>
    %48 = arith.divf %46, %47 : vector<2x32xf32>
    %49 = vector.extract_strided_slice %31 {offsets = [0, 64], sizes = [2, 32], strides = [1, 1]} : vector<2x128xf32> to vector<2x32xf32>
    %50 = math.tanh %49 : vector<2x32xf32>
    %51 = vector.extract_strided_slice %31 {offsets = [0, 96], sizes = [2, 32], strides = [1, 1]} : vector<2x128xf32> to vector<2x32xf32>
    %52 = arith.negf %51 : vector<2x32xf32>
    %53 = math.exp %52 : vector<2x32xf32>
    %cst_31 = arith.constant 1.000000e+00 : f32
    %54 = vector.broadcast %cst_31 : f32 to vector<2x32xf32>
    %55 = arith.addf %54, %53 : vector<2x32xf32>
    %56 = arith.divf %54, %55 : vector<2x32xf32>
    %57 = arith.mulf %48, %24 : vector<2x32xf32>
    %58 = arith.mulf %42, %50 : vector<2x32xf32>
    %59 = arith.addf %57, %58 : vector<2x32xf32>
    %60 = math.tanh %59 : vector<2x32xf32>
    %61 = arith.mulf %56, %60 : vector<2x32xf32>
    %62 = vector.extract_strided_slice %36 {offsets = [0, 0], sizes = [2, 32], strides = [1, 1]} : vector<2x128xf32> to vector<2x32xf32>
    %63 = arith.negf %62 : vector<2x32xf32>
    %64 = math.exp %63 : vector<2x32xf32>
    %cst_32 = arith.constant 1.000000e+00 : f32
    %65 = vector.broadcast %cst_32 : f32 to vector<2x32xf32>
    %66 = arith.addf %65, %64 : vector<2x32xf32>
    %67 = arith.divf %65, %66 : vector<2x32xf32>
    %68 = vector.extract_strided_slice %36 {offsets = [0, 32], sizes = [2, 32], strides = [1, 1]} : vector<2x128xf32> to vector<2x32xf32>
    %69 = arith.negf %68 : vector<2x32xf32>
    %70 = math.exp %69 : vector<2x32xf32>
    %cst_33 = arith.constant 1.000000e+00 : f32
    %71 = vector.broadcast %cst_33 : f32 to vector<2x32xf32>
    %72 = arith.addf %71, %70 : vector<2x32xf32>
    %73 = arith.divf %71, %72 : vector<2x32xf32>
    %74 = vector.extract_strided_slice %36 {offsets = [0, 64], sizes = [2, 32], strides = [1, 1]} : vector<2x128xf32> to vector<2x32xf32>
    %75 = math.tanh %74 : vector<2x32xf32>
    %76 = vector.extract_strided_slice %36 {offsets = [0, 96], sizes = [2, 32], strides = [1, 1]} : vector<2x128xf32> to vector<2x32xf32>
    %77 = arith.negf %76 : vector<2x32xf32>
    %78 = math.exp %77 : vector<2x32xf32>
    %cst_34 = arith.constant 1.000000e+00 : f32
    %79 = vector.broadcast %cst_34 : f32 to vector<2x32xf32>
    %80 = arith.addf %79, %78 : vector<2x32xf32>
    %81 = arith.divf %79, %80 : vector<2x32xf32>
    %82 = arith.mulf %73, %26 : vector<2x32xf32>
    %83 = arith.mulf %67, %75 : vector<2x32xf32>
    %84 = arith.addf %82, %83 : vector<2x32xf32>
    %85 = math.tanh %84 : vector<2x32xf32>
    %86 = arith.mulf %81, %85 : vector<2x32xf32>
    %c0_35 = arith.constant 0 : index
    %c0_36 = arith.constant 0 : index
    %c0_37 = arith.constant 0 : index
    %87 = vector.load %arg8[%c0_35, %c0_36, %c0_37] : memref<2x8x32xf32, #tpu.memory_space<vmem>>, vector<2x1x32xf32>
    %88 = vector.shape_cast %87 : vector<2x1x32xf32> to vector<2x32xf32>
    %89 = vector.shape_cast %61 : vector<2x32xf32> to vector<2x1x32xf32>
    tpu.vector_store %arg8[%c0_35, %c0_36, %c0_37], %89 {strides = array<i32>} : memref<2x8x32xf32, #tpu.memory_space<vmem>>, vector<2x1x32xf32>,
    %c0_38 = arith.constant 0 : index
    %c7 = arith.constant 7 : index
    %c0_39 = arith.constant 0 : index
    %90 = vector.load %arg9[%c0_38, %c7, %c0_39] : memref<2x8x32xf32, #tpu.memory_space<vmem>>, vector<2x1x32xf32>
    %91 = vector.shape_cast %90 : vector<2x1x32xf32> to vector<2x32xf32>
    %92 = vector.shape_cast %86 : vector<2x32xf32> to vector<2x1x32xf32>
    tpu.vector_store %arg9[%c0_38, %c7, %c0_39], %92 {strides = array<i32>} : memref<2x8x32xf32, #tpu.memory_space<vmem>>, vector<2x1x32xf32>,
    %93 = vector.extract_strided_slice %11 {offsets = [0, 1, 0], sizes = [2, 1, 128], strides = [1, 1, 1]} : vector<2x8x128xf32> to vector<2x1x128xf32>
    %94 = vector.shape_cast %93 : vector<2x1x128xf32> to vector<2x128xf32>
    %95 = arith.truncf %61 : vector<2x32xf32> to vector<2x32xbf16>
    %cst_40 = arith.constant dense<0.000000e+00> : vector<2x128xf32>
    %96 = tpu.matmul %95, %21, %cst_40 {dimension_numbers = #tpu.dot_dimension_numbers<[1], [0], [0], [1], [0, 0, 1, 1], [], []>} : vector<2x32xbf16>, vector<32x128xbf16>, vector<2x128xf32> -> vector<2x128xf32>
    %97 = arith.addf %94, %96 : vector<2x128xf32>
    %98 = vector.extract_strided_slice %20 {offsets = [0, 6, 0], sizes = [2, 1, 128], strides = [1, 1, 1]} : vector<2x8x128xf32> to vector<2x1x128xf32>
    %99 = vector.shape_cast %98 : vector<2x1x128xf32> to vector<2x128xf32>
    %100 = arith.truncf %86 : vector<2x32xf32> to vector<2x32xbf16>
    %cst_41 = arith.constant dense<0.000000e+00> : vector<2x128xf32>
    %101 = tpu.matmul %100, %22, %cst_41 {dimension_numbers = #tpu.dot_dimension_numbers<[1], [0], [0], [1], [0, 0, 1, 1], [], []>} : vector<2x32xbf16>, vector<32x128xbf16>, vector<2x128xf32> -> vector<2x128xf32>
    %102 = arith.addf %99, %101 : vector<2x128xf32>
    %103 = vector.extract_strided_slice %97 {offsets = [0, 0], sizes = [2, 32], strides = [1, 1]} : vector<2x128xf32> to vector<2x32xf32>
    %104 = arith.negf %103 : vector<2x32xf32>
    %105 = math.exp %104 : vector<2x32xf32>
    %cst_42 = arith.constant 1.000000e+00 : f32
    %106 = vector.broadcast %cst_42 : f32 to vector<2x32xf32>
    %107 = arith.addf %106, %105 : vector<2x32xf32>
    %108 = arith.divf %106, %107 : vector<2x32xf32>
    %109 = vector.extract_strided_slice %97 {offsets = [0, 32], sizes = [2, 32], strides = [1, 1]} : vector<2x128xf32> to vector<2x32xf32>
    %110 = arith.negf %109 : vector<2x32xf32>
    %111 = math.exp %110 : vector<2x32xf32>
    %cst_43 = arith.constant 1.000000e+00 : f32
    %112 = vector.broadcast %cst_43 : f32 to vector<2x32xf32>
    %113 = arith.addf %112, %111 : vector<2x32xf32>
    %114 = arith.divf %112, %113 : vector<2x32xf32>
    %115 = vector.extract_strided_slice %97 {offsets = [0, 64], sizes = [2, 32], strides = [1, 1]} : vector<2x128xf32> to vector<2x32xf32>
    %116 = math.tanh %115 : vector<2x32xf32>
    %117 = vector.extract_strided_slice %97 {offsets = [0, 96], sizes = [2, 32], strides = [1, 1]} : vector<2x128xf32> to vector<2x32xf32>
    %118 = arith.negf %117 : vector<2x32xf32>
    %119 = math.exp %118 : vector<2x32xf32>
    %cst_44 = arith.constant 1.000000e+00 : f32
    %120 = vector.broadcast %cst_44 : f32 to vector<2x32xf32>
    %121 = arith.addf %120, %119 : vector<2x32xf32>
    %122 = arith.divf %120, %121 : vector<2x32xf32>
    %123 = arith.mulf %114, %59 : vector<2x32xf32>
    %124 = arith.mulf %108, %116 : vector<2x32xf32>
    %125 = arith.addf %123, %124 : vector<2x32xf32>
    %126 = math.tanh %125 : vector<2x32xf32>
    %127 = arith.mulf %122, %126 : vector<2x32xf32>
    %128 = vector.extract_strided_slice %102 {offsets = [0, 0], sizes = [2, 32], strides = [1, 1]} : vector<2x128xf32> to vector<2x32xf32>
    %129 = arith.negf %128 : vector<2x32xf32>
    %130 = math.exp %129 : vector<2x32xf32>
    %cst_45 = arith.constant 1.000000e+00 : f32
    %131 = vector.broadcast %cst_45 : f32 to vector<2x32xf32>
    %132 = arith.addf %131, %130 : vector<2x32xf32>
    %133 = arith.divf %131, %132 : vector<2x32xf32>
    %134 = vector.extract_strided_slice %102 {offsets = [0, 32], sizes = [2, 32], strides = [1, 1]} : vector<2x128xf32> to vector<2x32xf32>
    %135 = arith.negf %134 : vector<2x32xf32>
    %136 = math.exp %135 : vector<2x32xf32>
    %cst_46 = arith.constant 1.000000e+00 : f32
    %137 = vector.broadcast %cst_46 : f32 to vector<2x32xf32>
    %138 = arith.addf %137, %136 : vector<2x32xf32>
    %139 = arith.divf %137, %138 : vector<2x32xf32>
    %140 = vector.extract_strided_slice %102 {offsets = [0, 64], sizes = [2, 32], strides = [1, 1]} : vector<2x128xf32> to vector<2x32xf32>
    %141 = math.tanh %140 : vector<2x32xf32>
    %142 = vector.extract_strided_slice %102 {offsets = [0, 96], sizes = [2, 32], strides = [1, 1]} : vector<2x128xf32> to vector<2x32xf32>
    %143 = arith.negf %142 : vector<2x32xf32>
    %144 = math.exp %143 : vector<2x32xf32>
    %cst_47 = arith.constant 1.000000e+00 : f32
    %145 = vector.broadcast %cst_47 : f32 to vector<2x32xf32>
    %146 = arith.addf %145, %144 : vector<2x32xf32>
    %147 = arith.divf %145, %146 : vector<2x32xf32>
    %148 = arith.mulf %139, %84 : vector<2x32xf32>
    %149 = arith.mulf %133, %141 : vector<2x32xf32>
    %150 = arith.addf %148, %149 : vector<2x32xf32>
    %151 = math.tanh %150 : vector<2x32xf32>
    %152 = arith.mulf %147, %151 : vector<2x32xf32>
    %c0_48 = arith.constant 0 : index
    %c1 = arith.constant 1 : index
    %c0_49 = arith.constant 0 : index
    %153 = vector.load %arg8[%c0_48, %c1, %c0_49] : memref<2x8x32xf32, #tpu.memory_space<vmem>>, vector<2x1x32xf32>
    %154 = vector.shape_cast %153 : vector<2x1x32xf32> to vector<2x32xf32>
    %155 = vector.shape_cast %127 : vector<2x32xf32> to vector<2x1x32xf32>
    tpu.vector_store %arg8[%c0_48, %c1, %c0_49], %155 {strides = array<i32>} : memref<2x8x32xf32, #tpu.memory_space<vmem>>, vector<2x1x32xf32>,
    %c0_50 = arith.constant 0 : index
    %c6 = arith.constant 6 : index
    %c0_51 = arith.constant 0 : index
    %156 = vector.load %arg9[%c0_50, %c6, %c0_51] : memref<2x8x32xf32, #tpu.memory_space<vmem>>, vector<2x1x32xf32>
    %157 = vector.shape_cast %156 : vector<2x1x32xf32> to vector<2x32xf32>
    %158 = vector.shape_cast %152 : vector<2x32xf32> to vector<2x1x32xf32>
    tpu.vector_store %arg9[%c0_50, %c6, %c0_51], %158 {strides = array<i32>} : memref<2x8x32xf32, #tpu.memory_space<vmem>>, vector<2x1x32xf32>,
    %159 = vector.extract_strided_slice %11 {offsets = [0, 2, 0], sizes = [2, 1, 128], strides = [1, 1, 1]} : vector<2x8x128xf32> to vector<2x1x128xf32>
    %160 = vector.shape_cast %159 : vector<2x1x128xf32> to vector<2x128xf32>
    %161 = arith.truncf %127 : vector<2x32xf32> to vector<2x32xbf16>
    %cst_52 = arith.constant dense<0.000000e+00> : vector<2x128xf32>
    %162 = tpu.matmul %161, %21, %cst_52 {dimension_numbers = #tpu.dot_dimension_numbers<[1], [0], [0], [1], [0, 0, 1, 1], [], []>} : vector<2x32xbf16>, vector<32x128xbf16>, vector<2x128xf32> -> vector<2x128xf32>
    %163 = arith.addf %160, %162 : vector<2x128xf32>
    %164 = vector.extract_strided_slice %20 {offsets = [0, 5, 0], sizes = [2, 1, 128], strides = [1, 1, 1]} : vector<2x8x128xf32> to vector<2x1x128xf32>
    %165 = vector.shape_cast %164 : vector<2x1x128xf32> to vector<2x128xf32>
    %166 = arith.truncf %152 : vector<2x32xf32> to vector<2x32xbf16>
    %cst_53 = arith.constant dense<0.000000e+00> : vector<2x128xf32>
    %167 = tpu.matmul %166, %22, %cst_53 {dimension_numbers = #tpu.dot_dimension_numbers<[1], [0], [0], [1], [0, 0, 1, 1], [], []>} : vector<2x32xbf16>, vector<32x128xbf16>, vector<2x128xf32> -> vector<2x128xf32>
    %168 = arith.addf %165, %167 : vector<2x128xf32>
    %169 = vector.extract_strided_slice %163 {offsets = [0, 0], sizes = [2, 32], strides = [1, 1]} : vector<2x128xf32> to vector<2x32xf32>
    %170 = arith.negf %169 : vector<2x32xf32>
    %171 = math.exp %170 : vector<2x32xf32>
    %cst_54 = arith.constant 1.000000e+00 : f32
    %172 = vector.broadcast %cst_54 : f32 to vector<2x32xf32>
    %173 = arith.addf %172, %171 : vector<2x32xf32>
    %174 = arith.divf %172, %173 : vector<2x32xf32>
    %175 = vector.extract_strided_slice %163 {offsets = [0, 32], sizes = [2, 32], strides = [1, 1]} : vector<2x128xf32> to vector<2x32xf32>
    %176 = arith.negf %175 : vector<2x32xf32>
    %177 = math.exp %176 : vector<2x32xf32>
    %cst_55 = arith.constant 1.000000e+00 : f32
    %178 = vector.broadcast %cst_55 : f32 to vector<2x32xf32>
    %179 = arith.addf %178, %177 : vector<2x32xf32>
    %180 = arith.divf %178, %179 : vector<2x32xf32>
    %181 = vector.extract_strided_slice %163 {offsets = [0, 64], sizes = [2, 32], strides = [1, 1]} : vector<2x128xf32> to vector<2x32xf32>
    %182 = math.tanh %181 : vector<2x32xf32>
    %183 = vector.extract_strided_slice %163 {offsets = [0, 96], sizes = [2, 32], strides = [1, 1]} : vector<2x128xf32> to vector<2x32xf32>
    %184 = arith.negf %183 : vector<2x32xf32>
    %185 = math.exp %184 : vector<2x32xf32>
    %cst_56 = arith.constant 1.000000e+00 : f32
    %186 = vector.broadcast %cst_56 : f32 to vector<2x32xf32>
    %187 = arith.addf %186, %185 : vector<2x32xf32>
    %188 = arith.divf %186, %187 : vector<2x32xf32>
    %189 = arith.mulf %180, %125 : vector<2x32xf32>
    %190 = arith.mulf %174, %182 : vector<2x32xf32>
    %191 = arith.addf %189, %190 : vector<2x32xf32>
    %192 = math.tanh %191 : vector<2x32xf32>
    %193 = arith.mulf %188, %192 : vector<2x32xf32>
    %194 = vector.extract_strided_slice %168 {offsets = [0, 0], sizes = [2, 32], strides = [1, 1]} : vector<2x128xf32> to vector<2x32xf32>
    %195 = arith.negf %194 : vector<2x32xf32>
    %196 = math.exp %195 : vector<2x32xf32>
    %cst_57 = arith.constant 1.000000e+00 : f32
    %197 = vector.broadcast %cst_57 : f32 to vector<2x32xf32>
    %198 = arith.addf %197, %196 : vector<2x32xf32>
    %199 = arith.divf %197, %198 : vector<2x32xf32>
    %200 = vector.extract_strided_slice %168 {offsets = [0, 32], sizes = [2, 32], strides = [1, 1]} : vector<2x128xf32> to vector<2x32xf32>
    %201 = arith.negf %200 : vector<2x32xf32>
    %202 = math.exp %201 : vector<2x32xf32>
    %cst_58 = arith.constant 1.000000e+00 : f32
    %203 = vector.broadcast %cst_58 : f32 to vector<2x32xf32>
    %204 = arith.addf %203, %202 : vector<2x32xf32>
    %205 = arith.divf %203, %204 : vector<2x32xf32>
    %206 = vector.extract_strided_slice %168 {offsets = [0, 64], sizes = [2, 32], strides = [1, 1]} : vector<2x128xf32> to vector<2x32xf32>
    %207 = math.tanh %206 : vector<2x32xf32>
    %208 = vector.extract_strided_slice %168 {offsets = [0, 96], sizes = [2, 32], strides = [1, 1]} : vector<2x128xf32> to vector<2x32xf32>
    %209 = arith.negf %208 : vector<2x32xf32>
    %210 = math.exp %209 : vector<2x32xf32>
    %cst_59 = arith.constant 1.000000e+00 : f32
    %211 = vector.broadcast %cst_59 : f32 to vector<2x32xf32>
    %212 = arith.addf %211, %210 : vector<2x32xf32>
    %213 = arith.divf %211, %212 : vector<2x32xf32>
    %214 = arith.mulf %205, %150 : vector<2x32xf32>
    %215 = arith.mulf %199, %207 : vector<2x32xf32>
    %216 = arith.addf %214, %215 : vector<2x32xf32>
    %217 = math.tanh %216 : vector<2x32xf32>
    %218 = arith.mulf %213, %217 : vector<2x32xf32>
    %c0_60 = arith.constant 0 : index
    %c2 = arith.constant 2 : index
    %c0_61 = arith.constant 0 : index
    %219 = vector.load %arg8[%c0_60, %c2, %c0_61] : memref<2x8x32xf32, #tpu.memory_space<vmem>>, vector<2x1x32xf32>
    %220 = vector.shape_cast %219 : vector<2x1x32xf32> to vector<2x32xf32>
    %221 = vector.shape_cast %193 : vector<2x32xf32> to vector<2x1x32xf32>
    tpu.vector_store %arg8[%c0_60, %c2, %c0_61], %221 {strides = array<i32>} : memref<2x8x32xf32, #tpu.memory_space<vmem>>, vector<2x1x32xf32>,
    %c0_62 = arith.constant 0 : index
    %c5 = arith.constant 5 : index
    %c0_63 = arith.constant 0 : index
    %222 = vector.load %arg9[%c0_62, %c5, %c0_63] : memref<2x8x32xf32, #tpu.memory_space<vmem>>, vector<2x1x32xf32>
    %223 = vector.shape_cast %222 : vector<2x1x32xf32> to vector<2x32xf32>
    %224 = vector.shape_cast %218 : vector<2x32xf32> to vector<2x1x32xf32>
    tpu.vector_store %arg9[%c0_62, %c5, %c0_63], %224 {strides = array<i32>} : memref<2x8x32xf32, #tpu.memory_space<vmem>>, vector<2x1x32xf32>,
    %225 = vector.extract_strided_slice %11 {offsets = [0, 3, 0], sizes = [2, 1, 128], strides = [1, 1, 1]} : vector<2x8x128xf32> to vector<2x1x128xf32>
    %226 = vector.shape_cast %225 : vector<2x1x128xf32> to vector<2x128xf32>
    %227 = arith.truncf %193 : vector<2x32xf32> to vector<2x32xbf16>
    %cst_64 = arith.constant dense<0.000000e+00> : vector<2x128xf32>
    %228 = tpu.matmul %227, %21, %cst_64 {dimension_numbers = #tpu.dot_dimension_numbers<[1], [0], [0], [1], [0, 0, 1, 1], [], []>} : vector<2x32xbf16>, vector<32x128xbf16>, vector<2x128xf32> -> vector<2x128xf32>
    %229 = arith.addf %226, %228 : vector<2x128xf32>
    %230 = vector.extract_strided_slice %20 {offsets = [0, 4, 0], sizes = [2, 1, 128], strides = [1, 1, 1]} : vector<2x8x128xf32> to vector<2x1x128xf32>
    %231 = vector.shape_cast %230 : vector<2x1x128xf32> to vector<2x128xf32>
    %232 = arith.truncf %218 : vector<2x32xf32> to vector<2x32xbf16>
    %cst_65 = arith.constant dense<0.000000e+00> : vector<2x128xf32>
    %233 = tpu.matmul %232, %22, %cst_65 {dimension_numbers = #tpu.dot_dimension_numbers<[1], [0], [0], [1], [0, 0, 1, 1], [], []>} : vector<2x32xbf16>, vector<32x128xbf16>, vector<2x128xf32> -> vector<2x128xf32>
    %234 = arith.addf %231, %233 : vector<2x128xf32>
    %235 = vector.extract_strided_slice %229 {offsets = [0, 0], sizes = [2, 32], strides = [1, 1]} : vector<2x128xf32> to vector<2x32xf32>
    %236 = arith.negf %235 : vector<2x32xf32>
    %237 = math.exp %236 : vector<2x32xf32>
    %cst_66 = arith.constant 1.000000e+00 : f32
    %238 = vector.broadcast %cst_66 : f32 to vector<2x32xf32>
    %239 = arith.addf %238, %237 : vector<2x32xf32>
    %240 = arith.divf %238, %239 : vector<2x32xf32>
    %241 = vector.extract_strided_slice %229 {offsets = [0, 32], sizes = [2, 32], strides = [1, 1]} : vector<2x128xf32> to vector<2x32xf32>
    %242 = arith.negf %241 : vector<2x32xf32>
    %243 = math.exp %242 : vector<2x32xf32>
    %cst_67 = arith.constant 1.000000e+00 : f32
    %244 = vector.broadcast %cst_67 : f32 to vector<2x32xf32>
    %245 = arith.addf %244, %243 : vector<2x32xf32>
    %246 = arith.divf %244, %245 : vector<2x32xf32>
    %247 = vector.extract_strided_slice %229 {offsets = [0, 64], sizes = [2, 32], strides = [1, 1]} : vector<2x128xf32> to vector<2x32xf32>
    %248 = math.tanh %247 : vector<2x32xf32>
    %249 = vector.extract_strided_slice %229 {offsets = [0, 96], sizes = [2, 32], strides = [1, 1]} : vector<2x128xf32> to vector<2x32xf32>
    %250 = arith.negf %249 : vector<2x32xf32>
    %251 = math.exp %250 : vector<2x32xf32>
    %cst_68 = arith.constant 1.000000e+00 : f32
    %252 = vector.broadcast %cst_68 : f32 to vector<2x32xf32>
    %253 = arith.addf %252, %251 : vector<2x32xf32>
    %254 = arith.divf %252, %253 : vector<2x32xf32>
    %255 = arith.mulf %246, %191 : vector<2x32xf32>
    %256 = arith.mulf %240, %248 : vector<2x32xf32>
    %257 = arith.addf %255, %256 : vector<2x32xf32>
    %258 = math.tanh %257 : vector<2x32xf32>
    %259 = arith.mulf %254, %258 : vector<2x32xf32>
    %260 = vector.extract_strided_slice %234 {offsets = [0, 0], sizes = [2, 32], strides = [1, 1]} : vector<2x128xf32> to vector<2x32xf32>
    %261 = arith.negf %260 : vector<2x32xf32>
    %262 = math.exp %261 : vector<2x32xf32>
    %cst_69 = arith.constant 1.000000e+00 : f32
    %263 = vector.broadcast %cst_69 : f32 to vector<2x32xf32>
    %264 = arith.addf %263, %262 : vector<2x32xf32>
    %265 = arith.divf %263, %264 : vector<2x32xf32>
    %266 = vector.extract_strided_slice %234 {offsets = [0, 32], sizes = [2, 32], strides = [1, 1]} : vector<2x128xf32> to vector<2x32xf32>
    %267 = arith.negf %266 : vector<2x32xf32>
    %268 = math.exp %267 : vector<2x32xf32>
    %cst_70 = arith.constant 1.000000e+00 : f32
    %269 = vector.broadcast %cst_70 : f32 to vector<2x32xf32>
    %270 = arith.addf %269, %268 : vector<2x32xf32>
    %271 = arith.divf %269, %270 : vector<2x32xf32>
    %272 = vector.extract_strided_slice %234 {offsets = [0, 64], sizes = [2, 32], strides = [1, 1]} : vector<2x128xf32> to vector<2x32xf32>
    %273 = math.tanh %272 : vector<2x32xf32>
    %274 = vector.extract_strided_slice %234 {offsets = [0, 96], sizes = [2, 32], strides = [1, 1]} : vector<2x128xf32> to vector<2x32xf32>
    %275 = arith.negf %274 : vector<2x32xf32>
    %276 = math.exp %275 : vector<2x32xf32>
    %cst_71 = arith.constant 1.000000e+00 : f32
    %277 = vector.broadcast %cst_71 : f32 to vector<2x32xf32>
    %278 = arith.addf %277, %276 : vector<2x32xf32>
    %279 = arith.divf %277, %278 : vector<2x32xf32>
    %280 = arith.mulf %271, %216 : vector<2x32xf32>
    %281 = arith.mulf %265, %273 : vector<2x32xf32>
    %282 = arith.addf %280, %281 : vector<2x32xf32>
    %283 = math.tanh %282 : vector<2x32xf32>
    %284 = arith.mulf %279, %283 : vector<2x32xf32>
    %c0_72 = arith.constant 0 : index
    %c3 = arith.constant 3 : index
    %c0_73 = arith.constant 0 : index
    %285 = vector.load %arg8[%c0_72, %c3, %c0_73] : memref<2x8x32xf32, #tpu.memory_space<vmem>>, vector<2x1x32xf32>
    %286 = vector.shape_cast %285 : vector<2x1x32xf32> to vector<2x32xf32>
    %287 = vector.shape_cast %259 : vector<2x32xf32> to vector<2x1x32xf32>
    tpu.vector_store %arg8[%c0_72, %c3, %c0_73], %287 {strides = array<i32>} : memref<2x8x32xf32, #tpu.memory_space<vmem>>, vector<2x1x32xf32>,
    %c0_74 = arith.constant 0 : index
    %c4 = arith.constant 4 : index
    %c0_75 = arith.constant 0 : index
    %288 = vector.load %arg9[%c0_74, %c4, %c0_75] : memref<2x8x32xf32, #tpu.memory_space<vmem>>, vector<2x1x32xf32>
    %289 = vector.shape_cast %288 : vector<2x1x32xf32> to vector<2x32xf32>
    %290 = vector.shape_cast %284 : vector<2x32xf32> to vector<2x1x32xf32>
    tpu.vector_store %arg9[%c0_74, %c4, %c0_75], %290 {strides = array<i32>} : memref<2x8x32xf32, #tpu.memory_space<vmem>>, vector<2x1x32xf32>,
    %291 = vector.extract_strided_slice %11 {offsets = [0, 4, 0], sizes = [2, 1, 128], strides = [1, 1, 1]} : vector<2x8x128xf32> to vector<2x1x128xf32>
    %292 = vector.shape_cast %291 : vector<2x1x128xf32> to vector<2x128xf32>
    %293 = arith.truncf %259 : vector<2x32xf32> to vector<2x32xbf16>
    %cst_76 = arith.constant dense<0.000000e+00> : vector<2x128xf32>
    %294 = tpu.matmul %293, %21, %cst_76 {dimension_numbers = #tpu.dot_dimension_numbers<[1], [0], [0], [1], [0, 0, 1, 1], [], []>} : vector<2x32xbf16>, vector<32x128xbf16>, vector<2x128xf32> -> vector<2x128xf32>
    %295 = arith.addf %292, %294 : vector<2x128xf32>
    %296 = vector.extract_strided_slice %20 {offsets = [0, 3, 0], sizes = [2, 1, 128], strides = [1, 1, 1]} : vector<2x8x128xf32> to vector<2x1x128xf32>
    %297 = vector.shape_cast %296 : vector<2x1x128xf32> to vector<2x128xf32>
    %298 = arith.truncf %284 : vector<2x32xf32> to vector<2x32xbf16>
    %cst_77 = arith.constant dense<0.000000e+00> : vector<2x128xf32>
    %299 = tpu.matmul %298, %22, %cst_77 {dimension_numbers = #tpu.dot_dimension_numbers<[1], [0], [0], [1], [0, 0, 1, 1], [], []>} : vector<2x32xbf16>, vector<32x128xbf16>, vector<2x128xf32> -> vector<2x128xf32>
    %300 = arith.addf %297, %299 : vector<2x128xf32>
    %301 = vector.extract_strided_slice %295 {offsets = [0, 0], sizes = [2, 32], strides = [1, 1]} : vector<2x128xf32> to vector<2x32xf32>
    %302 = arith.negf %301 : vector<2x32xf32>
    %303 = math.exp %302 : vector<2x32xf32>
    %cst_78 = arith.constant 1.000000e+00 : f32
    %304 = vector.broadcast %cst_78 : f32 to vector<2x32xf32>
    %305 = arith.addf %304, %303 : vector<2x32xf32>
    %306 = arith.divf %304, %305 : vector<2x32xf32>
    %307 = vector.extract_strided_slice %295 {offsets = [0, 32], sizes = [2, 32], strides = [1, 1]} : vector<2x128xf32> to vector<2x32xf32>
    %308 = arith.negf %307 : vector<2x32xf32>
    %309 = math.exp %308 : vector<2x32xf32>
    %cst_79 = arith.constant 1.000000e+00 : f32
    %310 = vector.broadcast %cst_79 : f32 to vector<2x32xf32>
    %311 = arith.addf %310, %309 : vector<2x32xf32>
    %312 = arith.divf %310, %311 : vector<2x32xf32>
    %313 = vector.extract_strided_slice %295 {offsets = [0, 64], sizes = [2, 32], strides = [1, 1]} : vector<2x128xf32> to vector<2x32xf32>
    %314 = math.tanh %313 : vector<2x32xf32>
    %315 = vector.extract_strided_slice %295 {offsets = [0, 96], sizes = [2, 32], strides = [1, 1]} : vector<2x128xf32> to vector<2x32xf32>
    %316 = arith.negf %315 : vector<2x32xf32>
    %317 = math.exp %316 : vector<2x32xf32>
    %cst_80 = arith.constant 1.000000e+00 : f32
    %318 = vector.broadcast %cst_80 : f32 to vector<2x32xf32>
    %319 = arith.addf %318, %317 : vector<2x32xf32>
    %320 = arith.divf %318, %319 : vector<2x32xf32>
    %321 = arith.mulf %312, %257 : vector<2x32xf32>
    %322 = arith.mulf %306, %314 : vector<2x32xf32>
    %323 = arith.addf %321, %322 : vector<2x32xf32>
    %324 = math.tanh %323 : vector<2x32xf32>
    %325 = arith.mulf %320, %324 : vector<2x32xf32>
    %326 = vector.extract_strided_slice %300 {offsets = [0, 0], sizes = [2, 32], strides = [1, 1]} : vector<2x128xf32> to vector<2x32xf32>
    %327 = arith.negf %326 : vector<2x32xf32>
    %328 = math.exp %327 : vector<2x32xf32>
    %cst_81 = arith.constant 1.000000e+00 : f32
    %329 = vector.broadcast %cst_81 : f32 to vector<2x32xf32>
    %330 = arith.addf %329, %328 : vector<2x32xf32>
    %331 = arith.divf %329, %330 : vector<2x32xf32>
    %332 = vector.extract_strided_slice %300 {offsets = [0, 32], sizes = [2, 32], strides = [1, 1]} : vector<2x128xf32> to vector<2x32xf32>
    %333 = arith.negf %332 : vector<2x32xf32>
    %334 = math.exp %333 : vector<2x32xf32>
    %cst_82 = arith.constant 1.000000e+00 : f32
    %335 = vector.broadcast %cst_82 : f32 to vector<2x32xf32>
    %336 = arith.addf %335, %334 : vector<2x32xf32>
    %337 = arith.divf %335, %336 : vector<2x32xf32>
    %338 = vector.extract_strided_slice %300 {offsets = [0, 64], sizes = [2, 32], strides = [1, 1]} : vector<2x128xf32> to vector<2x32xf32>
    %339 = math.tanh %338 : vector<2x32xf32>
    %340 = vector.extract_strided_slice %300 {offsets = [0, 96], sizes = [2, 32], strides = [1, 1]} : vector<2x128xf32> to vector<2x32xf32>
    %341 = arith.negf %340 : vector<2x32xf32>
    %342 = math.exp %341 : vector<2x32xf32>
    %cst_83 = arith.constant 1.000000e+00 : f32
    %343 = vector.broadcast %cst_83 : f32 to vector<2x32xf32>
    %344 = arith.addf %343, %342 : vector<2x32xf32>
    %345 = arith.divf %343, %344 : vector<2x32xf32>
    %346 = arith.mulf %337, %282 : vector<2x32xf32>
    %347 = arith.mulf %331, %339 : vector<2x32xf32>
    %348 = arith.addf %346, %347 : vector<2x32xf32>
    %349 = math.tanh %348 : vector<2x32xf32>
    %350 = arith.mulf %345, %349 : vector<2x32xf32>
    %c0_84 = arith.constant 0 : index
    %c4_85 = arith.constant 4 : index
    %c0_86 = arith.constant 0 : index
    %351 = vector.load %arg8[%c0_84, %c4_85, %c0_86] : memref<2x8x32xf32, #tpu.memory_space<vmem>>, vector<2x1x32xf32>
    %352 = vector.shape_cast %351 : vector<2x1x32xf32> to vector<2x32xf32>
    %353 = vector.shape_cast %325 : vector<2x32xf32> to vector<2x1x32xf32>
    tpu.vector_store %arg8[%c0_84, %c4_85, %c0_86], %353 {strides = array<i32>} : memref<2x8x32xf32, #tpu.memory_space<vmem>>, vector<2x1x32xf32>,
    %c0_87 = arith.constant 0 : index
    %c3_88 = arith.constant 3 : index
    %c0_89 = arith.constant 0 : index
    %354 = vector.load %arg9[%c0_87, %c3_88, %c0_89] : memref<2x8x32xf32, #tpu.memory_space<vmem>>, vector<2x1x32xf32>
    %355 = vector.shape_cast %354 : vector<2x1x32xf32> to vector<2x32xf32>
    %356 = vector.shape_cast %350 : vector<2x32xf32> to vector<2x1x32xf32>
    tpu.vector_store %arg9[%c0_87, %c3_88, %c0_89], %356 {strides = array<i32>} : memref<2x8x32xf32, #tpu.memory_space<vmem>>, vector<2x1x32xf32>,
    %357 = vector.extract_strided_slice %11 {offsets = [0, 5, 0], sizes = [2, 1, 128], strides = [1, 1, 1]} : vector<2x8x128xf32> to vector<2x1x128xf32>
    %358 = vector.shape_cast %357 : vector<2x1x128xf32> to vector<2x128xf32>
    %359 = arith.truncf %325 : vector<2x32xf32> to vector<2x32xbf16>
    %cst_90 = arith.constant dense<0.000000e+00> : vector<2x128xf32>
    %360 = tpu.matmul %359, %21, %cst_90 {dimension_numbers = #tpu.dot_dimension_numbers<[1], [0], [0], [1], [0, 0, 1, 1], [], []>} : vector<2x32xbf16>, vector<32x128xbf16>, vector<2x128xf32> -> vector<2x128xf32>
    %361 = arith.addf %358, %360 : vector<2x128xf32>
    %362 = vector.extract_strided_slice %20 {offsets = [0, 2, 0], sizes = [2, 1, 128], strides = [1, 1, 1]} : vector<2x8x128xf32> to vector<2x1x128xf32>
    %363 = vector.shape_cast %362 : vector<2x1x128xf32> to vector<2x128xf32>
    %364 = arith.truncf %350 : vector<2x32xf32> to vector<2x32xbf16>
    %cst_91 = arith.constant dense<0.000000e+00> : vector<2x128xf32>
    %365 = tpu.matmul %364, %22, %cst_91 {dimension_numbers = #tpu.dot_dimension_numbers<[1], [0], [0], [1], [0, 0, 1, 1], [], []>} : vector<2x32xbf16>, vector<32x128xbf16>, vector<2x128xf32> -> vector<2x128xf32>
    %366 = arith.addf %363, %365 : vector<2x128xf32>
    %367 = vector.extract_strided_slice %361 {offsets = [0, 0], sizes = [2, 32], strides = [1, 1]} : vector<2x128xf32> to vector<2x32xf32>
    %368 = arith.negf %367 : vector<2x32xf32>
    %369 = math.exp %368 : vector<2x32xf32>
    %cst_92 = arith.constant 1.000000e+00 : f32
    %370 = vector.broadcast %cst_92 : f32 to vector<2x32xf32>
    %371 = arith.addf %370, %369 : vector<2x32xf32>
    %372 = arith.divf %370, %371 : vector<2x32xf32>
    %373 = vector.extract_strided_slice %361 {offsets = [0, 32], sizes = [2, 32], strides = [1, 1]} : vector<2x128xf32> to vector<2x32xf32>
    %374 = arith.negf %373 : vector<2x32xf32>
    %375 = math.exp %374 : vector<2x32xf32>
    %cst_93 = arith.constant 1.000000e+00 : f32
    %376 = vector.broadcast %cst_93 : f32 to vector<2x32xf32>
    %377 = arith.addf %376, %375 : vector<2x32xf32>
    %378 = arith.divf %376, %377 : vector<2x32xf32>
    %379 = vector.extract_strided_slice %361 {offsets = [0, 64], sizes = [2, 32], strides = [1, 1]} : vector<2x128xf32> to vector<2x32xf32>
    %380 = math.tanh %379 : vector<2x32xf32>
    %381 = vector.extract_strided_slice %361 {offsets = [0, 96], sizes = [2, 32], strides = [1, 1]} : vector<2x128xf32> to vector<2x32xf32>
    %382 = arith.negf %381 : vector<2x32xf32>
    %383 = math.exp %382 : vector<2x32xf32>
    %cst_94 = arith.constant 1.000000e+00 : f32
    %384 = vector.broadcast %cst_94 : f32 to vector<2x32xf32>
    %385 = arith.addf %384, %383 : vector<2x32xf32>
    %386 = arith.divf %384, %385 : vector<2x32xf32>
    %387 = arith.mulf %378, %323 : vector<2x32xf32>
    %388 = arith.mulf %372, %380 : vector<2x32xf32>
    %389 = arith.addf %387, %388 : vector<2x32xf32>
    %390 = math.tanh %389 : vector<2x32xf32>
    %391 = arith.mulf %386, %390 : vector<2x32xf32>
    %392 = vector.extract_strided_slice %366 {offsets = [0, 0], sizes = [2, 32], strides = [1, 1]} : vector<2x128xf32> to vector<2x32xf32>
    %393 = arith.negf %392 : vector<2x32xf32>
    %394 = math.exp %393 : vector<2x32xf32>
    %cst_95 = arith.constant 1.000000e+00 : f32
    %395 = vector.broadcast %cst_95 : f32 to vector<2x32xf32>
    %396 = arith.addf %395, %394 : vector<2x32xf32>
    %397 = arith.divf %395, %396 : vector<2x32xf32>
    %398 = vector.extract_strided_slice %366 {offsets = [0, 32], sizes = [2, 32], strides = [1, 1]} : vector<2x128xf32> to vector<2x32xf32>
    %399 = arith.negf %398 : vector<2x32xf32>
    %400 = math.exp %399 : vector<2x32xf32>
    %cst_96 = arith.constant 1.000000e+00 : f32
    %401 = vector.broadcast %cst_96 : f32 to vector<2x32xf32>
    %402 = arith.addf %401, %400 : vector<2x32xf32>
    %403 = arith.divf %401, %402 : vector<2x32xf32>
    %404 = vector.extract_strided_slice %366 {offsets = [0, 64], sizes = [2, 32], strides = [1, 1]} : vector<2x128xf32> to vector<2x32xf32>
    %405 = math.tanh %404 : vector<2x32xf32>
    %406 = vector.extract_strided_slice %366 {offsets = [0, 96], sizes = [2, 32], strides = [1, 1]} : vector<2x128xf32> to vector<2x32xf32>
    %407 = arith.negf %406 : vector<2x32xf32>
    %408 = math.exp %407 : vector<2x32xf32>
    %cst_97 = arith.constant 1.000000e+00 : f32
    %409 = vector.broadcast %cst_97 : f32 to vector<2x32xf32>
    %410 = arith.addf %409, %408 : vector<2x32xf32>
    %411 = arith.divf %409, %410 : vector<2x32xf32>
    %412 = arith.mulf %403, %348 : vector<2x32xf32>
    %413 = arith.mulf %397, %405 : vector<2x32xf32>
    %414 = arith.addf %412, %413 : vector<2x32xf32>
    %415 = math.tanh %414 : vector<2x32xf32>
    %416 = arith.mulf %411, %415 : vector<2x32xf32>
    %c0_98 = arith.constant 0 : index
    %c5_99 = arith.constant 5 : index
    %c0_100 = arith.constant 0 : index
    %417 = vector.load %arg8[%c0_98, %c5_99, %c0_100] : memref<2x8x32xf32, #tpu.memory_space<vmem>>, vector<2x1x32xf32>
    %418 = vector.shape_cast %417 : vector<2x1x32xf32> to vector<2x32xf32>
    %419 = vector.shape_cast %391 : vector<2x32xf32> to vector<2x1x32xf32>
    tpu.vector_store %arg8[%c0_98, %c5_99, %c0_100], %419 {strides = array<i32>} : memref<2x8x32xf32, #tpu.memory_space<vmem>>, vector<2x1x32xf32>,
    %c0_101 = arith.constant 0 : index
    %c2_102 = arith.constant 2 : index
    %c0_103 = arith.constant 0 : index
    %420 = vector.load %arg9[%c0_101, %c2_102, %c0_103] : memref<2x8x32xf32, #tpu.memory_space<vmem>>, vector<2x1x32xf32>
    %421 = vector.shape_cast %420 : vector<2x1x32xf32> to vector<2x32xf32>
    %422 = vector.shape_cast %416 : vector<2x32xf32> to vector<2x1x32xf32>
    tpu.vector_store %arg9[%c0_101, %c2_102, %c0_103], %422 {strides = array<i32>} : memref<2x8x32xf32, #tpu.memory_space<vmem>>, vector<2x1x32xf32>,
    %423 = vector.extract_strided_slice %11 {offsets = [0, 6, 0], sizes = [2, 1, 128], strides = [1, 1, 1]} : vector<2x8x128xf32> to vector<2x1x128xf32>
    %424 = vector.shape_cast %423 : vector<2x1x128xf32> to vector<2x128xf32>
    %425 = arith.truncf %391 : vector<2x32xf32> to vector<2x32xbf16>
    %cst_104 = arith.constant dense<0.000000e+00> : vector<2x128xf32>
    %426 = tpu.matmul %425, %21, %cst_104 {dimension_numbers = #tpu.dot_dimension_numbers<[1], [0], [0], [1], [0, 0, 1, 1], [], []>} : vector<2x32xbf16>, vector<32x128xbf16>, vector<2x128xf32> -> vector<2x128xf32>
    %427 = arith.addf %424, %426 : vector<2x128xf32>
    %428 = vector.extract_strided_slice %20 {offsets = [0, 1, 0], sizes = [2, 1, 128], strides = [1, 1, 1]} : vector<2x8x128xf32> to vector<2x1x128xf32>
    %429 = vector.shape_cast %428 : vector<2x1x128xf32> to vector<2x128xf32>
    %430 = arith.truncf %416 : vector<2x32xf32> to vector<2x32xbf16>
    %cst_105 = arith.constant dense<0.000000e+00> : vector<2x128xf32>
    %431 = tpu.matmul %430, %22, %cst_105 {dimension_numbers = #tpu.dot_dimension_numbers<[1], [0], [0], [1], [0, 0, 1, 1], [], []>} : vector<2x32xbf16>, vector<32x128xbf16>, vector<2x128xf32> -> vector<2x128xf32>
    %432 = arith.addf %429, %431 : vector<2x128xf32>
    %433 = vector.extract_strided_slice %427 {offsets = [0, 0], sizes = [2, 32], strides = [1, 1]} : vector<2x128xf32> to vector<2x32xf32>
    %434 = arith.negf %433 : vector<2x32xf32>
    %435 = math.exp %434 : vector<2x32xf32>
    %cst_106 = arith.constant 1.000000e+00 : f32
    %436 = vector.broadcast %cst_106 : f32 to vector<2x32xf32>
    %437 = arith.addf %436, %435 : vector<2x32xf32>
    %438 = arith.divf %436, %437 : vector<2x32xf32>
    %439 = vector.extract_strided_slice %427 {offsets = [0, 32], sizes = [2, 32], strides = [1, 1]} : vector<2x128xf32> to vector<2x32xf32>
    %440 = arith.negf %439 : vector<2x32xf32>
    %441 = math.exp %440 : vector<2x32xf32>
    %cst_107 = arith.constant 1.000000e+00 : f32
    %442 = vector.broadcast %cst_107 : f32 to vector<2x32xf32>
    %443 = arith.addf %442, %441 : vector<2x32xf32>
    %444 = arith.divf %442, %443 : vector<2x32xf32>
    %445 = vector.extract_strided_slice %427 {offsets = [0, 64], sizes = [2, 32], strides = [1, 1]} : vector<2x128xf32> to vector<2x32xf32>
    %446 = math.tanh %445 : vector<2x32xf32>
    %447 = vector.extract_strided_slice %427 {offsets = [0, 96], sizes = [2, 32], strides = [1, 1]} : vector<2x128xf32> to vector<2x32xf32>
    %448 = arith.negf %447 : vector<2x32xf32>
    %449 = math.exp %448 : vector<2x32xf32>
    %cst_108 = arith.constant 1.000000e+00 : f32
    %450 = vector.broadcast %cst_108 : f32 to vector<2x32xf32>
    %451 = arith.addf %450, %449 : vector<2x32xf32>
    %452 = arith.divf %450, %451 : vector<2x32xf32>
    %453 = arith.mulf %444, %389 : vector<2x32xf32>
    %454 = arith.mulf %438, %446 : vector<2x32xf32>
    %455 = arith.addf %453, %454 : vector<2x32xf32>
    %456 = math.tanh %455 : vector<2x32xf32>
    %457 = arith.mulf %452, %456 : vector<2x32xf32>
    %458 = vector.extract_strided_slice %432 {offsets = [0, 0], sizes = [2, 32], strides = [1, 1]} : vector<2x128xf32> to vector<2x32xf32>
    %459 = arith.negf %458 : vector<2x32xf32>
    %460 = math.exp %459 : vector<2x32xf32>
    %cst_109 = arith.constant 1.000000e+00 : f32
    %461 = vector.broadcast %cst_109 : f32 to vector<2x32xf32>
    %462 = arith.addf %461, %460 : vector<2x32xf32>
    %463 = arith.divf %461, %462 : vector<2x32xf32>
    %464 = vector.extract_strided_slice %432 {offsets = [0, 32], sizes = [2, 32], strides = [1, 1]} : vector<2x128xf32> to vector<2x32xf32>
    %465 = arith.negf %464 : vector<2x32xf32>
    %466 = math.exp %465 : vector<2x32xf32>
    %cst_110 = arith.constant 1.000000e+00 : f32
    %467 = vector.broadcast %cst_110 : f32 to vector<2x32xf32>
    %468 = arith.addf %467, %466 : vector<2x32xf32>
    %469 = arith.divf %467, %468 : vector<2x32xf32>
    %470 = vector.extract_strided_slice %432 {offsets = [0, 64], sizes = [2, 32], strides = [1, 1]} : vector<2x128xf32> to vector<2x32xf32>
    %471 = math.tanh %470 : vector<2x32xf32>
    %472 = vector.extract_strided_slice %432 {offsets = [0, 96], sizes = [2, 32], strides = [1, 1]} : vector<2x128xf32> to vector<2x32xf32>
    %473 = arith.negf %472 : vector<2x32xf32>
    %474 = math.exp %473 : vector<2x32xf32>
    %cst_111 = arith.constant 1.000000e+00 : f32
    %475 = vector.broadcast %cst_111 : f32 to vector<2x32xf32>
    %476 = arith.addf %475, %474 : vector<2x32xf32>
    %477 = arith.divf %475, %476 : vector<2x32xf32>
    %478 = arith.mulf %469, %414 : vector<2x32xf32>
    %479 = arith.mulf %463, %471 : vector<2x32xf32>
    %480 = arith.addf %478, %479 : vector<2x32xf32>
    %481 = math.tanh %480 : vector<2x32xf32>
    %482 = arith.mulf %477, %481 : vector<2x32xf32>
    %c0_112 = arith.constant 0 : index
    %c6_113 = arith.constant 6 : index
    %c0_114 = arith.constant 0 : index
    %483 = vector.load %arg8[%c0_112, %c6_113, %c0_114] : memref<2x8x32xf32, #tpu.memory_space<vmem>>, vector<2x1x32xf32>
    %484 = vector.shape_cast %483 : vector<2x1x32xf32> to vector<2x32xf32>
    %485 = vector.shape_cast %457 : vector<2x32xf32> to vector<2x1x32xf32>
    tpu.vector_store %arg8[%c0_112, %c6_113, %c0_114], %485 {strides = array<i32>} : memref<2x8x32xf32, #tpu.memory_space<vmem>>, vector<2x1x32xf32>,
    %c0_115 = arith.constant 0 : index
    %c1_116 = arith.constant 1 : index
    %c0_117 = arith.constant 0 : index
    %486 = vector.load %arg9[%c0_115, %c1_116, %c0_117] : memref<2x8x32xf32, #tpu.memory_space<vmem>>, vector<2x1x32xf32>
    %487 = vector.shape_cast %486 : vector<2x1x32xf32> to vector<2x32xf32>
    %488 = vector.shape_cast %482 : vector<2x32xf32> to vector<2x1x32xf32>
    tpu.vector_store %arg9[%c0_115, %c1_116, %c0_117], %488 {strides = array<i32>} : memref<2x8x32xf32, #tpu.memory_space<vmem>>, vector<2x1x32xf32>,
    %489 = vector.extract_strided_slice %11 {offsets = [0, 7, 0], sizes = [2, 1, 128], strides = [1, 1, 1]} : vector<2x8x128xf32> to vector<2x1x128xf32>
    %490 = vector.shape_cast %489 : vector<2x1x128xf32> to vector<2x128xf32>
    %491 = arith.truncf %457 : vector<2x32xf32> to vector<2x32xbf16>
    %cst_118 = arith.constant dense<0.000000e+00> : vector<2x128xf32>
    %492 = tpu.matmul %491, %21, %cst_118 {dimension_numbers = #tpu.dot_dimension_numbers<[1], [0], [0], [1], [0, 0, 1, 1], [], []>} : vector<2x32xbf16>, vector<32x128xbf16>, vector<2x128xf32> -> vector<2x128xf32>
    %493 = arith.addf %490, %492 : vector<2x128xf32>
    %494 = vector.extract_strided_slice %20 {offsets = [0, 0, 0], sizes = [2, 1, 128], strides = [1, 1, 1]} : vector<2x8x128xf32> to vector<2x1x128xf32>
    %495 = vector.shape_cast %494 : vector<2x1x128xf32> to vector<2x128xf32>
    %496 = arith.truncf %482 : vector<2x32xf32> to vector<2x32xbf16>
    %cst_119 = arith.constant dense<0.000000e+00> : vector<2x128xf32>
    %497 = tpu.matmul %496, %22, %cst_119 {dimension_numbers = #tpu.dot_dimension_numbers<[1], [0], [0], [1], [0, 0, 1, 1], [], []>} : vector<2x32xbf16>, vector<32x128xbf16>, vector<2x128xf32> -> vector<2x128xf32>
    %498 = arith.addf %495, %497 : vector<2x128xf32>
    %499 = vector.extract_strided_slice %493 {offsets = [0, 0], sizes = [2, 32], strides = [1, 1]} : vector<2x128xf32> to vector<2x32xf32>
    %500 = arith.negf %499 : vector<2x32xf32>
    %501 = math.exp %500 : vector<2x32xf32>
    %cst_120 = arith.constant 1.000000e+00 : f32
    %502 = vector.broadcast %cst_120 : f32 to vector<2x32xf32>
    %503 = arith.addf %502, %501 : vector<2x32xf32>
    %504 = arith.divf %502, %503 : vector<2x32xf32>
    %505 = vector.extract_strided_slice %493 {offsets = [0, 32], sizes = [2, 32], strides = [1, 1]} : vector<2x128xf32> to vector<2x32xf32>
    %506 = arith.negf %505 : vector<2x32xf32>
    %507 = math.exp %506 : vector<2x32xf32>
    %cst_121 = arith.constant 1.000000e+00 : f32
    %508 = vector.broadcast %cst_121 : f32 to vector<2x32xf32>
    %509 = arith.addf %508, %507 : vector<2x32xf32>
    %510 = arith.divf %508, %509 : vector<2x32xf32>
    %511 = vector.extract_strided_slice %493 {offsets = [0, 64], sizes = [2, 32], strides = [1, 1]} : vector<2x128xf32> to vector<2x32xf32>
    %512 = math.tanh %511 : vector<2x32xf32>
    %513 = vector.extract_strided_slice %493 {offsets = [0, 96], sizes = [2, 32], strides = [1, 1]} : vector<2x128xf32> to vector<2x32xf32>
    %514 = arith.negf %513 : vector<2x32xf32>
    %515 = math.exp %514 : vector<2x32xf32>
    %cst_122 = arith.constant 1.000000e+00 : f32
    %516 = vector.broadcast %cst_122 : f32 to vector<2x32xf32>
    %517 = arith.addf %516, %515 : vector<2x32xf32>
    %518 = arith.divf %516, %517 : vector<2x32xf32>
    %519 = arith.mulf %510, %455 : vector<2x32xf32>
    %520 = arith.mulf %504, %512 : vector<2x32xf32>
    %521 = arith.addf %519, %520 : vector<2x32xf32>
    %522 = math.tanh %521 : vector<2x32xf32>
    %523 = arith.mulf %518, %522 : vector<2x32xf32>
    %524 = vector.extract_strided_slice %498 {offsets = [0, 0], sizes = [2, 32], strides = [1, 1]} : vector<2x128xf32> to vector<2x32xf32>
    %525 = arith.negf %524 : vector<2x32xf32>
    %526 = math.exp %525 : vector<2x32xf32>
    %cst_123 = arith.constant 1.000000e+00 : f32
    %527 = vector.broadcast %cst_123 : f32 to vector<2x32xf32>
    %528 = arith.addf %527, %526 : vector<2x32xf32>
    %529 = arith.divf %527, %528 : vector<2x32xf32>
    %530 = vector.extract_strided_slice %498 {offsets = [0, 32], sizes = [2, 32], strides = [1, 1]} : vector<2x128xf32> to vector<2x32xf32>
    %531 = arith.negf %530 : vector<2x32xf32>
    %532 = math.exp %531 : vector<2x32xf32>
    %cst_124 = arith.constant 1.000000e+00 : f32
    %533 = vector.broadcast %cst_124 : f32 to vector<2x32xf32>
    %534 = arith.addf %533, %532 : vector<2x32xf32>
    %535 = arith.divf %533, %534 : vector<2x32xf32>
    %536 = vector.extract_strided_slice %498 {offsets = [0, 64], sizes = [2, 32], strides = [1, 1]} : vector<2x128xf32> to vector<2x32xf32>
    %537 = math.tanh %536 : vector<2x32xf32>
    %538 = vector.extract_strided_slice %498 {offsets = [0, 96], sizes = [2, 32], strides = [1, 1]} : vector<2x128xf32> to vector<2x32xf32>
    %539 = arith.negf %538 : vector<2x32xf32>
    %540 = math.exp %539 : vector<2x32xf32>
    %cst_125 = arith.constant 1.000000e+00 : f32
    %541 = vector.broadcast %cst_125 : f32 to vector<2x32xf32>
    %542 = arith.addf %541, %540 : vector<2x32xf32>
    %543 = arith.divf %541, %542 : vector<2x32xf32>
    %544 = arith.mulf %535, %480 : vector<2x32xf32>
    %545 = arith.mulf %529, %537 : vector<2x32xf32>
    %546 = arith.addf %544, %545 : vector<2x32xf32>
    %547 = math.tanh %546 : vector<2x32xf32>
    %548 = arith.mulf %543, %547 : vector<2x32xf32>
    %c0_126 = arith.constant 0 : index
    %c7_127 = arith.constant 7 : index
    %c0_128 = arith.constant 0 : index
    %549 = vector.load %arg8[%c0_126, %c7_127, %c0_128] : memref<2x8x32xf32, #tpu.memory_space<vmem>>, vector<2x1x32xf32>
    %550 = vector.shape_cast %549 : vector<2x1x32xf32> to vector<2x32xf32>
    %551 = vector.shape_cast %523 : vector<2x32xf32> to vector<2x1x32xf32>
    tpu.vector_store %arg8[%c0_126, %c7_127, %c0_128], %551 {strides = array<i32>} : memref<2x8x32xf32, #tpu.memory_space<vmem>>, vector<2x1x32xf32>,
    %c0_129 = arith.constant 0 : index
    %c0_130 = arith.constant 0 : index
    %c0_131 = arith.constant 0 : index
    %552 = vector.load %arg9[%c0_129, %c0_130, %c0_131] : memref<2x8x32xf32, #tpu.memory_space<vmem>>, vector<2x1x32xf32>
    %553 = vector.shape_cast %552 : vector<2x1x32xf32> to vector<2x32xf32>
    %554 = vector.shape_cast %548 : vector<2x32xf32> to vector<2x1x32xf32>
    tpu.vector_store %arg9[%c0_129, %c0_130, %c0_131], %554 {strides = array<i32>} : memref<2x8x32xf32, #tpu.memory_space<vmem>>, vector<2x1x32xf32>,
    %c0_132 = arith.constant 0 : index
    %c0_133 = arith.constant 0 : index
    %555 = vector.load %arg10[%c0_132, %c0_133] : memref<2x32xf32, #tpu.memory_space<vmem>>, vector<2x32xf32>
    tpu.vector_store %arg10[%c0_132, %c0_133], %523 {strides = array<i32>} : memref<2x32xf32, #tpu.memory_space<vmem>>, vector<2x32xf32>,
    %c0_134 = arith.constant 0 : index
    %c0_135 = arith.constant 0 : index
    %556 = vector.load %arg11[%c0_134, %c0_135] : memref<2x32xf32, #tpu.memory_space<vmem>>, vector<2x32xf32>
    tpu.vector_store %arg11[%c0_134, %c0_135], %521 {strides = array<i32>} : memref<2x32xf32, #tpu.memory_space<vmem>>, vector<2x32xf32>,
    %c0_136 = arith.constant 0 : index
    %c0_137 = arith.constant 0 : index
    %557 = vector.load %arg12[%c0_136, %c0_137] : memref<2x32xf32, #tpu.memory_space<vmem>>, vector<2x32xf32>
    tpu.vector_store %arg12[%c0_136, %c0_137], %548 {strides = array<i32>} : memref<2x32xf32, #tpu.memory_space<vmem>>, vector<2x32xf32>,
    %c0_138 = arith.constant 0 : index
    %c0_139 = arith.constant 0 : index
    %558 = vector.load %arg13[%c0_138, %c0_139] : memref<2x32xf32, #tpu.memory_space<vmem>>, vector<2x32xf32>
    tpu.vector_store %arg13[%c0_138, %c0_139], %546 {strides = array<i32>} : memref<2x32xf32, #tpu.memory_space<vmem>>, vector<2x32xf32>,
    return
  }
  func.func @transform_0(%arg0: i32) -> (i32, i32, i32) {
    %c0_i32 = arith.constant 0 : i32
    %c0_i32_0 = arith.constant 0 : i32
    %c0_i32_1 = arith.constant 0 : i32
    return %c0_i32, %arg0, %c0_i32_0 : i32, i32, i32
  }
  func.func @transform_1(%arg0: i32) -> (i32, i32) {
    %c0_i32 = arith.constant 0 : i32
    %c0_i32_0 = arith.constant 0 : i32
    %c0_i32_1 = arith.constant 0 : i32
    return %c0_i32, %c0_i32_0 : i32, i32
  }
  func.func @transform_2(%arg0: i32) -> (i32, i32) {
    %c0_i32 = arith.constant 0 : i32
    %c0_i32_0 = arith.constant 0 : i32
    %c0_i32_1 = arith.constant 0 : i32
    return %c0_i32, %c0_i32_0 : i32, i32
  }
  func.func @transform_3(%arg0: i32) -> (i32, i32) {
    %c0_i32 = arith.constant 0 : i32
    %c0_i32_0 = arith.constant 0 : i32
    %c0_i32_1 = arith.constant 0 : i32
    return %c0_i32, %c0_i32_0 : i32, i32
  }
  func.func @transform_4(%arg0: i32) -> (i32, i32) {
    %c0_i32 = arith.constant 0 : i32
    %c0_i32_0 = arith.constant 0 : i32
    %c0_i32_1 = arith.constant 0 : i32
    return %c0_i32, %c0_i32_0 : i32, i32
  }
  func.func @transform_5(%arg0: i32) -> (i32, i32) {
    %c0_i32 = arith.constant 0 : i32
    %c0_i32_0 = arith.constant 0 : i32
    %c0_i32_1 = arith.constant 0 : i32
    return %c0_i32, %c0_i32_0 : i32, i32
  }
  func.func @transform_6(%arg0: i32) -> (i32, i32) {
    %c0_i32 = arith.constant 0 : i32
    %c0_i32_0 = arith.constant 0 : i32
    %c0_i32_1 = arith.constant 0 : i32
    return %c0_i32, %c0_i32_0 : i32, i32
  }
  func.func @transform_7(%arg0: i32) -> (i32, i32, i32) {
    %c0_i32 = arith.constant 0 : i32
    %c0_i32_0 = arith.constant 0 : i32
    %c0_i32_1 = arith.constant 0 : i32
    return %c0_i32, %arg0, %c0_i32_0 : i32, i32, i32
  }
  func.func @transform_8(%arg0: i32) -> (i32, i32, i32) {
    %c0_i32 = arith.constant 0 : i32
    %0 = arith.subi %c0_i32, %arg0 : i32
    %c0_i32_0 = arith.constant 0 : i32
    %c0_i32_1 = arith.constant 0 : i32
    %c0_i32_2 = arith.constant 0 : i32
    return %c0_i32_0, %0, %c0_i32_1 : i32, i32, i32
  }
}

</mosaic_0001>

<llo_original>
// kernel: tpu_custom_call.1
$region0: #{tpu_custom_call.1}
  #allocation0 [shape = 'u32[]', space=smem, size = 0x4, offset = 0x4, fixed_abs, tag = 'smem constant byte address 0x4 - core index']
  #allocation1 [shape = 'u32[72,128]{1,0:T(1,128)}', space=vmem, size = 0x9000, scoped, tag = 'internal scratch']
  #allocation2 [shape = 'f32[2,32]{1,0:T(2,128)}', space=vmem, size = 0x400, scoped, tag = 'scratch operand']
  #allocation3 [shape = 'f32[2,32]{1,0:T(2,128)}', space=vmem, size = 0x400, scoped, tag = 'scratch operand']
  #allocation4 [shape = 'f32[2,32]{1,0:T(2,128)}', space=vmem, size = 0x400, scoped, tag = 'scratch operand']
  #allocation5 [shape = 'f32[2,32]{1,0:T(2,128)}', space=vmem, size = 0x400, scoped, tag = 'scratch operand']
  %s0 = inlined_call_operand.hbm [shape: f32[2,8,32], index: 0, kind: input, shape index: {}]
  %s1 = inlined_call_operand.hbm [shape: bf16[32,128], index: 1, kind: input, shape index: {}]
  %s2 = inlined_call_operand.hbm [shape: bf16[32,128], index: 2, kind: input, shape index: {}]
  %s3 = inlined_call_operand.vmem [shape: f32[1,128], index: 3, kind: input, shape index: {}]
  %s4 = inlined_call_operand.hbm [shape: bf16[32,128], index: 4, kind: input, shape index: {}]
  %s5 = inlined_call_operand.hbm [shape: bf16[32,128], index: 5, kind: input, shape index: {}]
  %s6 = inlined_call_operand.vmem [shape: f32[1,128], index: 6, kind: input, shape index: {}]
  %s7 = inlined_call_operand.hbm [shape: f32[2,8,32], index: 7, kind: output, shape index: {0}]
  %s8 = inlined_call_operand.hbm [shape: f32[2,8,32], index: 8, kind: output, shape index: {1}]
  %9 = xla_tuple %s7, %s8
  %s10 = sld [smem:[#allocation0]]
  $region70: #{tpu_custom_call.1} parent=0
    _
  %s12 = ssub.s32 1, %s10
  %s13 = scalar_select 0, %s12, %s10
  $region1: #{tpu_custom_call.1} parent=0
    #allocation6 [shape = 'u8[8192]{0}', space=vmem, size = 0x2000, scoped, tag = 'input window, operand 0, single buffered']
    #allocation7 [shape = 's32[1]{0}', space=sflag, size = 0x4, scoped, tag = 'scoped memory for tpu_custom_call.1']
    #allocation8 [shape = 's32[1]{0}', space=sflag, size = 0x4, scoped, tag = 'scoped memory for tpu_custom_call.1']
    #allocation9 [shape = 'u8[8192]{0}', space=vmem, size = 0x2000, scoped, tag = 'input window, operand 1, single buffered']
    #allocation10 [shape = 's32[1]{0}', space=sflag, size = 0x4, scoped, tag = 'scoped memory for tpu_custom_call.1']
    #allocation11 [shape = 'u8[8192]{0}', space=vmem, size = 0x2000, scoped, tag = 'input window, operand 2, single buffered']
    #allocation12 [shape = 'u8[8192]{0}', space=vmem, size = 0x2000, scoped, tag = 'input window, operand 4, single buffered']
    #allocation13 [shape = 's32[1]{0}', space=sflag, size = 0x4, scoped, tag = 'scoped memory for tpu_custom_call.1']
    #allocation14 [shape = 'u8[8192]{0}', space=vmem, size = 0x2000, scoped, tag = 'input window, operand 5, single buffered']
    #allocation15 [shape = 'u8[8192]{0}', space=vmem, size = 0x2000, scoped, tag = 'output window, operand 0, single buffered']
    #allocation16 [shape = 'u8[8192]{0}', space=vmem, size = 0x2000, scoped, tag = 'output window, operand 1, single buffered']
    #allocation17 [shape = 's32[1]{0}', space=sflag, size = 0x4, scoped, tag = 'scoped memory for tpu_custom_call.1']
    %14 = vsyncpa [#allocation7], 0
    %15 = vsyncpa [#allocation10], 0
    %16 = vsyncpa [#allocation13], 0
    %17 = vsyncpa [#allocation8], 0
    %18 = vsyncpa [#allocation17], 0
    // Predicated region
    $region2: #{tpu_custom_call.1} parent=1 // pred_check
      _
    $region3: #{tpu_custom_call.1} parent=1 // pred_check_branch
      %20 = sbr.rel (0) target = $region5
    $region4: #{tpu_custom_call.1} parent=1 // pred_region
      %22 = vsyncadd [#allocation7], 0
      %s23 = sshll.u32 %s0, 4
      %s24 = int_to_ptr.hbm [resolvable:$true] %s23
      %s25 = sshll.u32 [#allocation6], 4
      %s26 = int_to_ptr.vmem [resolvable:$true] %s25
      %31 = dma.hbm_to_vmem [thread:$0]  %s24, 256, %s26, [#allocation7], 128, 128, 8
    $region5: #{tpu_custom_call.1} parent=1 // pred_fallthru
      _
    // Predicated region
    $region6: #{tpu_custom_call.1} parent=1 // pred_check
      _
    $region7: #{tpu_custom_call.1} parent=1 // pred_check_branch
      %33 = sbr.rel (0) target = $region9
    $region8: #{tpu_custom_call.1} parent=1 // pred_region
      %35 = vsyncadd [#allocation10], 0
      %s36 = sshll.u32 %s1, 4
      %s37 = int_to_ptr.hbm [resolvable:$true] %s36
      %s38 = sshll.u32 [#allocation9], 4
      %s39 = int_to_ptr.vmem [resolvable:$true] %s38
      %44 = dma.hbm_to_vmem [thread:$0]  %s37, 256, %s39, [#allocation10], 64, 64, 4
    $region9: #{tpu_custom_call.1} parent=1 // pred_fallthru
      _
    // Predicated region
    $region10: #{tpu_custom_call.1} parent=1 // pred_check
      _
    $region11: #{tpu_custom_call.1} parent=1 // pred_check_branch
      %46 = sbr.rel (0) target = $region13
    $region12: #{tpu_custom_call.1} parent=1 // pred_region
      %48 = vsyncadd [#allocation10], 0
      %s49 = sshll.u32 %s2, 4
      %s50 = int_to_ptr.hbm [resolvable:$true] %s49
      %s51 = sshll.u32 [#allocation11], 4
      %s52 = int_to_ptr.vmem [resolvable:$true] %s51
      %57 = dma.hbm_to_vmem [thread:$0]  %s50, 256, %s52, [#allocation10], 64, 64, 4
    $region13: #{tpu_custom_call.1} parent=1 // pred_fallthru
      _
    // Predicated region
    $region14: #{tpu_custom_call.1} parent=1 // pred_check
      _
    $region15: #{tpu_custom_call.1} parent=1 // pred_check_branch
      %59 = sbr.rel (0) target = $region17
    $region16: #{tpu_custom_call.1} parent=1 // pred_region
      _
    $region17: #{tpu_custom_call.1} parent=1 // pred_fallthru
      _
    // Predicated region
    $region18: #{tpu_custom_call.1} parent=1 // pred_check
      _
    $region19: #{tpu_custom_call.1} parent=1 // pred_check_branch
      %61 = sbr.rel (0) target = $region21
    $region20: #{tpu_custom_call.1} parent=1 // pred_region
      %63 = vsyncadd [#allocation13], 0
      %s64 = sshll.u32 %s4, 4
      %s65 = int_to_ptr.hbm [resolvable:$true] %s64
      %s66 = sshll.u32 [#allocation12], 4
      %s67 = int_to_ptr.vmem [resolvable:$true] %s66
      %72 = dma.hbm_to_vmem [thread:$0]  %s65, 256, %s67, [#allocation13], 64, 64, 4
    $region21: #{tpu_custom_call.1} parent=1 // pred_fallthru
      _
    // Predicated region
    $region22: #{tpu_custom_call.1} parent=1 // pred_check
      _
    $region23: #{tpu_custom_call.1} parent=1 // pred_check_branch
      %74 = sbr.rel (0) target = $region25
    $region24: #{tpu_custom_call.1} parent=1 // pred_region
      %76 = vsyncadd [#allocation13], 0
      %s77 = sshll.u32 %s5, 4
      %s78 = int_to_ptr.hbm [resolvable:$true] %s77
      %s79 = sshll.u32 [#allocation14], 4
      %s80 = int_to_ptr.vmem [resolvable:$true] %s79
      %85 = dma.hbm_to_vmem [thread:$0]  %s78, 256, %s80, [#allocation13], 64, 64, 4
    $region25: #{tpu_custom_call.1} parent=1 // pred_fallthru
      _
    // Predicated region
    $region26: #{tpu_custom_call.1} parent=1 // pred_check
      _
    $region27: #{tpu_custom_call.1} parent=1 // pred_check_branch
      %87 = sbr.rel (0) target = $region29
    $region28: #{tpu_custom_call.1} parent=1 // pred_region
      _
    $region29: #{tpu_custom_call.1} parent=1 // pred_fallthru
      _
    // Predicated region
    $region30: #{tpu_custom_call.1} parent=1 // pred_check
      _
    $region31: #{tpu_custom_call.1} parent=1 // pred_check_branch
      %89 = sbr.rel (0) target = $region33
    $region32: #{tpu_custom_call.1} parent=1 // pred_region
      %91 = dma.done [#allocation7], 256
    $region33: #{tpu_custom_call.1} parent=1 // pred_fallthru
      _
    // Predicated region
    $region34: #{tpu_custom_call.1} parent=1 // pred_check
      _
    $region35: #{tpu_custom_call.1} parent=1 // pred_check_branch
      %93 = sbr.rel (0) target = $region37
    $region36: #{tpu_custom_call.1} parent=1 // pred_region
      %95 = dma.done [#allocation10], 256
    $region37: #{tpu_custom_call.1} parent=1 // pred_fallthru
      _
    // Predicated region
    $region38: #{tpu_custom_call.1} parent=1 // pred_check
      _
    $region39: #{tpu_custom_call.1} parent=1 // pred_check_branch
      %97 = sbr.rel (0) target = $region41
    $region40: #{tpu_custom_call.1} parent=1 // pred_region
      %99 = dma.done [#allocation10], 256
    $region41: #{tpu_custom_call.1} parent=1 // pred_fallthru
      _
    // Predicated region
    $region42: #{tpu_custom_call.1} parent=1 // pred_check
      _
    $region43: #{tpu_custom_call.1} parent=1 // pred_check_branch
      %101 = sbr.rel (0) target = $region45
    $region44: #{tpu_custom_call.1} parent=1 // pred_region
      %103 = dma.done [#allocation13], 256
    $region45: #{tpu_custom_call.1} parent=1 // pred_fallthru
      _
    // Predicated region
    $region46: #{tpu_custom_call.1} parent=1 // pred_check
      _
    $region47: #{tpu_custom_call.1} parent=1 // pred_check_branch
      %105 = sbr.rel (0) target = $region49
    $region48: #{tpu_custom_call.1} parent=1 // pred_region
      %107 = dma.done [#allocation13], 256
    $region49: #{tpu_custom_call.1} parent=1 // pred_fallthru
      _
    %s108 = ssub.s32 0, 0
    %p110 = scmp.eq.s32.totalorder 0, 0
    // Predicated region
    $region50: #{tpu_custom_call.1} parent=1 // pred_check
      %p111 = pneg %p110
    $region51: #{tpu_custom_call.1} parent=1 // pred_check_branch
      %113 = sbr.rel (%p111) target = $region53
    $region52: #{tpu_custom_call.1} parent=1 // pred_region
      %vm114 = vcmask 254976
      %115 = vst.msk [vmem:[#allocation2] sm:$0x3] %vm114, 0.0
      %116 = vst.msk [vmem:[#allocation3] sm:$0x3] %vm114, 0.0
      %117 = vst.msk [vmem:[#allocation4] sm:$0x3] %vm114, 0.0
      %118 = vst.msk [vmem:[#allocation5] sm:$0x3] %vm114, 0.0
    $region53: #{tpu_custom_call.1} parent=1 // pred_fallthru
      _
    %v119 = vld [vmem:[#allocation6] sm:$0xff]
    %v120 = vld [vmem:[#allocation6 + $0x8] sm:$0xff]
    %v121 = vpack.c.bf16 %v119, %v119
    %v122 = vpack.c.bf16 %v120, %v120
    %v123 = vld [vmem:[#allocation9] sm:$0xf]
    %v124 = vld [vmem:[#allocation9 + $0x4] sm:$0xf]
    %v125 = vld [vmem:[#allocation9 + $0x8] sm:$0xf]
    %v126 = vld [vmem:[#allocation9 + $0xc] sm:$0xf]
    %v127 = vld [vmem:[%s3] sm:$0x1]
    %v129 = vperm.slane %v127, 0
    %v133 = vunpack.c.l.b16 %v121
    %v134 = vunpack.c.l.b16 %v122
    %v135 = vpack.c.b16 %v134, %v133
    %v140 = vunpack.c.l.b16 %v123
    %v141 = vunpack.c.l.b16 %v124
    %v142 = vunpack.c.l.b16 %v125
    %v143 = vunpack.c.l.b16 %v126
    %v144 = vpack.c.b16 %v141, %v140
    %v145 = vpack.c.b16 %v143, %v142
    %vm148 = vcmask 261120
    %v150 = vsel %vm148, %v135, 0
    %152 = vmatpush.bf16.msra.mxu0 0
    %153 = vmatpush.bf16.msra.mxu0 0
    %154 = vmatpush.bf16.msra.mxu0 0
    %155 = vmatpush.bf16.msra.mxu0 0
    %156 = vmatpush.bf16.msra.mxu0 0
    %157 = vmatpush.bf16.msra.mxu0 0
    %158 = vmatpush.bf16.msra.mxu0 %v145
    %159 = vmatpush.bf16.msra.mxu0 %v144
    %160 = vmatmul.bf16.gmra.mxu0 %v150
    %v161 = vpop.f32.mrf.mxu0
    %v162 = vadd.f32 %v129, %v161
    %v163 = vpop.f32.mrf.mxu0
    %v164 = vadd.f32 %v129, %v163
    %165 = vdwg.mxu0
    %v166 = vld [vmem:[#allocation12] sm:$0xf]
    %v167 = vld [vmem:[#allocation12 + $0x4] sm:$0xf]
    %v168 = vld [vmem:[#allocation12 + $0x8] sm:$0xf]
    %v169 = vld [vmem:[#allocation12 + $0xc] sm:$0xf]
    %v170 = vld [vmem:[%s6] sm:$0x1]
    %v172 = vperm.slane %v170, 0
    %v178 = vunpack.c.l.b16 %v166
    %v179 = vunpack.c.l.b16 %v167
    %v180 = vunpack.c.l.b16 %v168
    %v181 = vunpack.c.l.b16 %v169
    %v182 = vpack.c.b16 %v179, %v178
    %v183 = vpack.c.b16 %v181, %v180
    %186 = vmatpush.bf16.msra.mxu0 0
    %187 = vmatpush.bf16.msra.mxu0 0
    %188 = vmatpush.bf16.msra.mxu0 0
    %189 = vmatpush.bf16.msra.mxu0 0
    %190 = vmatpush.bf16.msra.mxu0 0
    %191 = vmatpush.bf16.msra.mxu0 0
    %192 = vmatpush.bf16.msra.mxu0 %v183
    %193 = vmatpush.bf16.msra.mxu0 %v182
    %194 = vmatmul.bf16.gmra.mxu0 %v150
    %v195 = vpop.f32.mrf.mxu0
    %v196 = vadd.f32 %v172, %v195
    %v197 = vpop.f32.mrf.mxu0
    %v198 = vadd.f32 %v172, %v197
    %199 = vdwg.mxu0
    %v200 = vld [vmem:[#allocation11] sm:$0xf]
    %v201 = vld [vmem:[#allocation11 + $0x4] sm:$0xf]
    %v202 = vld [vmem:[#allocation11 + $0x8] sm:$0xf]
    %v203 = vld [vmem:[#allocation11 + $0xc] sm:$0xf]
    %v204 = vld [vmem:[#allocation14] sm:$0xf]
    %v205 = vld [vmem:[#allocation14 + $0x4] sm:$0xf]
    %v206 = vld [vmem:[#allocation14 + $0x8] sm:$0xf]
    %v207 = vld [vmem:[#allocation14 + $0xc] sm:$0xf]
    %v208 = vld [vmem:[#allocation2] sm:$0x3]
    %v209 = vld [vmem:[#allocation3] sm:$0x3]
    %v210 = vld [vmem:[#allocation4] sm:$0x3]
    %v211 = vld [vmem:[#allocation5] sm:$0x3]
    %v212 = vpack.c.bf16 %v208, %v208
    %v217 = vunpack.c.l.b16 %v200
    %v218 = vunpack.c.l.b16 %v201
    %v219 = vunpack.c.l.b16 %v202
    %v220 = vunpack.c.l.b16 %v203
    %v221 = vpack.c.b16 %v218, %v217
    %v222 = vpack.c.b16 %v220, %v219
    %v226 = vsel %vm148, %v212, 0
    %228 = vmatpush.bf16.msra.mxu0 0
    %229 = vmatpush.bf16.msra.mxu0 0
    %230 = vmatpush.bf16.msra.mxu0 0
    %231 = vmatpush.bf16.msra.mxu0 0
    %232 = vmatpush.bf16.msra.mxu0 0
    %233 = vmatpush.bf16.msra.mxu0 0
    %234 = vmatpush.bf16.msra.mxu0 %v222
    %235 = vmatpush.bf16.msra.mxu0 %v221
    %236 = vmatmul.bf16.gmra.mxu0 %v226
    %v237 = vpop.f32.mrf.mxu0
    %v238 = vadd.f32 0.0, %v237
    %v239 = vpop.f32.mrf.mxu0
    %240 = vdwg.mxu0
    %v242 = vrot.slane %v238, 1
    %v245 = vadd.f32 %v162, %v238
    %v246 = vadd.f32 %v164, %v242
    %v247 = vpack.c.bf16 %v210, %v210
    %v252 = vunpack.c.l.b16 %v204
    %v253 = vunpack.c.l.b16 %v205
    %v254 = vunpack.c.l.b16 %v206
    %v255 = vunpack.c.l.b16 %v207
    %v256 = vpack.c.b16 %v253, %v252
    %v257 = vpack.c.b16 %v255, %v254
    %v261 = vsel %vm148, %v247, 0
    %263 = vmatpush.bf16.msra.mxu0 0
    %264 = vmatpush.bf16.msra.mxu0 0
    %265 = vmatpush.bf16.msra.mxu0 0
    %266 = vmatpush.bf16.msra.mxu0 0
    %267 = vmatpush.bf16.msra.mxu0 0
    %268 = vmatpush.bf16.msra.mxu0 0
    %269 = vmatpush.bf16.msra.mxu0 %v257
    %270 = vmatpush.bf16.msra.mxu0 %v256
    %271 = vmatmul.bf16.gmra.mxu0 %v261
    %v272 = vpop.f32.mrf.mxu0
    %v273 = vadd.f32 0.0, %v272
    %v274 = vpop.f32.mrf.mxu0
    %275 = vdwg.mxu0
    %v277 = vrot.slane %v273, 1
    %v278 = vrot.slane %v273, 2
    %v281 = vadd.f32 %v196, %v277
    %v282 = vadd.f32 %v198, %v278
    %v283 = vxor.u32 %v245, 2147483648
    %v284 = vxor.u32 %v246, 2147483648
    %v285 = vmul.f32 %v283, 1.442695
    %v286 = vpow.pop %v285
    %v287 = vmul.f32 %v284, 1.442695
    %v288 = vpow.pop %v287
    %v289 = vadd.f32 %v286, 1.0
    %v290 = vadd.f32 %v288, 1.0
    %v291 = vrcp.pop %v289
    %v292 = vmul.f32 %v289, %v291
    %v293 = vsub.f32 1.0, %v292
    %v294 = vmul.f32 %v291, %v293
    %v295 = vadd.f32 %v291, %v294
    %vm296 = vweird.f32 %v289
    %vm297 = vweird.f32 %v291
    %vm298 = vmor %vm296, %vm297
    %v299 = vsel %vm298, %v291, %v295
    %v300 = vand.u32 2147483647, %v289
    %vm301 = vcmp.eq.f32.partialorder %v300, 8.507059e+37
    %v302 = vand.u32 %v289, 2147483648
    %v303 = vor.u32 1.1754944e-38, %v302
    %v304 = vsel %vm301, %v303, %v299
    %v305 = vmul.f32 1.0, %v304
    %v306 = vrcp.pop %v290
    %v307 = vmul.f32 %v290, %v306
    %v308 = vsub.f32 1.0, %v307
    %v309 = vmul.f32 %v306, %v308
    %v310 = vadd.f32 %v306, %v309
    %vm311 = vweird.f32 %v290
    %vm312 = vweird.f32 %v306
    %vm313 = vmor %vm311, %vm312
    %v314 = vsel %vm313, %v306, %v310
    %v315 = vand.u32 2147483647, %v290
    %vm316 = vcmp.eq.f32.partialorder %v315, 8.507059e+37
    %v317 = vand.u32 %v290, 2147483648
    %v318 = vor.u32 1.1754944e-38, %v317
    %v319 = vsel %vm316, %v318, %v314
    %v320 = vmul.f32 1.0, %v319
    %v321 = vtanh.pop %v245
    %v322 = vtanh.pop %v246
    %v324 = vrot.slane %v209, 1
    %325 = vrot.lane.b32.xlu0 %v209, 32
    %v326 = vpop.permute.xlu0 %325
    %327 = vrot.lane.b32.xlu0 %v324, 32
    %v328 = vpop.permute.xlu0 %327
    %v331 = vmul.f32 %v305, %v326
    %v332 = vmul.f32 %v320, %v328
    %335 = vrot.lane.b32.xlu0 %v321, 64
    %v336 = vpop.permute.xlu0 %335
    %337 = vrot.lane.b32.xlu0 %v322, 64
    %v338 = vpop.permute.xlu0 %337
    %v341 = vmul.f32 %v305, %v336
    %v342 = vmul.f32 %v320, %v338
    %345 = vrot.lane.b32.xlu0 %v341, 32
    %v346 = vpop.permute.xlu0 %345
    %347 = vrot.lane.b32.xlu0 %v342, 32
    %v348 = vpop.permute.xlu0 %347
    %v351 = vadd.f32 %v331, %v346
    %v352 = vadd.f32 %v332, %v348
    %v353 = vtanh.pop %v351
    %v354 = vtanh.pop %v352
    %357 = vrot.lane.b32.xlu0 %v353, 64
    %v358 = vpop.permute.xlu0 %357
    %359 = vrot.lane.b32.xlu0 %v354, 64
    %v360 = vpop.permute.xlu0 %359
    %v363 = vmul.f32 %v305, %v358
    %v364 = vmul.f32 %v320, %v360
    %v365 = vxor.u32 %v281, 2147483648
    %v366 = vxor.u32 %v282, 2147483648
    %v367 = vmul.f32 %v365, 1.442695
    %v368 = vpow.pop %v367
    %v369 = vmul.f32 %v366, 1.442695
    %v370 = vpow.pop %v369
    %v371 = vadd.f32 %v368, 1.0
    %v372 = vadd.f32 %v370, 1.0
    %v373 = vrcp.pop %v371
    %v374 = vmul.f32 %v371, %v373
    %v375 = vsub.f32 1.0, %v374
    %v376 = vmul.f32 %v373, %v375
    %v377 = vadd.f32 %v373, %v376
    %vm378 = vweird.f32 %v371
    %vm379 = vweird.f32 %v373
    %vm380 = vmor %vm378, %vm379
    %v381 = vsel %vm380, %v373, %v377
    %v382 = vand.u32 2147483647, %v371
    %vm383 = vcmp.eq.f32.partialorder %v382, 8.507059e+37
    %v384 = vand.u32 %v371, 2147483648
    %v385 = vor.u32 1.1754944e-38, %v384
    %v386 = vsel %vm383, %v385, %v381
    %v387 = vmul.f32 1.0, %v386
    %v388 = vrcp.pop %v372
    %v389 = vmul.f32 %v372, %v388
    %v390 = vsub.f32 1.0, %v389
    %v391 = vmul.f32 %v388, %v390
    %v392 = vadd.f32 %v388, %v391
    %vm393 = vweird.f32 %v372
    %vm394 = vweird.f32 %v388
    %vm395 = vmor %vm393, %vm394
    %v396 = vsel %vm395, %v388, %v392
    %v397 = vand.u32 2147483647, %v372
    %vm398 = vcmp.eq.f32.partialorder %v397, 8.507059e+37
    %v399 = vand.u32 %v372, 2147483648
    %v400 = vor.u32 1.1754944e-38, %v399
    %v401 = vsel %vm398, %v400, %v396
    %v402 = vmul.f32 1.0, %v401
    %v403 = vtanh.pop %v281
    %v404 = vtanh.pop %v282
    %v406 = vrot.slane %v211, 1
    %v407 = vrot.slane %v211, 2
    %408 = vrot.lane.b32.xlu0 %v406, 32
    %v409 = vpop.permute.xlu0 %408
    %410 = vrot.lane.b32.xlu0 %v407, 32
    %v411 = vpop.permute.xlu0 %410
    %v414 = vmul.f32 %v387, %v409
    %v415 = vmul.f32 %v402, %v411
    %418 = vrot.lane.b32.xlu0 %v403, 64
    %v419 = vpop.permute.xlu0 %418
    %420 = vrot.lane.b32.xlu0 %v404, 64
    %v421 = vpop.permute.xlu0 %420
    %v424 = vmul.f32 %v387, %v419
    %v425 = vmul.f32 %v402, %v421
    %428 = vrot.lane.b32.xlu0 %v424, 32
    %v429 = vpop.permute.xlu0 %428
    %430 = vrot.lane.b32.xlu0 %v425, 32
    %v431 = vpop.permute.xlu0 %430
    %v434 = vadd.f32 %v414, %v429
    %v435 = vadd.f32 %v415, %v431
    %v436 = vtanh.pop %v434
    %v437 = vtanh.pop %v435
    %440 = vrot.lane.b32.xlu0 %v436, 64
    %v441 = vpop.permute.xlu0 %440
    %442 = vrot.lane.b32.xlu0 %v437, 64
    %v443 = vpop.permute.xlu0 %442
    %v446 = vmul.f32 %v387, %v441
    %v447 = vmul.f32 %v402, %v443
    %450 = vrot.lane.b32.xlu0 %v363, 32
    %v451 = vpop.permute.xlu0 %450
    %452 = vrot.lane.b32.xlu0 %v364, 32
    %v453 = vpop.permute.xlu0 %452
    %vm456 = vcmask 253952
    %457 = vst.msk [vmem:[#allocation15] sm:$0x1] %vm456, %v451
    %458 = vst.msk [vmem:[#allocation15 + $0x8] sm:$0x1] %vm456, %v453
    %461 = vrot.lane.b32.xlu0 %v446, 32
    %v462 = vpop.permute.xlu0 %461
    %463 = vrot.lane.b32.xlu0 %v447, 32
    %v464 = vpop.permute.xlu0 %463
    %vm467 = vcmask 261127
    %468 = vst.msk [vmem:[#allocation16] sm:$0x80] %vm467, %v462
    %469 = vst.msk [vmem:[#allocation16 + $0x8] sm:$0x80] %vm467, %v464
    %v470 = vpack.c.bf16 %v363, %v363
    %v471 = vpack.c.bf16 %v364, %v364
    %v474 = vunpack.c.l.b16 %v470
    %v475 = vunpack.c.l.b16 %v471
    %v476 = vrot.slane %v475, 7
    %vm477 = vcmask 1041409
    %v478 = vsel %vm477, %v476, %v474
    %v479 = vpack.c.b16 %v478, %v478
    %480 = vrot.lane.b32.xlu0 %v479, 32
    %v481 = vpop.permute.xlu0 %480
    %v483 = vsel %vm148, %v481, 0
    %485 = vmatpush.bf16.msra.mxu0 0
    %486 = vmatpush.bf16.msra.mxu0 0
    %487 = vmatpush.bf16.msra.mxu0 0
    %488 = vmatpush.bf16.msra.mxu0 0
    %489 = vmatpush.bf16.msra.mxu0 0
    %490 = vmatpush.bf16.msra.mxu0 0
    %491 = vmatpush.bf16.msra.mxu0 %v222
    %492 = vmatpush.bf16.msra.mxu0 %v221
    %493 = vmatmul.bf16.gmra.mxu0 %v483
    %v494 = vpop.f32.mrf.mxu0
    %v495 = vadd.f32 0.0, %v494
    %v496 = vpop.f32.mrf.mxu0
    %497 = vdwg.mxu0
    %v499 = vrot.slane %v495, 7
    %v502 = vadd.f32 %v162, %v499
    %v503 = vadd.f32 %v164, %v495
    %v504 = vpack.c.bf16 %v446, %v446
    %v505 = vpack.c.bf16 %v447, %v447
    %v508 = vunpack.c.l.b16 %v504
    %v509 = vunpack.c.l.b16 %v505
    %v510 = vrot.slane %v508, 7
    %v511 = vrot.slane %v509, 6
    %v512 = vsel %vm477, %v511, %v510
    %v513 = vpack.c.b16 %v512, %v512
    %514 = vrot.lane.b32.xlu0 %v513, 32
    %v515 = vpop.permute.xlu0 %514
    %v517 = vsel %vm148, %v515, 0
    %519 = vmatpush.bf16.msra.mxu0 0
    %520 = vmatpush.bf16.msra.mxu0 0
    %521 = vmatpush.bf16.msra.mxu0 0
    %522 = vmatpush.bf16.msra.mxu0 0
    %523 = vmatpush.bf16.msra.mxu0 0
    %524 = vmatpush.bf16.msra.mxu0 0
    %525 = vmatpush.bf16.msra.mxu0 %v257
    %526 = vmatpush.bf16.msra.mxu0 %v256
    %527 = vmatmul.bf16.gmra.mxu0 %v517
    %v528 = vpop.f32.mrf.mxu0
    %v529 = vadd.f32 0.0, %v528
    %v530 = vpop.f32.mrf.mxu0
    %531 = vdwg.mxu0
    %v533 = vrot.slane %v529, 2
    %v534 = vrot.slane %v529, 3
    %v537 = vadd.f32 %v196, %v533
    %v538 = vadd.f32 %v198, %v534
    %v539 = vxor.u32 %v502, 2147483648
    %v540 = vxor.u32 %v503, 2147483648
    %v541 = vmul.f32 %v539, 1.442695
    %v542 = vpow.pop %v541
    %v543 = vmul.f32 %v540, 1.442695
    %v544 = vpow.pop %v543
    %v545 = vadd.f32 %v542, 1.0
    %v546 = vadd.f32 %v544, 1.0
    %v547 = vrcp.pop %v545
    %v548 = vmul.f32 %v545, %v547
    %v549 = vsub.f32 1.0, %v548
    %v550 = vmul.f32 %v547, %v549
    %v551 = vadd.f32 %v547, %v550
    %vm552 = vweird.f32 %v545
    %vm553 = vweird.f32 %v547
    %vm554 = vmor %vm552, %vm553
    %v555 = vsel %vm554, %v547, %v551
    %v556 = vand.u32 2147483647, %v545
    %vm557 = vcmp.eq.f32.partialorder %v556, 8.507059e+37
    %v558 = vand.u32 %v545, 2147483648
    %v559 = vor.u32 1.1754944e-38, %v558
    %v560 = vsel %vm557, %v559, %v555
    %v561 = vmul.f32 1.0, %v560
    %v562 = vrcp.pop %v546
    %v563 = vmul.f32 %v546, %v562
    %v564 = vsub.f32 1.0, %v563
    %v565 = vmul.f32 %v562, %v564
    %v566 = vadd.f32 %v562, %v565
    %vm567 = vweird.f32 %v546
    %vm568 = vweird.f32 %v562
    %vm569 = vmor %vm567, %vm568
    %v570 = vsel %vm569, %v562, %v566
    %v571 = vand.u32 2147483647, %v546
    %vm572 = vcmp.eq.f32.partialorder %v571, 8.507059e+37
    %v573 = vand.u32 %v546, 2147483648
    %v574 = vor.u32 1.1754944e-38, %v573
    %v575 = vsel %vm572, %v574, %v570
    %v576 = vmul.f32 1.0, %v575
    %v577 = vtanh.pop %v502
    %v578 = vtanh.pop %v503
    %v581 = vrot.slane %v351, 7
    %v582 = vrot.slane %v352, 7
    %v585 = vmul.f32 %v561, %v581
    %v586 = vmul.f32 %v576, %v582
    %589 = vrot.lane.b32.xlu0 %v577, 64
    %v590 = vpop.permute.xlu0 %589
    %591 = vrot.lane.b32.xlu0 %v578, 64
    %v592 = vpop.permute.xlu0 %591
    %v595 = vmul.f32 %v561, %v590
    %v596 = vmul.f32 %v576, %v592
    %599 = vrot.lane.b32.xlu0 %v595, 32
    %v600 = vpop.permute.xlu0 %599
    %601 = vrot.lane.b32.xlu0 %v596, 32
    %v602 = vpop.permute.xlu0 %601
    %v605 = vadd.f32 %v585, %v600
    %v606 = vadd.f32 %v586, %v602
    %v607 = vtanh.pop %v605
    %v608 = vtanh.pop %v606
    %611 = vrot.lane.b32.xlu0 %v607, 64
    %v612 = vpop.permute.xlu0 %611
    %613 = vrot.lane.b32.xlu0 %v608, 64
    %v614 = vpop.permute.xlu0 %613
    %v617 = vmul.f32 %v561, %v612
    %v618 = vmul.f32 %v576, %v614
    %v619 = vxor.u32 %v537, 2147483648
    %v620 = vxor.u32 %v538, 2147483648
    %v621 = vmul.f32 %v619, 1.442695
    %v622 = vpow.pop %v621
    %v623 = vmul.f32 %v620, 1.442695
    %v624 = vpow.pop %v623
    %v625 = vadd.f32 %v622, 1.0
    %v626 = vadd.f32 %v624, 1.0
    %v627 = vrcp.pop %v625
    %v628 = vmul.f32 %v625, %v627
    %v629 = vsub.f32 1.0, %v628
    %v630 = vmul.f32 %v627, %v629
    %v631 = vadd.f32 %v627, %v630
    %vm632 = vweird.f32 %v625
    %vm633 = vweird.f32 %v627
    %vm634 = vmor %vm632, %vm633
    %v635 = vsel %vm634, %v627, %v631
    %v636 = vand.u32 2147483647, %v625
    %vm637 = vcmp.eq.f32.partialorder %v636, 8.507059e+37
    %v638 = vand.u32 %v625, 2147483648
    %v639 = vor.u32 1.1754944e-38, %v638
    %v640 = vsel %vm637, %v639, %v635
    %v641 = vmul.f32 1.0, %v640
    %v642 = vrcp.pop %v626
    %v643 = vmul.f32 %v626, %v642
    %v644 = vsub.f32 1.0, %v643
    %v645 = vmul.f32 %v642, %v644
    %v646 = vadd.f32 %v642, %v645
    %vm647 = vweird.f32 %v626
    %vm648 = vweird.f32 %v642
    %vm649 = vmor %vm647, %vm648
    %v650 = vsel %vm649, %v642, %v646
    %v651 = vand.u32 2147483647, %v626
    %vm652 = vcmp.eq.f32.partialorder %v651, 8.507059e+37
    %v653 = vand.u32 %v626, 2147483648
    %v654 = vor.u32 1.1754944e-38, %v653
    %v655 = vsel %vm652, %v654, %v650
    %v656 = vmul.f32 1.0, %v655
    %v657 = vtanh.pop %v537
    %v658 = vtanh.pop %v538
    %v661 = vrot.slane %v434, 1
    %v662 = vrot.slane %v435, 1
    %v665 = vmul.f32 %v641, %v661
    %v666 = vmul.f32 %v656, %v662
    %669 = vrot.lane.b32.xlu0 %v657, 64
    %v670 = vpop.permute.xlu0 %669
    %671 = vrot.lane.b32.xlu0 %v658, 64
    %v672 = vpop.permute.xlu0 %671
    %v675 = vmul.f32 %v641, %v670
    %v676 = vmul.f32 %v656, %v672
    %679 = vrot.lane.b32.xlu0 %v675, 32
    %v680 = vpop.permute.xlu0 %679
    %681 = vrot.lane.b32.xlu0 %v676, 32
    %v682 = vpop.permute.xlu0 %681
    %v685 = vadd.f32 %v665, %v680
    %v686 = vadd.f32 %v666, %v682
    %v687 = vtanh.pop %v685
    %v688 = vtanh.pop %v686
    %691 = vrot.lane.b32.xlu0 %v687, 64
    %v692 = vpop.permute.xlu0 %691
    %693 = vrot.lane.b32.xlu0 %v688, 64
    %v694 = vpop.permute.xlu0 %693
    %v697 = vmul.f32 %v641, %v692
    %v698 = vmul.f32 %v656, %v694
    %701 = vrot.lane.b32.xlu0 %v617, 32
    %v702 = vpop.permute.xlu0 %701
    %703 = vrot.lane.b32.xlu0 %v618, 32
    %v704 = vpop.permute.xlu0 %703
    %vm707 = vcmask 254977
    %708 = vst.msk [vmem:[#allocation15] sm:$0x2] %vm707, %v702
    %709 = vst.msk [vmem:[#allocation15 + $0x8] sm:$0x2] %vm707, %v704
    %712 = vrot.lane.b32.xlu0 %v697, 32
    %v713 = vpop.permute.xlu0 %712
    %714 = vrot.lane.b32.xlu0 %v698, 32
    %v715 = vpop.permute.xlu0 %714
    %vm718 = vcmask 260102
    %719 = vst.msk [vmem:[#allocation16] sm:$0x40] %vm718, %v713
    %720 = vst.msk [vmem:[#allocation16 + $0x8] sm:$0x40] %vm718, %v715
    %v721 = vpack.c.bf16 %v617, %v617
    %v722 = vpack.c.bf16 %v618, %v618
    %v725 = vunpack.c.l.b16 %v721
    %v726 = vunpack.c.l.b16 %v722
    %v727 = vrot.slane %v725, 1
    %v728 = vsel %vm477, %v726, %v727
    %v729 = vpack.c.b16 %v728, %v728
    %730 = vrot.lane.b32.xlu0 %v729, 32
    %v731 = vpop.permute.xlu0 %730
    %v733 = vsel %vm148, %v731, 0
    %735 = vmatpush.bf16.msra.mxu0 0
    %736 = vmatpush.bf16.msra.mxu0 0
    %737 = vmatpush.bf16.msra.mxu0 0
    %738 = vmatpush.bf16.msra.mxu0 0
    %739 = vmatpush.bf16.msra.mxu0 0
    %740 = vmatpush.bf16.msra.mxu0 0
    %741 = vmatpush.bf16.msra.mxu0 %v222
    %742 = vmatpush.bf16.msra.mxu0 %v221
    %743 = vmatmul.bf16.gmra.mxu0 %v733
    %v744 = vpop.f32.mrf.mxu0
    %v745 = vadd.f32 0.0, %v744
    %v746 = vpop.f32.mrf.mxu0
    %747 = vdwg.mxu0
    %v749 = vrot.slane %v745, 6
    %v750 = vrot.slane %v745, 7
    %v753 = vadd.f32 %v162, %v749
    %v754 = vadd.f32 %v164, %v750
    %v755 = vpack.c.bf16 %v697, %v697
    %v756 = vpack.c.bf16 %v698, %v698
    %v759 = vunpack.c.l.b16 %v755
    %v760 = vunpack.c.l.b16 %v756
    %v761 = vrot.slane %v759, 6
    %v762 = vrot.slane %v760, 5
    %v763 = vsel %vm477, %v762, %v761
    %v764 = vpack.c.b16 %v763, %v763
    %765 = vrot.lane.b32.xlu0 %v764, 32
    %v766 = vpop.permute.xlu0 %765
    %v768 = vsel %vm148, %v766, 0
    %770 = vmatpush.bf16.msra.mxu0 0
    %771 = vmatpush.bf16.msra.mxu0 0
    %772 = vmatpush.bf16.msra.mxu0 0
    %773 = vmatpush.bf16.msra.mxu0 0
    %774 = vmatpush.bf16.msra.mxu0 0
    %775 = vmatpush.bf16.msra.mxu0 0
    %776 = vmatpush.bf16.msra.mxu0 %v257
    %777 = vmatpush.bf16.msra.mxu0 %v256
    %778 = vmatmul.bf16.gmra.mxu0 %v768
    %v779 = vpop.f32.mrf.mxu0
    %v780 = vadd.f32 0.0, %v779
    %v781 = vpop.f32.mrf.mxu0
    %782 = vdwg.mxu0
    %v784 = vrot.slane %v780, 3
    %v785 = vrot.slane %v780, 4
    %v788 = vadd.f32 %v196, %v784
    %v789 = vadd.f32 %v198, %v785
    %v790 = vxor.u32 %v753, 2147483648
    %v791 = vxor.u32 %v754, 2147483648
    %v792 = vmul.f32 %v790, 1.442695
    %v793 = vpow.pop %v792
    %v794 = vmul.f32 %v791, 1.442695
    %v795 = vpow.pop %v794
    %v796 = vadd.f32 %v793, 1.0
    %v797 = vadd.f32 %v795, 1.0
    %v798 = vrcp.pop %v796
    %v799 = vmul.f32 %v796, %v798
    %v800 = vsub.f32 1.0, %v799
    %v801 = vmul.f32 %v798, %v800
    %v802 = vadd.f32 %v798, %v801
    %vm803 = vweird.f32 %v796
    %vm804 = vweird.f32 %v798
    %vm805 = vmor %vm803, %vm804
    %v806 = vsel %vm805, %v798, %v802
    %v807 = vand.u32 2147483647, %v796
    %vm808 = vcmp.eq.f32.partialorder %v807, 8.507059e+37
    %v809 = vand.u32 %v796, 2147483648
    %v810 = vor.u32 1.1754944e-38, %v809
    %v811 = vsel %vm808, %v810, %v806
    %v812 = vmul.f32 1.0, %v811
    %v813 = vrcp.pop %v797
    %v814 = vmul.f32 %v797, %v813
    %v815 = vsub.f32 1.0, %v814
    %v816 = vmul.f32 %v813, %v815
    %v817 = vadd.f32 %v813, %v816
    %vm818 = vweird.f32 %v797
    %vm819 = vweird.f32 %v813
    %vm820 = vmor %vm818, %vm819
    %v821 = vsel %vm820, %v813, %v817
    %v822 = vand.u32 2147483647, %v797
    %vm823 = vcmp.eq.f32.partialorder %v822, 8.507059e+37
    %v824 = vand.u32 %v797, 2147483648
    %v825 = vor.u32 1.1754944e-38, %v824
    %v826 = vsel %vm823, %v825, %v821
    %v827 = vmul.f32 1.0, %v826
    %v828 = vtanh.pop %v753
    %v829 = vtanh.pop %v754
    %v832 = vrot.slane %v605, 7
    %v833 = vrot.slane %v606, 7
    %v836 = vmul.f32 %v812, %v832
    %v837 = vmul.f32 %v827, %v833
    %840 = vrot.lane.b32.xlu0 %v828, 64
    %v841 = vpop.permute.xlu0 %840
    %842 = vrot.lane.b32.xlu0 %v829, 64
    %v843 = vpop.permute.xlu0 %842
    %v846 = vmul.f32 %v812, %v841
    %v847 = vmul.f32 %v827, %v843
    %850 = vrot.lane.b32.xlu0 %v846, 32
    %v851 = vpop.permute.xlu0 %850
    %852 = vrot.lane.b32.xlu0 %v847, 32
    %v853 = vpop.permute.xlu0 %852
    %v856 = vadd.f32 %v836, %v851
    %v857 = vadd.f32 %v837, %v853
    %v858 = vtanh.pop %v856
    %v859 = vtanh.pop %v857
    %862 = vrot.lane.b32.xlu0 %v858, 64
    %v863 = vpop.permute.xlu0 %862
    %864 = vrot.lane.b32.xlu0 %v859, 64
    %v865 = vpop.permute.xlu0 %864
    %v868 = vmul.f32 %v812, %v863
    %v869 = vmul.f32 %v827, %v865
    %v870 = vxor.u32 %v788, 2147483648
    %v871 = vxor.u32 %v789, 2147483648
    %v872 = vmul.f32 %v870, 1.442695
    %v873 = vpow.pop %v872
    %v874 = vmul.f32 %v871, 1.442695
    %v875 = vpow.pop %v874
    %v876 = vadd.f32 %v873, 1.0
    %v877 = vadd.f32 %v875, 1.0
    %v878 = vrcp.pop %v876
    %v879 = vmul.f32 %v876, %v878
    %v880 = vsub.f32 1.0, %v879
    %v881 = vmul.f32 %v878, %v880
    %v882 = vadd.f32 %v878, %v881
    %vm883 = vweird.f32 %v876
    %vm884 = vweird.f32 %v878
    %vm885 = vmor %vm883, %vm884
    %v886 = vsel %vm885, %v878, %v882
    %v887 = vand.u32 2147483647, %v876
    %vm888 = vcmp.eq.f32.partialorder %v887, 8.507059e+37
    %v889 = vand.u32 %v876, 2147483648
    %v890 = vor.u32 1.1754944e-38, %v889
    %v891 = vsel %vm888, %v890, %v886
    %v892 = vmul.f32 1.0, %v891
    %v893 = vrcp.pop %v877
    %v894 = vmul.f32 %v877, %v893
    %v895 = vsub.f32 1.0, %v894
    %v896 = vmul.f32 %v893, %v895
    %v897 = vadd.f32 %v893, %v896
    %vm898 = vweird.f32 %v877
    %vm899 = vweird.f32 %v893
    %vm900 = vmor %vm898, %vm899
    %v901 = vsel %vm900, %v893, %v897
    %v902 = vand.u32 2147483647, %v877
    %vm903 = vcmp.eq.f32.partialorder %v902, 8.507059e+37
    %v904 = vand.u32 %v877, 2147483648
    %v905 = vor.u32 1.1754944e-38, %v904
    %v906 = vsel %vm903, %v905, %v901
    %v907 = vmul.f32 1.0, %v906
    %v908 = vtanh.pop %v788
    %v909 = vtanh.pop %v789
    %v912 = vrot.slane %v685, 1
    %v913 = vrot.slane %v686, 1
    %v916 = vmul.f32 %v892, %v912
    %v917 = vmul.f32 %v907, %v913
    %920 = vrot.lane.b32.xlu0 %v908, 64
    %v921 = vpop.permute.xlu0 %920
    %922 = vrot.lane.b32.xlu0 %v909, 64
    %v923 = vpop.permute.xlu0 %922
    %v926 = vmul.f32 %v892, %v921
    %v927 = vmul.f32 %v907, %v923
    %930 = vrot.lane.b32.xlu0 %v926, 32
    %v931 = vpop.permute.xlu0 %930
    %932 = vrot.lane.b32.xlu0 %v927, 32
    %v933 = vpop.permute.xlu0 %932
    %v936 = vadd.f32 %v916, %v931
    %v937 = vadd.f32 %v917, %v933
    %v938 = vtanh.pop %v936
    %v939 = vtanh.pop %v937
    %942 = vrot.lane.b32.xlu0 %v938, 64
    %v943 = vpop.permute.xlu0 %942
    %944 = vrot.lane.b32.xlu0 %v939, 64
    %v945 = vpop.permute.xlu0 %944
    %v948 = vmul.f32 %v892, %v943
    %v949 = vmul.f32 %v907, %v945
    %952 = vrot.lane.b32.xlu0 %v868, 32
    %v953 = vpop.permute.xlu0 %952
    %954 = vrot.lane.b32.xlu0 %v869, 32
    %v955 = vpop.permute.xlu0 %954
    %vm958 = vcmask 256002
    %959 = vst.msk [vmem:[#allocation15] sm:$0x4] %vm958, %v953
    %960 = vst.msk [vmem:[#allocation15 + $0x8] sm:$0x4] %vm958, %v955
    %963 = vrot.lane.b32.xlu0 %v948, 32
    %v964 = vpop.permute.xlu0 %963
    %965 = vrot.lane.b32.xlu0 %v949, 32
    %v966 = vpop.permute.xlu0 %965
    %vm969 = vcmask 259077
    %970 = vst.msk [vmem:[#allocation16] sm:$0x20] %vm969, %v964
    %971 = vst.msk [vmem:[#allocation16 + $0x8] sm:$0x20] %vm969, %v966
    %v972 = vpack.c.bf16 %v868, %v868
    %v973 = vpack.c.bf16 %v869, %v869
    %v976 = vunpack.c.l.b16 %v972
    %v977 = vunpack.c.l.b16 %v973
    %v978 = vrot.slane %v976, 2
    %v979 = vrot.slane %v977, 1
    %v980 = vsel %vm477, %v979, %v978
    %v981 = vpack.c.b16 %v980, %v980
    %982 = vrot.lane.b32.xlu0 %v981, 32
    %v983 = vpop.permute.xlu0 %982
    %v985 = vsel %vm148, %v983, 0
    %987 = vmatpush.bf16.msra.mxu0 0
    %988 = vmatpush.bf16.msra.mxu0 0
    %989 = vmatpush.bf16.msra.mxu0 0
    %990 = vmatpush.bf16.msra.mxu0 0
    %991 = vmatpush.bf16.msra.mxu0 0
    %992 = vmatpush.bf16.msra.mxu0 0
    %993 = vmatpush.bf16.msra.mxu0 %v222
    %994 = vmatpush.bf16.msra.mxu0 %v221
    %995 = vmatmul.bf16.gmra.mxu0 %v985
    %v996 = vpop.f32.mrf.mxu0
    %v997 = vadd.f32 0.0, %v996
    %v998 = vpop.f32.mrf.mxu0
    %999 = vdwg.mxu0
    %v1001 = vrot.slane %v997, 5
    %v1002 = vrot.slane %v997, 6
    %v1005 = vadd.f32 %v162, %v1001
    %v1006 = vadd.f32 %v164, %v1002
    %v1007 = vpack.c.bf16 %v948, %v948
    %v1008 = vpack.c.bf16 %v949, %v949
    %v1011 = vunpack.c.l.b16 %v1007
    %v1012 = vunpack.c.l.b16 %v1008
    %v1013 = vrot.slane %v1011, 5
    %v1014 = vrot.slane %v1012, 4
    %v1015 = vsel %vm477, %v1014, %v1013
    %v1016 = vpack.c.b16 %v1015, %v1015
    %1017 = vrot.lane.b32.xlu0 %v1016, 32
    %v1018 = vpop.permute.xlu0 %1017
    %v1020 = vsel %vm148, %v1018, 0
    %1022 = vmatpush.bf16.msra.mxu0 0
    %1023 = vmatpush.bf16.msra.mxu0 0
    %1024 = vmatpush.bf16.msra.mxu0 0
    %1025 = vmatpush.bf16.msra.mxu0 0
    %1026 = vmatpush.bf16.msra.mxu0 0
    %1027 = vmatpush.bf16.msra.mxu0 0
    %1028 = vmatpush.bf16.msra.mxu0 %v257
    %1029 = vmatpush.bf16.msra.mxu0 %v256
    %1030 = vmatmul.bf16.gmra.mxu0 %v1020
    %v1031 = vpop.f32.mrf.mxu0
    %v1032 = vadd.f32 0.0, %v1031
    %v1033 = vpop.f32.mrf.mxu0
    %1034 = vdwg.mxu0
    %v1036 = vrot.slane %v1032, 4
    %v1037 = vrot.slane %v1032, 5
    %v1040 = vadd.f32 %v196, %v1036
    %v1041 = vadd.f32 %v198, %v1037
    %v1042 = vxor.u32 %v1005, 2147483648
    %v1043 = vxor.u32 %v1006, 2147483648
    %v1044 = vmul.f32 %v1042, 1.442695
    %v1045 = vpow.pop %v1044
    %v1046 = vmul.f32 %v1043, 1.442695
    %v1047 = vpow.pop %v1046
    %v1048 = vadd.f32 %v1045, 1.0
    %v1049 = vadd.f32 %v1047, 1.0
    %v1050 = vrcp.pop %v1048
    %v1051 = vmul.f32 %v1048, %v1050
    %v1052 = vsub.f32 1.0, %v1051
    %v1053 = vmul.f32 %v1050, %v1052
    %v1054 = vadd.f32 %v1050, %v1053
    %vm1055 = vweird.f32 %v1048
    %vm1056 = vweird.f32 %v1050
    %vm1057 = vmor %vm1055, %vm1056
    %v1058 = vsel %vm1057, %v1050, %v1054
    %v1059 = vand.u32 2147483647, %v1048
    %vm1060 = vcmp.eq.f32.partialorder %v1059, 8.507059e+37
    %v1061 = vand.u32 %v1048, 2147483648
    %v1062 = vor.u32 1.1754944e-38, %v1061
    %v1063 = vsel %vm1060, %v1062, %v1058
    %v1064 = vmul.f32 1.0, %v1063
    %v1065 = vrcp.pop %v1049
    %v1066 = vmul.f32 %v1049, %v1065
    %v1067 = vsub.f32 1.0, %v1066
    %v1068 = vmul.f32 %v1065, %v1067
    %v1069 = vadd.f32 %v1065, %v1068
    %vm1070 = vweird.f32 %v1049
    %vm1071 = vweird.f32 %v1065
    %vm1072 = vmor %vm1070, %vm1071
    %v1073 = vsel %vm1072, %v1065, %v1069
    %v1074 = vand.u32 2147483647, %v1049
    %vm1075 = vcmp.eq.f32.partialorder %v1074, 8.507059e+37
    %v1076 = vand.u32 %v1049, 2147483648
    %v1077 = vor.u32 1.1754944e-38, %v1076
    %v1078 = vsel %vm1075, %v1077, %v1073
    %v1079 = vmul.f32 1.0, %v1078
    %v1080 = vtanh.pop %v1005
    %v1081 = vtanh.pop %v1006
    %v1084 = vrot.slane %v856, 7
    %v1085 = vrot.slane %v857, 7
    %v1088 = vmul.f32 %v1064, %v1084
    %v1089 = vmul.f32 %v1079, %v1085
    %1092 = vrot.lane.b32.xlu0 %v1080, 64
    %v1093 = vpop.permute.xlu0 %1092
    %1094 = vrot.lane.b32.xlu0 %v1081, 64
    %v1095 = vpop.permute.xlu0 %1094
    %v1098 = vmul.f32 %v1064, %v1093
    %v1099 = vmul.f32 %v1079, %v1095
    %1102 = vrot.lane.b32.xlu0 %v1098, 32
    %v1103 = vpop.permute.xlu0 %1102
    %1104 = vrot.lane.b32.xlu0 %v1099, 32
    %v1105 = vpop.permute.xlu0 %1104
    %v1108 = vadd.f32 %v1088, %v1103
    %v1109 = vadd.f32 %v1089, %v1105
    %v1110 = vtanh.pop %v1108
    %v1111 = vtanh.pop %v1109
    %1114 = vrot.lane.b32.xlu0 %v1110, 64
    %v1115 = vpop.permute.xlu0 %1114
    %1116 = vrot.lane.b32.xlu0 %v1111, 64
    %v1117 = vpop.permute.xlu0 %1116
    %v1120 = vmul.f32 %v1064, %v1115
    %v1121 = vmul.f32 %v1079, %v1117
    %v1122 = vxor.u32 %v1040, 2147483648
    %v1123 = vxor.u32 %v1041, 2147483648
    %v1124 = vmul.f32 %v1122, 1.442695
    %v1125 = vpow.pop %v1124
    %v1126 = vmul.f32 %v1123, 1.442695
    %v1127 = vpow.pop %v1126
    %v1128 = vadd.f32 %v1125, 1.0
    %v1129 = vadd.f32 %v1127, 1.0
    %v1130 = vrcp.pop %v1128
    %v1131 = vmul.f32 %v1128, %v1130
    %v1132 = vsub.f32 1.0, %v1131
    %v1133 = vmul.f32 %v1130, %v1132
    %v1134 = vadd.f32 %v1130, %v1133
    %vm1135 = vweird.f32 %v1128
    %vm1136 = vweird.f32 %v1130
    %vm1137 = vmor %vm1135, %vm1136
    %v1138 = vsel %vm1137, %v1130, %v1134
    %v1139 = vand.u32 2147483647, %v1128
    %vm1140 = vcmp.eq.f32.partialorder %v1139, 8.507059e+37
    %v1141 = vand.u32 %v1128, 2147483648
    %v1142 = vor.u32 1.1754944e-38, %v1141
    %v1143 = vsel %vm1140, %v1142, %v1138
    %v1144 = vmul.f32 1.0, %v1143
    %v1145 = vrcp.pop %v1129
    %v1146 = vmul.f32 %v1129, %v1145
    %v1147 = vsub.f32 1.0, %v1146
    %v1148 = vmul.f32 %v1145, %v1147
    %v1149 = vadd.f32 %v1145, %v1148
    %vm1150 = vweird.f32 %v1129
    %vm1151 = vweird.f32 %v1145
    %vm1152 = vmor %vm1150, %vm1151
    %v1153 = vsel %vm1152, %v1145, %v1149
    %v1154 = vand.u32 2147483647, %v1129
    %vm1155 = vcmp.eq.f32.partialorder %v1154, 8.507059e+37
    %v1156 = vand.u32 %v1129, 2147483648
    %v1157 = vor.u32 1.1754944e-38, %v1156
    %v1158 = vsel %vm1155, %v1157, %v1153
    %v1159 = vmul.f32 1.0, %v1158
    %v1160 = vtanh.pop %v1040
    %v1161 = vtanh.pop %v1041
    %v1164 = vrot.slane %v936, 1
    %v1165 = vrot.slane %v937, 1
    %v1168 = vmul.f32 %v1144, %v1164
    %v1169 = vmul.f32 %v1159, %v1165
    %1172 = vrot.lane.b32.xlu0 %v1160, 64
    %v1173 = vpop.permute.xlu0 %1172
    %1174 = vrot.lane.b32.xlu0 %v1161, 64
    %v1175 = vpop.permute.xlu0 %1174
    %v1178 = vmul.f32 %v1144, %v1173
    %v1179 = vmul.f32 %v1159, %v1175
    %1182 = vrot.lane.b32.xlu0 %v1178, 32
    %v1183 = vpop.permute.xlu0 %1182
    %1184 = vrot.lane.b32.xlu0 %v1179, 32
    %v1185 = vpop.permute.xlu0 %1184
    %v1188 = vadd.f32 %v1168, %v1183
    %v1189 = vadd.f32 %v1169, %v1185
    %v1190 = vtanh.pop %v1188
    %v1191 = vtanh.pop %v1189
    %1194 = vrot.lane.b32.xlu0 %v1190, 64
    %v1195 = vpop.permute.xlu0 %1194
    %1196 = vrot.lane.b32.xlu0 %v1191, 64
    %v1197 = vpop.permute.xlu0 %1196
    %v1200 = vmul.f32 %v1144, %v1195
    %v1201 = vmul.f32 %v1159, %v1197
    %1204 = vrot.lane.b32.xlu0 %v1120, 32
    %v1205 = vpop.permute.xlu0 %1204
    %1206 = vrot.lane.b32.xlu0 %v1121, 32
    %v1207 = vpop.permute.xlu0 %1206
    %vm1210 = vcmask 257027
    %1211 = vst.msk [vmem:[#allocation15] sm:$0x8] %vm1210, %v1205
    %1212 = vst.msk [vmem:[#allocation15 + $0x8] sm:$0x8] %vm1210, %v1207
    %1215 = vrot.lane.b32.xlu0 %v1200, 32
    %v1216 = vpop.permute.xlu0 %1215
    %1217 = vrot.lane.b32.xlu0 %v1201, 32
    %v1218 = vpop.permute.xlu0 %1217
    %vm1221 = vcmask 258052
    %1222 = vst.msk [vmem:[#allocation16] sm:$0x10] %vm1221, %v1216
    %1223 = vst.msk [vmem:[#allocation16 + $0x8] sm:$0x10] %vm1221, %v1218
    %v1224 = vpack.c.bf16 %v1120, %v1120
    %v1225 = vpack.c.bf16 %v1121, %v1121
    %v1228 = vunpack.c.l.b16 %v1224
    %v1229 = vunpack.c.l.b16 %v1225
    %v1230 = vrot.slane %v1228, 3
    %v1231 = vrot.slane %v1229, 2
    %v1232 = vsel %vm477, %v1231, %v1230
    %v1233 = vpack.c.b16 %v1232, %v1232
    %1234 = vrot.lane.b32.xlu0 %v1233, 32
    %v1235 = vpop.permute.xlu0 %1234
    %v1237 = vsel %vm148, %v1235, 0
    %1239 = vmatpush.bf16.msra.mxu0 0
    %1240 = vmatpush.bf16.msra.mxu0 0
    %1241 = vmatpush.bf16.msra.mxu0 0
    %1242 = vmatpush.bf16.msra.mxu0 0
    %1243 = vmatpush.bf16.msra.mxu0 0
    %1244 = vmatpush.bf16.msra.mxu0 0
    %1245 = vmatpush.bf16.msra.mxu0 %v222
    %1246 = vmatpush.bf16.msra.mxu0 %v221
    %1247 = vmatmul.bf16.gmra.mxu0 %v1237
    %v1248 = vpop.f32.mrf.mxu0
    %v1249 = vadd.f32 0.0, %v1248
    %v1250 = vpop.f32.mrf.mxu0
    %1251 = vdwg.mxu0
    %v1253 = vrot.slane %v1249, 4
    %v1254 = vrot.slane %v1249, 5
    %v1257 = vadd.f32 %v162, %v1253
    %v1258 = vadd.f32 %v164, %v1254
    %v1259 = vpack.c.bf16 %v1200, %v1200
    %v1260 = vpack.c.bf16 %v1201, %v1201
    %v1263 = vunpack.c.l.b16 %v1259
    %v1264 = vunpack.c.l.b16 %v1260
    %v1265 = vrot.slane %v1263, 4
    %v1266 = vrot.slane %v1264, 3
    %v1267 = vsel %vm477, %v1266, %v1265
    %v1268 = vpack.c.b16 %v1267, %v1267
    %1269 = vrot.lane.b32.xlu0 %v1268, 32
    %v1270 = vpop.permute.xlu0 %1269
    %v1272 = vsel %vm148, %v1270, 0
    %1274 = vmatpush.bf16.msra.mxu0 0
    %1275 = vmatpush.bf16.msra.mxu0 0
    %1276 = vmatpush.bf16.msra.mxu0 0
    %1277 = vmatpush.bf16.msra.mxu0 0
    %1278 = vmatpush.bf16.msra.mxu0 0
    %1279 = vmatpush.bf16.msra.mxu0 0
    %1280 = vmatpush.bf16.msra.mxu0 %v257
    %1281 = vmatpush.bf16.msra.mxu0 %v256
    %1282 = vmatmul.bf16.gmra.mxu0 %v1272
    %v1283 = vpop.f32.mrf.mxu0
    %v1284 = vadd.f32 0.0, %v1283
    %v1285 = vpop.f32.mrf.mxu0
    %1286 = vdwg.mxu0
    %v1288 = vrot.slane %v1284, 5
    %v1289 = vrot.slane %v1284, 6
    %v1292 = vadd.f32 %v196, %v1288
    %v1293 = vadd.f32 %v198, %v1289
    %v1294 = vxor.u32 %v1257, 2147483648
    %v1295 = vxor.u32 %v1258, 2147483648
    %v1296 = vmul.f32 %v1294, 1.442695
    %v1297 = vpow.pop %v1296
    %v1298 = vmul.f32 %v1295, 1.442695
    %v1299 = vpow.pop %v1298
    %v1300 = vadd.f32 %v1297, 1.0
    %v1301 = vadd.f32 %v1299, 1.0
    %v1302 = vrcp.pop %v1300
    %v1303 = vmul.f32 %v1300, %v1302
    %v1304 = vsub.f32 1.0, %v1303
    %v1305 = vmul.f32 %v1302, %v1304
    %v1306 = vadd.f32 %v1302, %v1305
    %vm1307 = vweird.f32 %v1300
    %vm1308 = vweird.f32 %v1302
    %vm1309 = vmor %vm1307, %vm1308
    %v1310 = vsel %vm1309, %v1302, %v1306
    %v1311 = vand.u32 2147483647, %v1300
    %vm1312 = vcmp.eq.f32.partialorder %v1311, 8.507059e+37
    %v1313 = vand.u32 %v1300, 2147483648
    %v1314 = vor.u32 1.1754944e-38, %v1313
    %v1315 = vsel %vm1312, %v1314, %v1310
    %v1316 = vmul.f32 1.0, %v1315
    %v1317 = vrcp.pop %v1301
    %v1318 = vmul.f32 %v1301, %v1317
    %v1319 = vsub.f32 1.0, %v1318
    %v1320 = vmul.f32 %v1317, %v1319
    %v1321 = vadd.f32 %v1317, %v1320
    %vm1322 = vweird.f32 %v1301
    %vm1323 = vweird.f32 %v1317
    %vm1324 = vmor %vm1322, %vm1323
    %v1325 = vsel %vm1324, %v1317, %v1321
    %v1326 = vand.u32 2147483647, %v1301
    %vm1327 = vcmp.eq.f32.partialorder %v1326, 8.507059e+37
    %v1328 = vand.u32 %v1301, 2147483648
    %v1329 = vor.u32 1.1754944e-38, %v1328
    %v1330 = vsel %vm1327, %v1329, %v1325
    %v1331 = vmul.f32 1.0, %v1330
    %v1332 = vtanh.pop %v1257
    %v1333 = vtanh.pop %v1258
    %v1336 = vrot.slane %v1108, 7
    %v1337 = vrot.slane %v1109, 7
    %v1340 = vmul.f32 %v1316, %v1336
    %v1341 = vmul.f32 %v1331, %v1337
    %1344 = vrot.lane.b32.xlu0 %v1332, 64
    %v1345 = vpop.permute.xlu0 %1344
    %1346 = vrot.lane.b32.xlu0 %v1333, 64
    %v1347 = vpop.permute.xlu0 %1346
    %v1350 = vmul.f32 %v1316, %v1345
    %v1351 = vmul.f32 %v1331, %v1347
    %1354 = vrot.lane.b32.xlu0 %v1350, 32
    %v1355 = vpop.permute.xlu0 %1354
    %1356 = vrot.lane.b32.xlu0 %v1351, 32
    %v1357 = vpop.permute.xlu0 %1356
    %v1360 = vadd.f32 %v1340, %v1355
    %v1361 = vadd.f32 %v1341, %v1357
    %v1362 = vtanh.pop %v1360
    %v1363 = vtanh.pop %v1361
    %1366 = vrot.lane.b32.xlu0 %v1362, 64
    %v1367 = vpop.permute.xlu0 %1366
    %1368 = vrot.lane.b32.xlu0 %v1363, 64
    %v1369 = vpop.permute.xlu0 %1368
    %v1372 = vmul.f32 %v1316, %v1367
    %v1373 = vmul.f32 %v1331, %v1369
    %v1374 = vxor.u32 %v1292, 2147483648
    %v1375 = vxor.u32 %v1293, 2147483648
    %v1376 = vmul.f32 %v1374, 1.442695
    %v1377 = vpow.pop %v1376
    %v1378 = vmul.f32 %v1375, 1.442695
    %v1379 = vpow.pop %v1378
    %v1380 = vadd.f32 %v1377, 1.0
    %v1381 = vadd.f32 %v1379, 1.0
    %v1382 = vrcp.pop %v1380
    %v1383 = vmul.f32 %v1380, %v1382
    %v1384 = vsub.f32 1.0, %v1383
    %v1385 = vmul.f32 %v1382, %v1384
    %v1386 = vadd.f32 %v1382, %v1385
    %vm1387 = vweird.f32 %v1380
    %vm1388 = vweird.f32 %v1382
    %vm1389 = vmor %vm1387, %vm1388
    %v1390 = vsel %vm1389, %v1382, %v1386
    %v1391 = vand.u32 2147483647, %v1380
    %vm1392 = vcmp.eq.f32.partialorder %v1391, 8.507059e+37
    %v1393 = vand.u32 %v1380, 2147483648
    %v1394 = vor.u32 1.1754944e-38, %v1393
    %v1395 = vsel %vm1392, %v1394, %v1390
    %v1396 = vmul.f32 1.0, %v1395
    %v1397 = vrcp.pop %v1381
    %v1398 = vmul.f32 %v1381, %v1397
    %v1399 = vsub.f32 1.0, %v1398
    %v1400 = vmul.f32 %v1397, %v1399
    %v1401 = vadd.f32 %v1397, %v1400
    %vm1402 = vweird.f32 %v1381
    %vm1403 = vweird.f32 %v1397
    %vm1404 = vmor %vm1402, %vm1403
    %v1405 = vsel %vm1404, %v1397, %v1401
    %v1406 = vand.u32 2147483647, %v1381
    %vm1407 = vcmp.eq.f32.partialorder %v1406, 8.507059e+37
    %v1408 = vand.u32 %v1381, 2147483648
    %v1409 = vor.u32 1.1754944e-38, %v1408
    %v1410 = vsel %vm1407, %v1409, %v1405
    %v1411 = vmul.f32 1.0, %v1410
    %v1412 = vtanh.pop %v1292
    %v1413 = vtanh.pop %v1293
    %v1416 = vrot.slane %v1188, 1
    %v1417 = vrot.slane %v1189, 1
    %v1420 = vmul.f32 %v1396, %v1416
    %v1421 = vmul.f32 %v1411, %v1417
    %1424 = vrot.lane.b32.xlu0 %v1412, 64
    %v1425 = vpop.permute.xlu0 %1424
    %1426 = vrot.lane.b32.xlu0 %v1413, 64
    %v1427 = vpop.permute.xlu0 %1426
    %v1430 = vmul.f32 %v1396, %v1425
    %v1431 = vmul.f32 %v1411, %v1427
    %1434 = vrot.lane.b32.xlu0 %v1430, 32
    %v1435 = vpop.permute.xlu0 %1434
    %1436 = vrot.lane.b32.xlu0 %v1431, 32
    %v1437 = vpop.permute.xlu0 %1436
    %v1440 = vadd.f32 %v1420, %v1435
    %v1441 = vadd.f32 %v1421, %v1437
    %v1442 = vtanh.pop %v1440
    %v1443 = vtanh.pop %v1441
    %1446 = vrot.lane.b32.xlu0 %v1442, 64
    %v1447 = vpop.permute.xlu0 %1446
    %1448 = vrot.lane.b32.xlu0 %v1443, 64
    %v1449 = vpop.permute.xlu0 %1448
    %v1452 = vmul.f32 %v1396, %v1447
    %v1453 = vmul.f32 %v1411, %v1449
    %1456 = vrot.lane.b32.xlu0 %v1372, 32
    %v1457 = vpop.permute.xlu0 %1456
    %1458 = vrot.lane.b32.xlu0 %v1373, 32
    %v1459 = vpop.permute.xlu0 %1458
    %1462 = vst.msk [vmem:[#allocation15] sm:$0x10] %vm1221, %v1457
    %1463 = vst.msk [vmem:[#allocation15 + $0x8] sm:$0x10] %vm1221, %v1459
    %1466 = vrot.lane.b32.xlu0 %v1452, 32
    %v1467 = vpop.permute.xlu0 %1466
    %1468 = vrot.lane.b32.xlu0 %v1453, 32
    %v1469 = vpop.permute.xlu0 %1468
    %1472 = vst.msk [vmem:[#allocation16] sm:$0x8] %vm1210, %v1467
    %1473 = vst.msk [vmem:[#allocation16 + $0x8] sm:$0x8] %vm1210, %v1469
    %v1474 = vpack.c.bf16 %v1372, %v1372
    %v1475 = vpack.c.bf16 %v1373, %v1373
    %v1478 = vunpack.c.l.b16 %v1474
    %v1479 = vunpack.c.l.b16 %v1475
    %v1480 = vrot.slane %v1478, 4
    %v1481 = vrot.slane %v1479, 3
    %v1482 = vsel %vm477, %v1481, %v1480
    %v1483 = vpack.c.b16 %v1482, %v1482
    %1484 = vrot.lane.b32.xlu0 %v1483, 32
    %v1485 = vpop.permute.xlu0 %1484
    %v1487 = vsel %vm148, %v1485, 0
    %1489 = vmatpush.bf16.msra.mxu0 0
    %1490 = vmatpush.bf16.msra.mxu0 0
    %1491 = vmatpush.bf16.msra.mxu0 0
    %1492 = vmatpush.bf16.msra.mxu0 0
    %1493 = vmatpush.bf16.msra.mxu0 0
    %1494 = vmatpush.bf16.msra.mxu0 0
    %1495 = vmatpush.bf16.msra.mxu0 %v222
    %1496 = vmatpush.bf16.msra.mxu0 %v221
    %1497 = vmatmul.bf16.gmra.mxu0 %v1487
    %v1498 = vpop.f32.mrf.mxu0
    %v1499 = vadd.f32 0.0, %v1498
    %v1500 = vpop.f32.mrf.mxu0
    %1501 = vdwg.mxu0
    %v1503 = vrot.slane %v1499, 3
    %v1504 = vrot.slane %v1499, 4
    %v1507 = vadd.f32 %v162, %v1503
    %v1508 = vadd.f32 %v164, %v1504
    %v1509 = vpack.c.bf16 %v1452, %v1452
    %v1510 = vpack.c.bf16 %v1453, %v1453
    %v1513 = vunpack.c.l.b16 %v1509
    %v1514 = vunpack.c.l.b16 %v1510
    %v1515 = vrot.slane %v1513, 3
    %v1516 = vrot.slane %v1514, 2
    %v1517 = vsel %vm477, %v1516, %v1515
    %v1518 = vpack.c.b16 %v1517, %v1517
    %1519 = vrot.lane.b32.xlu0 %v1518, 32
    %v1520 = vpop.permute.xlu0 %1519
    %v1522 = vsel %vm148, %v1520, 0
    %1524 = vmatpush.bf16.msra.mxu0 0
    %1525 = vmatpush.bf16.msra.mxu0 0
    %1526 = vmatpush.bf16.msra.mxu0 0
    %1527 = vmatpush.bf16.msra.mxu0 0
    %1528 = vmatpush.bf16.msra.mxu0 0
    %1529 = vmatpush.bf16.msra.mxu0 0
    %1530 = vmatpush.bf16.msra.mxu0 %v257
    %1531 = vmatpush.bf16.msra.mxu0 %v256
    %1532 = vmatmul.bf16.gmra.mxu0 %v1522
    %v1533 = vpop.f32.mrf.mxu0
    %v1534 = vadd.f32 0.0, %v1533
    %v1535 = vpop.f32.mrf.mxu0
    %1536 = vdwg.mxu0
    %v1538 = vrot.slane %v1534, 6
    %v1539 = vrot.slane %v1534, 7
    %v1542 = vadd.f32 %v196, %v1538
    %v1543 = vadd.f32 %v198, %v1539
    %v1544 = vxor.u32 %v1507, 2147483648
    %v1545 = vxor.u32 %v1508, 2147483648
    %v1546 = vmul.f32 %v1544, 1.442695
    %v1547 = vpow.pop %v1546
    %v1548 = vmul.f32 %v1545, 1.442695
    %v1549 = vpow.pop %v1548
    %v1550 = vadd.f32 %v1547, 1.0
    %v1551 = vadd.f32 %v1549, 1.0
    %v1552 = vrcp.pop %v1550
    %v1553 = vmul.f32 %v1550, %v1552
    %v1554 = vsub.f32 1.0, %v1553
    %v1555 = vmul.f32 %v1552, %v1554
    %v1556 = vadd.f32 %v1552, %v1555
    %vm1557 = vweird.f32 %v1550
    %vm1558 = vweird.f32 %v1552
    %vm1559 = vmor %vm1557, %vm1558
    %v1560 = vsel %vm1559, %v1552, %v1556
    %v1561 = vand.u32 2147483647, %v1550
    %vm1562 = vcmp.eq.f32.partialorder %v1561, 8.507059e+37
    %v1563 = vand.u32 %v1550, 2147483648
    %v1564 = vor.u32 1.1754944e-38, %v1563
    %v1565 = vsel %vm1562, %v1564, %v1560
    %v1566 = vmul.f32 1.0, %v1565
    %v1567 = vrcp.pop %v1551
    %v1568 = vmul.f32 %v1551, %v1567
    %v1569 = vsub.f32 1.0, %v1568
    %v1570 = vmul.f32 %v1567, %v1569
    %v1571 = vadd.f32 %v1567, %v1570
    %vm1572 = vweird.f32 %v1551
    %vm1573 = vweird.f32 %v1567
    %vm1574 = vmor %vm1572, %vm1573
    %v1575 = vsel %vm1574, %v1567, %v1571
    %v1576 = vand.u32 2147483647, %v1551
    %vm1577 = vcmp.eq.f32.partialorder %v1576, 8.507059e+37
    %v1578 = vand.u32 %v1551, 2147483648
    %v1579 = vor.u32 1.1754944e-38, %v1578
    %v1580 = vsel %vm1577, %v1579, %v1575
    %v1581 = vmul.f32 1.0, %v1580
    %v1582 = vtanh.pop %v1507
    %v1583 = vtanh.pop %v1508
    %v1586 = vrot.slane %v1360, 7
    %v1587 = vrot.slane %v1361, 7
    %v1590 = vmul.f32 %v1566, %v1586
    %v1591 = vmul.f32 %v1581, %v1587
    %1594 = vrot.lane.b32.xlu0 %v1582, 64
    %v1595 = vpop.permute.xlu0 %1594
    %1596 = vrot.lane.b32.xlu0 %v1583, 64
    %v1597 = vpop.permute.xlu0 %1596
    %v1600 = vmul.f32 %v1566, %v1595
    %v1601 = vmul.f32 %v1581, %v1597
    %1604 = vrot.lane.b32.xlu0 %v1600, 32
    %v1605 = vpop.permute.xlu0 %1604
    %1606 = vrot.lane.b32.xlu0 %v1601, 32
    %v1607 = vpop.permute.xlu0 %1606
    %v1610 = vadd.f32 %v1590, %v1605
    %v1611 = vadd.f32 %v1591, %v1607
    %v1612 = vtanh.pop %v1610
    %v1613 = vtanh.pop %v1611
    %1616 = vrot.lane.b32.xlu0 %v1612, 64
    %v1617 = vpop.permute.xlu0 %1616
    %1618 = vrot.lane.b32.xlu0 %v1613, 64
    %v1619 = vpop.permute.xlu0 %1618
    %v1622 = vmul.f32 %v1566, %v1617
    %v1623 = vmul.f32 %v1581, %v1619
    %v1624 = vxor.u32 %v1542, 2147483648
    %v1625 = vxor.u32 %v1543, 2147483648
    %v1626 = vmul.f32 %v1624, 1.442695
    %v1627 = vpow.pop %v1626
    %v1628 = vmul.f32 %v1625, 1.442695
    %v1629 = vpow.pop %v1628
    %v1630 = vadd.f32 %v1627, 1.0
    %v1631 = vadd.f32 %v1629, 1.0
    %v1632 = vrcp.pop %v1630
    %v1633 = vmul.f32 %v1630, %v1632
    %v1634 = vsub.f32 1.0, %v1633
    %v1635 = vmul.f32 %v1632, %v1634
    %v1636 = vadd.f32 %v1632, %v1635
    %vm1637 = vweird.f32 %v1630
    %vm1638 = vweird.f32 %v1632
    %vm1639 = vmor %vm1637, %vm1638
    %v1640 = vsel %vm1639, %v1632, %v1636
    %v1641 = vand.u32 2147483647, %v1630
    %vm1642 = vcmp.eq.f32.partialorder %v1641, 8.507059e+37
    %v1643 = vand.u32 %v1630, 2147483648
    %v1644 = vor.u32 1.1754944e-38, %v1643
    %v1645 = vsel %vm1642, %v1644, %v1640
    %v1646 = vmul.f32 1.0, %v1645
    %v1647 = vrcp.pop %v1631
    %v1648 = vmul.f32 %v1631, %v1647
    %v1649 = vsub.f32 1.0, %v1648
    %v1650 = vmul.f32 %v1647, %v1649
    %v1651 = vadd.f32 %v1647, %v1650
    %vm1652 = vweird.f32 %v1631
    %vm1653 = vweird.f32 %v1647
    %vm1654 = vmor %vm1652, %vm1653
    %v1655 = vsel %vm1654, %v1647, %v1651
    %v1656 = vand.u32 2147483647, %v1631
    %vm1657 = vcmp.eq.f32.partialorder %v1656, 8.507059e+37
    %v1658 = vand.u32 %v1631, 2147483648
    %v1659 = vor.u32 1.1754944e-38, %v1658
    %v1660 = vsel %vm1657, %v1659, %v1655
    %v1661 = vmul.f32 1.0, %v1660
    %v1662 = vtanh.pop %v1542
    %v1663 = vtanh.pop %v1543
    %v1666 = vrot.slane %v1440, 1
    %v1667 = vrot.slane %v1441, 1
    %v1670 = vmul.f32 %v1646, %v1666
    %v1671 = vmul.f32 %v1661, %v1667
    %1674 = vrot.lane.b32.xlu0 %v1662, 64
    %v1675 = vpop.permute.xlu0 %1674
    %1676 = vrot.lane.b32.xlu0 %v1663, 64
    %v1677 = vpop.permute.xlu0 %1676
    %v1680 = vmul.f32 %v1646, %v1675
    %v1681 = vmul.f32 %v1661, %v1677
    %1684 = vrot.lane.b32.xlu0 %v1680, 32
    %v1685 = vpop.permute.xlu0 %1684
    %1686 = vrot.lane.b32.xlu0 %v1681, 32
    %v1687 = vpop.permute.xlu0 %1686
    %v1690 = vadd.f32 %v1670, %v1685
    %v1691 = vadd.f32 %v1671, %v1687
    %v1692 = vtanh.pop %v1690
    %v1693 = vtanh.pop %v1691
    %1696 = vrot.lane.b32.xlu0 %v1692, 64
    %v1697 = vpop.permute.xlu0 %1696
    %1698 = vrot.lane.b32.xlu0 %v1693, 64
    %v1699 = vpop.permute.xlu0 %1698
    %v1702 = vmul.f32 %v1646, %v1697
    %v1703 = vmul.f32 %v1661, %v1699
    %1706 = vrot.lane.b32.xlu0 %v1622, 32
    %v1707 = vpop.permute.xlu0 %1706
    %1708 = vrot.lane.b32.xlu0 %v1623, 32
    %v1709 = vpop.permute.xlu0 %1708
    %1712 = vst.msk [vmem:[#allocation15] sm:$0x20] %vm969, %v1707
    %1713 = vst.msk [vmem:[#allocation15 + $0x8] sm:$0x20] %vm969, %v1709
    %1716 = vrot.lane.b32.xlu0 %v1702, 32
    %v1717 = vpop.permute.xlu0 %1716
    %1718 = vrot.lane.b32.xlu0 %v1703, 32
    %v1719 = vpop.permute.xlu0 %1718
    %1722 = vst.msk [vmem:[#allocation16] sm:$0x4] %vm958, %v1717
    %1723 = vst.msk [vmem:[#allocation16 + $0x8] sm:$0x4] %vm958, %v1719
    %v1724 = vpack.c.bf16 %v1622, %v1622
    %v1725 = vpack.c.bf16 %v1623, %v1623
    %v1728 = vunpack.c.l.b16 %v1724
    %v1729 = vunpack.c.l.b16 %v1725
    %v1730 = vrot.slane %v1728, 5
    %v1731 = vrot.slane %v1729, 4
    %v1732 = vsel %vm477, %v1731, %v1730
    %v1733 = vpack.c.b16 %v1732, %v1732
    %1734 = vrot.lane.b32.xlu0 %v1733, 32
    %v1735 = vpop.permute.xlu0 %1734
    %v1737 = vsel %vm148, %v1735, 0
    %1739 = vmatpush.bf16.msra.mxu0 0
    %1740 = vmatpush.bf16.msra.mxu0 0
    %1741 = vmatpush.bf16.msra.mxu0 0
    %1742 = vmatpush.bf16.msra.mxu0 0
    %1743 = vmatpush.bf16.msra.mxu0 0
    %1744 = vmatpush.bf16.msra.mxu0 0
    %1745 = vmatpush.bf16.msra.mxu0 %v222
    %1746 = vmatpush.bf16.msra.mxu0 %v221
    %1747 = vmatmul.bf16.gmra.mxu0 %v1737
    %v1748 = vpop.f32.mrf.mxu0
    %v1749 = vadd.f32 0.0, %v1748
    %v1750 = vpop.f32.mrf.mxu0
    %1751 = vdwg.mxu0
    %v1753 = vrot.slane %v1749, 2
    %v1754 = vrot.slane %v1749, 3
    %v1757 = vadd.f32 %v162, %v1753
    %v1758 = vadd.f32 %v164, %v1754
    %v1759 = vpack.c.bf16 %v1702, %v1702
    %v1760 = vpack.c.bf16 %v1703, %v1703
    %v1763 = vunpack.c.l.b16 %v1759
    %v1764 = vunpack.c.l.b16 %v1760
    %v1765 = vrot.slane %v1763, 2
    %v1766 = vrot.slane %v1764, 1
    %v1767 = vsel %vm477, %v1766, %v1765
    %v1768 = vpack.c.b16 %v1767, %v1767
    %1769 = vrot.lane.b32.xlu0 %v1768, 32
    %v1770 = vpop.permute.xlu0 %1769
    %v1772 = vsel %vm148, %v1770, 0
    %1774 = vmatpush.bf16.msra.mxu0 0
    %1775 = vmatpush.bf16.msra.mxu0 0
    %1776 = vmatpush.bf16.msra.mxu0 0
    %1777 = vmatpush.bf16.msra.mxu0 0
    %1778 = vmatpush.bf16.msra.mxu0 0
    %1779 = vmatpush.bf16.msra.mxu0 0
    %1780 = vmatpush.bf16.msra.mxu0 %v257
    %1781 = vmatpush.bf16.msra.mxu0 %v256
    %1782 = vmatmul.bf16.gmra.mxu0 %v1772
    %v1783 = vpop.f32.mrf.mxu0
    %v1784 = vadd.f32 0.0, %v1783
    %v1785 = vpop.f32.mrf.mxu0
    %1786 = vdwg.mxu0
    %v1788 = vrot.slane %v1784, 7
    %v1791 = vadd.f32 %v196, %v1788
    %v1792 = vadd.f32 %v198, %v1784
    %v1793 = vxor.u32 %v1757, 2147483648
    %v1794 = vxor.u32 %v1758, 2147483648
    %v1795 = vmul.f32 %v1793, 1.442695
    %v1796 = vpow.pop %v1795
    %v1797 = vmul.f32 %v1794, 1.442695
    %v1798 = vpow.pop %v1797
    %v1799 = vadd.f32 %v1796, 1.0
    %v1800 = vadd.f32 %v1798, 1.0
    %v1801 = vrcp.pop %v1799
    %v1802 = vmul.f32 %v1799, %v1801
    %v1803 = vsub.f32 1.0, %v1802
    %v1804 = vmul.f32 %v1801, %v1803
    %v1805 = vadd.f32 %v1801, %v1804
    %vm1806 = vweird.f32 %v1799
    %vm1807 = vweird.f32 %v1801
    %vm1808 = vmor %vm1806, %vm1807
    %v1809 = vsel %vm1808, %v1801, %v1805
    %v1810 = vand.u32 2147483647, %v1799
    %vm1811 = vcmp.eq.f32.partialorder %v1810, 8.507059e+37
    %v1812 = vand.u32 %v1799, 2147483648
    %v1813 = vor.u32 1.1754944e-38, %v1812
    %v1814 = vsel %vm1811, %v1813, %v1809
    %v1815 = vmul.f32 1.0, %v1814
    %v1816 = vrcp.pop %v1800
    %v1817 = vmul.f32 %v1800, %v1816
    %v1818 = vsub.f32 1.0, %v1817
    %v1819 = vmul.f32 %v1816, %v1818
    %v1820 = vadd.f32 %v1816, %v1819
    %vm1821 = vweird.f32 %v1800
    %vm1822 = vweird.f32 %v1816
    %vm1823 = vmor %vm1821, %vm1822
    %v1824 = vsel %vm1823, %v1816, %v1820
    %v1825 = vand.u32 2147483647, %v1800
    %vm1826 = vcmp.eq.f32.partialorder %v1825, 8.507059e+37
    %v1827 = vand.u32 %v1800, 2147483648
    %v1828 = vor.u32 1.1754944e-38, %v1827
    %v1829 = vsel %vm1826, %v1828, %v1824
    %v1830 = vmul.f32 1.0, %v1829
    %v1831 = vtanh.pop %v1757
    %v1832 = vtanh.pop %v1758
    %v1835 = vrot.slane %v1610, 7
    %v1836 = vrot.slane %v1611, 7
    %v1839 = vmul.f32 %v1815, %v1835
    %v1840 = vmul.f32 %v1830, %v1836
    %1843 = vrot.lane.b32.xlu0 %v1831, 64
    %v1844 = vpop.permute.xlu0 %1843
    %1845 = vrot.lane.b32.xlu0 %v1832, 64
    %v1846 = vpop.permute.xlu0 %1845
    %v1849 = vmul.f32 %v1815, %v1844
    %v1850 = vmul.f32 %v1830, %v1846
    %1853 = vrot.lane.b32.xlu0 %v1849, 32
    %v1854 = vpop.permute.xlu0 %1853
    %1855 = vrot.lane.b32.xlu0 %v1850, 32
    %v1856 = vpop.permute.xlu0 %1855
    %v1859 = vadd.f32 %v1839, %v1854
    %v1860 = vadd.f32 %v1840, %v1856
    %v1861 = vtanh.pop %v1859
    %v1862 = vtanh.pop %v1860
    %1865 = vrot.lane.b32.xlu0 %v1861, 64
    %v1866 = vpop.permute.xlu0 %1865
    %1867 = vrot.lane.b32.xlu0 %v1862, 64
    %v1868 = vpop.permute.xlu0 %1867
    %v1871 = vmul.f32 %v1815, %v1866
    %v1872 = vmul.f32 %v1830, %v1868
    %v1873 = vxor.u32 %v1791, 2147483648
    %v1874 = vxor.u32 %v1792, 2147483648
    %v1875 = vmul.f32 %v1873, 1.442695
    %v1876 = vpow.pop %v1875
    %v1877 = vmul.f32 %v1874, 1.442695
    %v1878 = vpow.pop %v1877
    %v1879 = vadd.f32 %v1876, 1.0
    %v1880 = vadd.f32 %v1878, 1.0
    %v1881 = vrcp.pop %v1879
    %v1882 = vmul.f32 %v1879, %v1881
    %v1883 = vsub.f32 1.0, %v1882
    %v1884 = vmul.f32 %v1881, %v1883
    %v1885 = vadd.f32 %v1881, %v1884
    %vm1886 = vweird.f32 %v1879
    %vm1887 = vweird.f32 %v1881
    %vm1888 = vmor %vm1886, %vm1887
    %v1889 = vsel %vm1888, %v1881, %v1885
    %v1890 = vand.u32 2147483647, %v1879
    %vm1891 = vcmp.eq.f32.partialorder %v1890, 8.507059e+37
    %v1892 = vand.u32 %v1879, 2147483648
    %v1893 = vor.u32 1.1754944e-38, %v1892
    %v1894 = vsel %vm1891, %v1893, %v1889
    %v1895 = vmul.f32 1.0, %v1894
    %v1896 = vrcp.pop %v1880
    %v1897 = vmul.f32 %v1880, %v1896
    %v1898 = vsub.f32 1.0, %v1897
    %v1899 = vmul.f32 %v1896, %v1898
    %v1900 = vadd.f32 %v1896, %v1899
    %vm1901 = vweird.f32 %v1880
    %vm1902 = vweird.f32 %v1896
    %vm1903 = vmor %vm1901, %vm1902
    %v1904 = vsel %vm1903, %v1896, %v1900
    %v1905 = vand.u32 2147483647, %v1880
    %vm1906 = vcmp.eq.f32.partialorder %v1905, 8.507059e+37
    %v1907 = vand.u32 %v1880, 2147483648
    %v1908 = vor.u32 1.1754944e-38, %v1907
    %v1909 = vsel %vm1906, %v1908, %v1904
    %v1910 = vmul.f32 1.0, %v1909
    %v1911 = vtanh.pop %v1791
    %v1912 = vtanh.pop %v1792
    %v1915 = vrot.slane %v1690, 1
    %v1916 = vrot.slane %v1691, 1
    %v1919 = vmul.f32 %v1895, %v1915
    %v1920 = vmul.f32 %v1910, %v1916
    %1923 = vrot.lane.b32.xlu0 %v1911, 64
    %v1924 = vpop.permute.xlu0 %1923
    %1925 = vrot.lane.b32.xlu0 %v1912, 64
    %v1926 = vpop.permute.xlu0 %1925
    %v1929 = vmul.f32 %v1895, %v1924
    %v1930 = vmul.f32 %v1910, %v1926
    %1933 = vrot.lane.b32.xlu0 %v1929, 32
    %v1934 = vpop.permute.xlu0 %1933
    %1935 = vrot.lane.b32.xlu0 %v1930, 32
    %v1936 = vpop.permute.xlu0 %1935
    %v1939 = vadd.f32 %v1919, %v1934
    %v1940 = vadd.f32 %v1920, %v1936
    %v1941 = vtanh.pop %v1939
    %v1942 = vtanh.pop %v1940
    %1945 = vrot.lane.b32.xlu0 %v1941, 64
    %v1946 = vpop.permute.xlu0 %1945
    %1947 = vrot.lane.b32.xlu0 %v1942, 64
    %v1948 = vpop.permute.xlu0 %1947
    %v1951 = vmul.f32 %v1895, %v1946
    %v1952 = vmul.f32 %v1910, %v1948
    %1955 = vrot.lane.b32.xlu0 %v1871, 32
    %v1956 = vpop.permute.xlu0 %1955
    %1957 = vrot.lane.b32.xlu0 %v1872, 32
    %v1958 = vpop.permute.xlu0 %1957
    %1961 = vst.msk [vmem:[#allocation15] sm:$0x40] %vm718, %v1956
    %1962 = vst.msk [vmem:[#allocation15 + $0x8] sm:$0x40] %vm718, %v1958
    %1965 = vrot.lane.b32.xlu0 %v1951, 32
    %v1966 = vpop.permute.xlu0 %1965
    %1967 = vrot.lane.b32.xlu0 %v1952, 32
    %v1968 = vpop.permute.xlu0 %1967
    %1971 = vst.msk [vmem:[#allocation16] sm:$0x2] %vm707, %v1966
    %1972 = vst.msk [vmem:[#allocation16 + $0x8] sm:$0x2] %vm707, %v1968
    %v1973 = vpack.c.bf16 %v1871, %v1871
    %v1974 = vpack.c.bf16 %v1872, %v1872
    %v1977 = vunpack.c.l.b16 %v1973
    %v1978 = vunpack.c.l.b16 %v1974
    %v1979 = vrot.slane %v1977, 6
    %v1980 = vrot.slane %v1978, 5
    %v1981 = vsel %vm477, %v1980, %v1979
    %v1982 = vpack.c.b16 %v1981, %v1981
    %1983 = vrot.lane.b32.xlu0 %v1982, 32
    %v1984 = vpop.permute.xlu0 %1983
    %v1986 = vsel %vm148, %v1984, 0
    %1988 = vmatpush.bf16.msra.mxu0 0
    %1989 = vmatpush.bf16.msra.mxu0 0
    %1990 = vmatpush.bf16.msra.mxu0 0
    %1991 = vmatpush.bf16.msra.mxu0 0
    %1992 = vmatpush.bf16.msra.mxu0 0
    %1993 = vmatpush.bf16.msra.mxu0 0
    %1994 = vmatpush.bf16.msra.mxu0 %v222
    %1995 = vmatpush.bf16.msra.mxu0 %v221
    %1996 = vmatmul.bf16.gmra.mxu0 %v1986
    %v1997 = vpop.f32.mrf.mxu0
    %v1998 = vadd.f32 0.0, %v1997
    %v1999 = vpop.f32.mrf.mxu0
    %2000 = vdwg.mxu0
    %v2002 = vrot.slane %v1998, 1
    %v2003 = vrot.slane %v1998, 2
    %v2006 = vadd.f32 %v162, %v2002
    %v2007 = vadd.f32 %v164, %v2003
    %v2008 = vpack.c.bf16 %v1951, %v1951
    %v2009 = vpack.c.bf16 %v1952, %v1952
    %v2012 = vunpack.c.l.b16 %v2008
    %v2013 = vunpack.c.l.b16 %v2009
    %v2014 = vrot.slane %v2012, 1
    %v2015 = vsel %vm477, %v2013, %v2014
    %v2016 = vpack.c.b16 %v2015, %v2015
    %2017 = vrot.lane.b32.xlu0 %v2016, 32
    %v2018 = vpop.permute.xlu0 %2017
    %v2020 = vsel %vm148, %v2018, 0
    %2022 = vmatpush.bf16.msra.mxu0 0
    %2023 = vmatpush.bf16.msra.mxu0 0
    %2024 = vmatpush.bf16.msra.mxu0 0
    %2025 = vmatpush.bf16.msra.mxu0 0
    %2026 = vmatpush.bf16.msra.mxu0 0
    %2027 = vmatpush.bf16.msra.mxu0 0
    %2028 = vmatpush.bf16.msra.mxu0 %v257
    %2029 = vmatpush.bf16.msra.mxu0 %v256
    %2030 = vmatmul.bf16.gmra.mxu0 %v2020
    %v2031 = vpop.f32.mrf.mxu0
    %v2032 = vadd.f32 0.0, %v2031
    %v2033 = vpop.f32.mrf.mxu0
    %2034 = vdwg.mxu0
    %v2036 = vrot.slane %v2032, 1
    %v2039 = vadd.f32 %v196, %v2032
    %v2040 = vadd.f32 %v198, %v2036
    %v2041 = vxor.u32 %v2006, 2147483648
    %v2042 = vxor.u32 %v2007, 2147483648
    %v2043 = vmul.f32 %v2041, 1.442695
    %v2044 = vpow.pop %v2043
    %v2045 = vmul.f32 %v2042, 1.442695
    %v2046 = vpow.pop %v2045
    %v2047 = vadd.f32 %v2044, 1.0
    %v2048 = vadd.f32 %v2046, 1.0
    %v2049 = vrcp.pop %v2047
    %v2050 = vmul.f32 %v2047, %v2049
    %v2051 = vsub.f32 1.0, %v2050
    %v2052 = vmul.f32 %v2049, %v2051
    %v2053 = vadd.f32 %v2049, %v2052
    %vm2054 = vweird.f32 %v2047
    %vm2055 = vweird.f32 %v2049
    %vm2056 = vmor %vm2054, %vm2055
    %v2057 = vsel %vm2056, %v2049, %v2053
    %v2058 = vand.u32 2147483647, %v2047
    %vm2059 = vcmp.eq.f32.partialorder %v2058, 8.507059e+37
    %v2060 = vand.u32 %v2047, 2147483648
    %v2061 = vor.u32 1.1754944e-38, %v2060
    %v2062 = vsel %vm2059, %v2061, %v2057
    %v2063 = vmul.f32 1.0, %v2062
    %v2064 = vrcp.pop %v2048
    %v2065 = vmul.f32 %v2048, %v2064
    %v2066 = vsub.f32 1.0, %v2065
    %v2067 = vmul.f32 %v2064, %v2066
    %v2068 = vadd.f32 %v2064, %v2067
    %vm2069 = vweird.f32 %v2048
    %vm2070 = vweird.f32 %v2064
    %vm2071 = vmor %vm2069, %vm2070
    %v2072 = vsel %vm2071, %v2064, %v2068
    %v2073 = vand.u32 2147483647, %v2048
    %vm2074 = vcmp.eq.f32.partialorder %v2073, 8.507059e+37
    %v2075 = vand.u32 %v2048, 2147483648
    %v2076 = vor.u32 1.1754944e-38, %v2075
    %v2077 = vsel %vm2074, %v2076, %v2072
    %v2078 = vmul.f32 1.0, %v2077
    %v2079 = vtanh.pop %v2006
    %v2080 = vtanh.pop %v2007
    %v2083 = vrot.slane %v1859, 7
    %v2084 = vrot.slane %v1860, 7
    %v2087 = vmul.f32 %v2063, %v2083
    %v2088 = vmul.f32 %v2078, %v2084
    %2091 = vrot.lane.b32.xlu0 %v2079, 64
    %v2092 = vpop.permute.xlu0 %2091
    %2093 = vrot.lane.b32.xlu0 %v2080, 64
    %v2094 = vpop.permute.xlu0 %2093
    %v2097 = vmul.f32 %v2063, %v2092
    %v2098 = vmul.f32 %v2078, %v2094
    %2101 = vrot.lane.b32.xlu0 %v2097, 32
    %v2102 = vpop.permute.xlu0 %2101
    %2103 = vrot.lane.b32.xlu0 %v2098, 32
    %v2104 = vpop.permute.xlu0 %2103
    %v2107 = vadd.f32 %v2087, %v2102
    %v2108 = vadd.f32 %v2088, %v2104
    %v2109 = vtanh.pop %v2107
    %v2110 = vtanh.pop %v2108
    %2113 = vrot.lane.b32.xlu0 %v2109, 64
    %v2114 = vpop.permute.xlu0 %2113
    %2115 = vrot.lane.b32.xlu0 %v2110, 64
    %v2116 = vpop.permute.xlu0 %2115
    %v2119 = vmul.f32 %v2063, %v2114
    %v2120 = vmul.f32 %v2078, %v2116
    %v2121 = vxor.u32 %v2039, 2147483648
    %v2122 = vxor.u32 %v2040, 2147483648
    %v2123 = vmul.f32 %v2121, 1.442695
    %v2124 = vpow.pop %v2123
    %v2125 = vmul.f32 %v2122, 1.442695
    %v2126 = vpow.pop %v2125
    %v2127 = vadd.f32 %v2124, 1.0
    %v2128 = vadd.f32 %v2126, 1.0
    %v2129 = vrcp.pop %v2127
    %v2130 = vmul.f32 %v2127, %v2129
    %v2131 = vsub.f32 1.0, %v2130
    %v2132 = vmul.f32 %v2129, %v2131
    %v2133 = vadd.f32 %v2129, %v2132
    %vm2134 = vweird.f32 %v2127
    %vm2135 = vweird.f32 %v2129
    %vm2136 = vmor %vm2134, %vm2135
    %v2137 = vsel %vm2136, %v2129, %v2133
    %v2138 = vand.u32 2147483647, %v2127
    %vm2139 = vcmp.eq.f32.partialorder %v2138, 8.507059e+37
    %v2140 = vand.u32 %v2127, 2147483648
    %v2141 = vor.u32 1.1754944e-38, %v2140
    %v2142 = vsel %vm2139, %v2141, %v2137
    %v2143 = vmul.f32 1.0, %v2142
    %v2144 = vrcp.pop %v2128
    %v2145 = vmul.f32 %v2128, %v2144
    %v2146 = vsub.f32 1.0, %v2145
    %v2147 = vmul.f32 %v2144, %v2146
    %v2148 = vadd.f32 %v2144, %v2147
    %vm2149 = vweird.f32 %v2128
    %vm2150 = vweird.f32 %v2144
    %vm2151 = vmor %vm2149, %vm2150
    %v2152 = vsel %vm2151, %v2144, %v2148
    %v2153 = vand.u32 2147483647, %v2128
    %vm2154 = vcmp.eq.f32.partialorder %v2153, 8.507059e+37
    %v2155 = vand.u32 %v2128, 2147483648
    %v2156 = vor.u32 1.1754944e-38, %v2155
    %v2157 = vsel %vm2154, %v2156, %v2152
    %v2158 = vmul.f32 1.0, %v2157
    %v2159 = vtanh.pop %v2039
    %v2160 = vtanh.pop %v2040
    %v2163 = vrot.slane %v1939, 1
    %v2164 = vrot.slane %v1940, 1
    %v2167 = vmul.f32 %v2143, %v2163
    %v2168 = vmul.f32 %v2158, %v2164
    %2171 = vrot.lane.b32.xlu0 %v2159, 64
    %v2172 = vpop.permute.xlu0 %2171
    %2173 = vrot.lane.b32.xlu0 %v2160, 64
    %v2174 = vpop.permute.xlu0 %2173
    %v2177 = vmul.f32 %v2143, %v2172
    %v2178 = vmul.f32 %v2158, %v2174
    %2181 = vrot.lane.b32.xlu0 %v2177, 32
    %v2182 = vpop.permute.xlu0 %2181
    %2183 = vrot.lane.b32.xlu0 %v2178, 32
    %v2184 = vpop.permute.xlu0 %2183
    %v2187 = vadd.f32 %v2167, %v2182
    %v2188 = vadd.f32 %v2168, %v2184
    %v2189 = vtanh.pop %v2187
    %v2190 = vtanh.pop %v2188
    %2193 = vrot.lane.b32.xlu0 %v2189, 64
    %v2194 = vpop.permute.xlu0 %2193
    %2195 = vrot.lane.b32.xlu0 %v2190, 64
    %v2196 = vpop.permute.xlu0 %2195
    %v2199 = vmul.f32 %v2143, %v2194
    %v2200 = vmul.f32 %v2158, %v2196
    %2203 = vrot.lane.b32.xlu0 %v2119, 32
    %v2204 = vpop.permute.xlu0 %2203
    %2205 = vrot.lane.b32.xlu0 %v2120, 32
    %v2206 = vpop.permute.xlu0 %2205
    %2209 = vst.msk [vmem:[#allocation15] sm:$0x80] %vm467, %v2204
    %2210 = vst.msk [vmem:[#allocation15 + $0x8] sm:$0x80] %vm467, %v2206
    %2213 = vrot.lane.b32.xlu0 %v2199, 32
    %v2214 = vpop.permute.xlu0 %2213
    %2215 = vrot.lane.b32.xlu0 %v2200, 32
    %v2216 = vpop.permute.xlu0 %2215
    %2219 = vst.msk [vmem:[#allocation16] sm:$0x1] %vm456, %v2214
    %2220 = vst.msk [vmem:[#allocation16 + $0x8] sm:$0x1] %vm456, %v2216
    %v2221 = vrot.slane %v2120, 7
    %2222 = vrot.lane.b32.xlu0 %v2221, 32
    %v2223 = vpop.permute.xlu0 %2222
    %2225 = vst.msk [vmem:[#allocation2 - $0x7] sm:$0x80] %vm467, %v2204
    %2226 = vst.msk [vmem:[#allocation2 + $0x1] sm:$0x1] %vm456, %v2223
    %v2229 = vrot.slane %v2108, 7
    %2230 = vrot.lane.b32.xlu0 %v2107, 96
    %v2231 = vpop.permute.xlu0 %2230
    %2232 = vrot.lane.b32.xlu0 %v2229, 96
    %v2233 = vpop.permute.xlu0 %2232
    %2236 = vst.msk [vmem:[#allocation3 - $0x7] sm:$0x80] %vm467, %v2231
    %2237 = vst.msk [vmem:[#allocation3 + $0x1] sm:$0x1] %vm456, %v2233
    %v2238 = vrot.slane %v2200, 7
    %v2239 = vsel %vm477, %v2238, %v2199
    %2240 = vrot.lane.b32.xlu0 %v2239, 32
    %v2241 = vpop.permute.xlu0 %2240
    %vm2243 = vcmask 254976
    %2244 = vst.msk [vmem:[#allocation4] sm:$0x3] %vm2243, %v2241
    %v2247 = vrot.slane %v2188, 7
    %v2248 = vsel %vm477, %v2247, %v2187
    %2249 = vrot.lane.b32.xlu0 %v2248, 96
    %v2250 = vpop.permute.xlu0 %2249
    %2252 = vst.msk [vmem:[#allocation5] sm:$0x3] %vm2243, %v2250
    // Predicated region
    $region54: #{tpu_custom_call.1} parent=1 // pred_check
      _
    $region55: #{tpu_custom_call.1} parent=1 // pred_check_branch
      %2254 = sbr.rel (0) target = $region57
    $region56: #{tpu_custom_call.1} parent=1 // pred_region
      %2256 = vsyncadd [#allocation8], 0
      %s2257 = sshll.u32 [#allocation15], 4
      %s2258 = int_to_ptr.vmem [resolvable:$true] %s2257
      %s2259 = sshll.u32 %s7, 4
      %s2260 = int_to_ptr.hbm [resolvable:$true] %s2259
      %2265 = dma.vmem_to_hbm [thread:$0]  %s2258, 256, %s2260, [#allocation8], 128, 128, 8
    $region57: #{tpu_custom_call.1} parent=1 // pred_fallthru
      _
    // Predicated region
    $region58: #{tpu_custom_call.1} parent=1 // pred_check
      _
    $region59: #{tpu_custom_call.1} parent=1 // pred_check_branch
      %2267 = sbr.rel (0) target = $region61
    $region60: #{tpu_custom_call.1} parent=1 // pred_region
      %s2268 = ssub.s32 0, 0
      %2270 = vsyncadd [#allocation17], 0
      %s2271 = smul.addr %s2268, 8
      %s2272 = scalar_lea.hbm %s8, %s2271
      %s2273 = sshll.u32 [#allocation16], 4
      %s2274 = int_to_ptr.vmem [resolvable:$true] %s2273
      %s2275 = sshll.u32 %s2272, 4
      %s2276 = int_to_ptr.hbm [resolvable:$true] %s2275
      %2281 = dma.vmem_to_hbm [thread:$0]  %s2274, 256, %s2276, [#allocation17], 128, 128, 8
    $region61: #{tpu_custom_call.1} parent=1 // pred_fallthru
      _
    // Predicated region
    $region62: #{tpu_custom_call.1} parent=1 // pred_check
      _
    $region63: #{tpu_custom_call.1} parent=1 // pred_check_branch
      %2283 = sbr.rel (0) target = $region65
    $region64: #{tpu_custom_call.1} parent=1 // pred_region
      %2285 = dma.done [#allocation8], 256
    $region65: #{tpu_custom_call.1} parent=1 // pred_fallthru
      _
    // Predicated region
    $region66: #{tpu_custom_call.1} parent=1 // pred_check
      _
    $region67: #{tpu_custom_call.1} parent=1 // pred_check_branch
      %2287 = sbr.rel (0) target = $region69
    $region68: #{tpu_custom_call.1} parent=1 // pred_region
      %2289 = dma.done [#allocation17], 256
    $region69: #{tpu_custom_call.1} parent=1 // pred_fallthru
      _
    %2290 = vsyncpa [#allocation7], 1
    %2291 = vsyncpa [#allocation10], 1
    %2292 = vsyncpa [#allocation13], 1
    %2293 = vsyncpa [#allocation8], 1
    %2294 = vsyncpa [#allocation17], 1

</llo_original>
